<compile_context>
chip_gen: v6e
topology: v6e:2x2x1
jax: 0.10.0
libtpu: 0.0.40
codegen_flags: <defaults>
</compile_context>

<pallas_src>
import functools
import math

import jax
import jax.numpy as jnp
from jax.experimental import pallas as pl
from jax.experimental.pallas import tpu as pltpu


# ------------------------------ helpers ------------------------------------

def _bf(x):
    return x.astype(jnp.bfloat16)


def _ln(x, g, b, eps=1e-12):
    mu = jnp.mean(x, axis=-1, keepdims=True)
    var = jnp.mean(jnp.square(x - mu), axis=-1, keepdims=True)
    return (x - mu) * jax.lax.rsqrt(var + eps) * g + b


# --------------------------- fully fused kernel -----------------------------
# grid=(num_layers,); the (M,H) activation is resident in a VMEM scratch across
# all layer steps; per-layer weights are streamed (auto double-buffered); LSTM
# params use constant index maps (DMA'd once).  BiLSTM head + classifier run as
# the tail of the last grid step.

def _fused_kernel(x_ref, mask_ref, wqkv_ref, wo_ref, w1_ref, w2_ref, small_ref,
                  lstmw_ref, lstms_ref, logits_ref, act_ref, attn_ref, *,
                  batch, seq, heads, head_dim, hidden, inter, lstm_hidden):
    H, I, LH = hidden, inter, lstm_hidden
    layer = pl.program_id(0)
    n_layers = pl.num_programs(0)

    # Grid step 0: seed the resident activation (embedding LN already applied in glue).
    @pl.when(layer == 0)
    def _():
        act_ref[...] = x_ref[...]

    x = act_ref[...]                      # (M, H) f32, resident in VMEM scratch
    x_bf = _bf(x)

    # Unpack the packed per-layer small params (one DMA stream instead of 8).
    sp = small_ref[0]                     # (8, SW) f32
    bqkv = sp[0:1, 0:3 * H]
    bo = sp[1:2, 0:H]
    b1 = sp[2:3, 0:I]
    b2 = sp[3:4, 0:H]
    ln1g = sp[4:5, 0:H]
    ln1b = sp[5:6, 0:H]
    ln2g = sp[6:7, 0:H]
    ln2b = sp[7:8, 0:H]

    # Fused Q/K/V projection: one (M,H)x(H,3H) MXU pass (bf16 x bf16 -> f32 acc).
    qkv = jnp.dot(x_bf, wqkv_ref[0], preferred_element_type=jnp.float32) + bqkv

    scale = 1.0 / math.sqrt(head_dim)
    # Multi-head attention with the output projection folded into the per-head
    # loop; per-batch (S,H) result stored into the VMEM scratch slab (no concats).
    for b in range(batch):
        bias = mask_ref[b:b + 1, :]                       # (1, S) additive mask
        acc = jnp.zeros((seq, H), jnp.float32)
        r0 = b * seq
        for h in range(heads):
            c0 = h * head_dim
            q = qkv[r0:r0 + seq, c0:c0 + head_dim]
            k = qkv[r0:r0 + seq, H + c0:H + c0 + head_dim]
            v = qkv[r0:r0 + seq, 2 * H + c0:2 * H + c0 + head_dim]
            s = jax.lax.dot_general(_bf(q), _bf(k), (((1,), (1,)), ((), ())),
                                    preferred_element_type=jnp.float32)
            s = s * scale + bias
            s = s - jnp.max(s, axis=-1, keepdims=True)    # softmax kept in f32
            p = jnp.exp(s)
            # EUP reciprocal; switch approx=False if bit-parity with reference matters.
            p = p * pl.reciprocal(jnp.sum(p, axis=-1, keepdims=True), approx=True)
            ctx = jnp.dot(_bf(p), _bf(v), preferred_element_type=jnp.float32)
            # fold output projection: (S, hd) @ wo[h*hd:(h+1)*hd, :]
            acc = acc + jnp.dot(_bf(ctx), wo_ref[0, c0:c0 + head_dim, :],
                                preferred_element_type=jnp.float32)
        attn_ref[r0:r0 + seq, :] = acc

    x1 = _ln(attn_ref[...] + bo + x, ln1g, ln1b)          # residual fused into LN

    # FFN
    h1 = jnp.dot(_bf(x1), w1_ref[0], preferred_element_type=jnp.float32) + b1
    # TODO(synk): HF BertIntermediate uses exact erf-GELU; tanh approximation here.
    cgelu = 0.7978845608028654
    g = 0.5 * h1 * (1.0 + jnp.tanh(cgelu * (h1 + 0.044715 * h1 * h1 * h1)))
    h2 = jnp.dot(_bf(g), w2_ref[0], preferred_element_type=jnp.float32) + b2
    x2 = _ln(h2 + x1, ln2g, ln2b)
    act_ref[...] = x2

    # ---- BiLSTM head + classifier, fused as the last-layer tail --------------
    @pl.when(layer == n_layers - 1)
    def _():
        xb = _bf(x2)                                      # (M, H) final hidden, bf16
        fw_wih = lstmw_ref[0:H, :]                        # (H, 4LH)
        fw_whh = lstmw_ref[H:H + LH, :]                   # (LH, 4LH)
        bw_wih = lstmw_ref[H + LH:2 * H + LH, :]
        bw_whh = lstmw_ref[2 * H + LH:2 * H + 2 * LH, :]
        ls = lstms_ref[...]                               # (4, 4LH) f32
        fw_bias = ls[0:1, :]
        bw_bias = ls[1:2, :]
        fcw_f = ls[2:3, 0:LH]
        fcw_b = ls[2:3, LH:2 * LH]
        fc_bias = ls[3:4, 0:1]

        # Input projection for ALL timesteps / batches in one MXU pass.
        pre_fw = jnp.dot(xb, fw_wih, preferred_element_type=jnp.float32) + fw_bias

        def cell(pre, h_prev, c_prev, whh):
            gates = pre + jnp.dot(_bf(h_prev), whh, preferred_element_type=jnp.float32)
            sig = jax.nn.sigmoid(gates)                   # full-width EUP, then slices
            th = jnp.tanh(gates)
            i = sig[:, 0 * LH:1 * LH]
            f = sig[:, 1 * LH:2 * LH]
            gg = th[:, 2 * LH:3 * LH]
            o = sig[:, 3 * LH:4 * LH]
            c_new = f * c_prev + i * gg
            return o * jnp.tanh(c_new), c_new

        for b in range(batch):
            r0 = b * seq
            h = jnp.zeros((1, LH), jnp.float32)
            c_st = jnp.zeros((1, LH), jnp.float32)
            for t in range(seq):                          # serial by nature, unrolled
                h, c_st = cell(pre_fw[r0 + t:r0 + t + 1, :], h, c_st, fw_whh)
            # out[:, -1, :] backward component depends only on the last token -> 1 step.
            x_last = xb[r0 + seq - 1:r0 + seq, :]
            pre_bw = jnp.dot(x_last, bw_wih, preferred_element_type=jnp.float32) + bw_bias
            h_bw, _ = cell(pre_bw, jnp.zeros((1, LH), jnp.float32),
                           jnp.zeros((1, LH), jnp.float32), bw_whh)
            # N=1 classifier as a VPU reduction, split so no h_fw/h_bw concat.
            logit = (jnp.sum(h * fcw_f, axis=-1, keepdims=True)
                     + jnp.sum(h_bw * fcw_b, axis=-1, keepdims=True) + fc_bias)
            logits_ref[b:b + 1, :] = logit


# ------------------------------ model glue -----------------------------------

CFG = dict(
    vocab=50, max_pos=32, type_vocab=2,
    hidden=32, heads=2, layers=2, intermediate=64,
    lstm_hidden=32, output=1,
)


def init_params(key, cfg):
    keys = iter(jax.random.split(key, 32))

    def nrm(shape, dtype=jnp.float32):
        return (jax.random.normal(next(keys), shape, jnp.float32) * 0.02).astype(dtype)

    H, I, L, LH = cfg["hidden"], cfg["intermediate"], cfg["layers"], cfg["lstm_hidden"]
    return {
        "word_emb": nrm((cfg["vocab"], H)),
        "pos_emb": nrm((cfg["max_pos"], H)),
        "tok_emb": nrm((cfg["type_vocab"], H)),
        "emb_ln_g": jnp.ones((H,), jnp.float32),
        "emb_ln_b": jnp.zeros((H,), jnp.float32),
        # Matmul weights bf16 (MXU-native); biases / LayerNorm params f32.
        "enc": {
            "wqkv": nrm((L, H, 3 * H), jnp.bfloat16),
            "bqkv": nrm((L, 3 * H)),
            "wo": nrm((L, H, H), jnp.bfloat16),
            "bo": nrm((L, H)),
            "ln1_g": jnp.ones((L, H), jnp.float32),
            "ln1_b": jnp.zeros((L, H), jnp.float32),
            "w1": nrm((L, H, I), jnp.bfloat16),
            "b1": nrm((L, I)),
            "w2": nrm((L, I, H), jnp.bfloat16),
            "b2": nrm((L, H)),
            "ln2_g": jnp.ones((L, H), jnp.float32),
            "ln2_b": jnp.zeros((L, H), jnp.float32),
        },
        "lstm": {
            "fw_w_ih": nrm((H, 4 * LH), jnp.bfloat16),
            "fw_w_hh": nrm((LH, 4 * LH), jnp.bfloat16),
            "fw_b": nrm((4 * LH,)),
            "bw_w_ih": nrm((H, 4 * LH), jnp.bfloat16),
            "bw_w_hh": nrm((LH, 4 * LH), jnp.bfloat16),
            "bw_b": nrm((4 * LH,)),
            "fc_w": nrm((2 * LH,)),
            "fc_b": nrm((1,)),
        },
    }


def indobert_bic_forward(params, input_ids, attention_mask, cfg):
    B, S = input_ids.shape
    H, NH, L = cfg["hidden"], cfg["heads"], cfg["layers"]
    I, LH = cfg["intermediate"], cfg["lstm_hidden"]
    HD = H // NH
    M = B * S
    SW = max(3 * H, I)

    # Embedding gather + sum + LayerNorm (one-off glue so the kernel does not pin
    # emb-LN params across all layer steps).
    # TODO(synk): token_type_ids assumed all-zero (segment 0 only).
    emb = (params["word_emb"][input_ids]
           + params["pos_emb"][:S][None, :, :]
           + params["tok_emb"][0][None, None, :])
    mu = jnp.mean(emb, axis=-1, keepdims=True)
    var = jnp.mean(jnp.square(emb - mu), axis=-1, keepdims=True)
    x = (emb - mu) * jax.lax.rsqrt(var + 1e-12) * params["emb_ln_g"] + params["emb_ln_b"]
    x_flat = x.reshape(M, H).astype(jnp.float32)

    # Additive attention-mask bias, (B, S).
    mask_bias = (1.0 - attention_mask.astype(jnp.float32)) * -10000.0

    # Pack the 8 small per-layer f32 params into one streamed (L, 8, SW) tensor.
    e = params["enc"]

    def padw(a):
        return jnp.pad(a, ((0, 0), (0, SW - a.shape[-1])))

    small = jnp.stack([padw(e["bqkv"]), padw(e["bo"]), padw(e["b1"]), padw(e["b2"]),
                       padw(e["ln1_g"]), padw(e["ln1_b"]), padw(e["ln2_g"]),
                       padw(e["ln2_b"])], axis=1).astype(jnp.float32)

    # Pack the LSTM weights: 4 bf16 matrices stacked row-wise; 4 small f32 params.
    lp = params["lstm"]
    lstm_w = jnp.concatenate([lp["fw_w_ih"], lp["fw_w_hh"],
                              lp["bw_w_ih"], lp["bw_w_hh"]], axis=0)   # (2H+2LH, 4LH) bf16

    def pad1(a):
        return jnp.pad(a, (0, 4 * LH - a.shape[0]))

    lstm_small = jnp.stack([lp["fw_b"], lp["bw_b"], pad1(lp["fc_w"]),
                            pad1(lp["fc_b"])], axis=0).astype(jnp.float32)  # (4, 4LH)

    kern = functools.partial(_fused_kernel, batch=B, seq=S, heads=NH, head_dim=HD,
                             hidden=H, inter=I, lstm_hidden=LH)

    def const2(shape):
        return pl.BlockSpec(tuple(shape), lambda l: (0, 0))

    def lay3(shape):
        return pl.BlockSpec((1,) + tuple(shape[1:]), lambda l: (l, 0, 0))

    logits = pl.pallas_call(
        kern,
        out_shape=jax.ShapeDtypeStruct((B, 1), jnp.float32),
        grid=(L,),
        in_specs=[
            const2((M, H)),                 # x (post-emb-LN), loaded once
            const2((B, S)),                 # attention mask bias
            lay3(e["wqkv"].shape),          # streamed per layer
            lay3(e["wo"].shape),
            lay3(e["w1"].shape),
            lay3(e["w2"].shape),
            lay3(small.shape),              # packed per-layer small params
            const2(lstm_w.shape),           # LSTM weights, loaded once
            const2(lstm_small.shape),
        ],
        out_specs=pl.BlockSpec((B, 1), lambda l: (0, 0)),   # written at last layer
        scratch_shapes=[pltpu.VMEM((M, H), jnp.float32),    # resident activation
                        pltpu.VMEM((M, H), jnp.float32)],   # attention slab
        compiler_params=pltpu.CompilerParams(
            dimension_semantics=("arbitrary",)),            # layer loop is serial
    )(x_flat, mask_bias, e["wqkv"], e["wo"], e["w1"], e["w2"], small,
      lstm_w, lstm_small)

    return jnp.squeeze(logits)   # matches torch .squeeze()


# ----------------------------------- main -----------------------------------

if __name__ == "__main__":
    B, S = 2, 8
    key = jax.random.PRNGKey(0)
    k_param, k_ids = jax.random.split(key)

    params = init_params(k_param, CFG)
    input_ids = jax.random.randint(k_ids, (B, S), 0, CFG["vocab"], dtype=jnp.int32)
    attention_mask = jnp.ones((B, S), jnp.float32).at[1, 6:].set(0.0)

    fwd = jax.jit(functools.partial(indobert_bic_forward, cfg=CFG))
    out = jax.block_until_ready(fwd(params, input_ids, attention_mask))

    assert out.shape == (B,), out.shape
    assert out.dtype == jnp.float32
    assert bool(jnp.all(jnp.isfinite(out)))
    print("KERNEL_OK")
</pallas_src>

<mosaic_0001>
module attributes {stable_mosaic.version = 11 : i64} {
  func.func @_fused_kernel(%arg0: i32, %arg1: memref<16x32xf32, #tpu.memory_space<vmem>>, %arg2: memref<2x8xf32, #tpu.memory_space<vmem>>, %arg3: memref<1x32x96xbf16, #tpu.memory_space<vmem>>, %arg4: memref<1x32x32xbf16, #tpu.memory_space<vmem>>, %arg5: memref<1x32x64xbf16, #tpu.memory_space<vmem>>, %arg6: memref<1x64x32xbf16, #tpu.memory_space<vmem>>, %arg7: memref<1x8x96xf32, #tpu.memory_space<vmem>>, %arg8: memref<128x128xbf16, #tpu.memory_space<vmem>>, %arg9: memref<4x128xf32, #tpu.memory_space<vmem>>, %arg10: memref<2x1xf32, #tpu.memory_space<vmem>>, %arg11: memref<16x32xf32, #tpu.memory_space<vmem>>, %arg12: memref<16x32xf32, #tpu.memory_space<vmem>>) attributes {dimension_semantics = [#tpu.dimension_semantics<arbitrary>], iteration_bounds = array<i64: 2>, scalar_prefetch = 0 : i64, scratch_operands = 2 : i64, tpu.core_type = #tpu.core_type<tc>, window_params = [{pipeline_mode = #tpu.pipeline_mode<synchronous>, transform_indices = @transform_0, window_bounds = array<i64: 16, 32>}, {pipeline_mode = #tpu.pipeline_mode<synchronous>, transform_indices = @transform_1, window_bounds = array<i64: 2, 8>}, {transform_indices = @transform_2, window_bounds = array<i64: 1, 32, 96>}, {transform_indices = @transform_3, window_bounds = array<i64: 1, 32, 32>}, {transform_indices = @transform_4, window_bounds = array<i64: 1, 32, 64>}, {transform_indices = @transform_5, window_bounds = array<i64: 1, 64, 32>}, {transform_indices = @transform_6, window_bounds = array<i64: 1, 8, 96>}, {pipeline_mode = #tpu.pipeline_mode<synchronous>, transform_indices = @transform_7, window_bounds = array<i64: 128, 128>}, {pipeline_mode = #tpu.pipeline_mode<synchronous>, transform_indices = @transform_8, window_bounds = array<i64: 4, 128>}, {pipeline_mode = #tpu.pipeline_mode<synchronous>, transform_indices = @transform_9, window_bounds = array<i64: 2, 1>}]} {
    %c0_i32 = arith.constant 0 : i32
    %0 = arith.cmpi eq, %arg0, %c0_i32 : i32
    %1 = arith.extui %0 : i1 to i32
    %c0_i32_0 = arith.constant 0 : i32
    %2 = arith.cmpi ne, %1, %c0_i32_0 : i32
    scf.if %2 {
      %c0_78 = arith.constant 0 : index
      %c0_79 = arith.constant 0 : index
      %216 = vector.load %arg1[%c0_78, %c0_79] : memref<16x32xf32, #tpu.memory_space<vmem>>, vector<16x32xf32>
      %c0_80 = arith.constant 0 : index
      %c0_81 = arith.constant 0 : index
      %217 = vector.load %arg11[%c0_80, %c0_81] : memref<16x32xf32, #tpu.memory_space<vmem>>, vector<16x32xf32>
      tpu.vector_store %arg11[%c0_80, %c0_81], %216 {strides = array<i32>} : memref<16x32xf32, #tpu.memory_space<vmem>>, vector<16x32xf32>,
    } else {
    }
    %c0 = arith.constant 0 : index
    %c0_1 = arith.constant 0 : index
    %3 = vector.load %arg11[%c0, %c0_1] : memref<16x32xf32, #tpu.memory_space<vmem>>, vector<16x32xf32>
    %4 = arith.truncf %3 : vector<16x32xf32> to vector<16x32xbf16>
    %c0_2 = arith.constant 0 : index
    %c0_3 = arith.constant 0 : index
    %c0_4 = arith.constant 0 : index
    %5 = vector.load %arg7[%c0_2, %c0_3, %c0_4] : memref<1x8x96xf32, #tpu.memory_space<vmem>>, vector<1x8x96xf32>
    %6 = vector.shape_cast %5 : vector<1x8x96xf32> to vector<8x96xf32>
    %7 = vector.extract_strided_slice %6 {offsets = [0, 0], sizes = [1, 96], strides = [1, 1]} : vector<8x96xf32> to vector<1x96xf32>
    %8 = vector.extract_strided_slice %6 {offsets = [1, 0], sizes = [1, 32], strides = [1, 1]} : vector<8x96xf32> to vector<1x32xf32>
    %9 = vector.extract_strided_slice %6 {offsets = [2, 0], sizes = [1, 64], strides = [1, 1]} : vector<8x96xf32> to vector<1x64xf32>
    %10 = vector.extract_strided_slice %6 {offsets = [3, 0], sizes = [1, 32], strides = [1, 1]} : vector<8x96xf32> to vector<1x32xf32>
    %11 = vector.extract_strided_slice %6 {offsets = [4, 0], sizes = [1, 32], strides = [1, 1]} : vector<8x96xf32> to vector<1x32xf32>
    %12 = vector.extract_strided_slice %6 {offsets = [5, 0], sizes = [1, 32], strides = [1, 1]} : vector<8x96xf32> to vector<1x32xf32>
    %13 = vector.extract_strided_slice %6 {offsets = [6, 0], sizes = [1, 32], strides = [1, 1]} : vector<8x96xf32> to vector<1x32xf32>
    %14 = vector.extract_strided_slice %6 {offsets = [7, 0], sizes = [1, 32], strides = [1, 1]} : vector<8x96xf32> to vector<1x32xf32>
    %c0_5 = arith.constant 0 : index
    %c0_6 = arith.constant 0 : index
    %c0_7 = arith.constant 0 : index
    %15 = vector.load %arg3[%c0_5, %c0_6, %c0_7] : memref<1x32x96xbf16, #tpu.memory_space<vmem>>, vector<1x32x96xbf16>
    %16 = vector.shape_cast %15 : vector<1x32x96xbf16> to vector<32x96xbf16>
    %cst = arith.constant dense<0.000000e+00> : vector<16x96xf32>
    %17 = tpu.matmul %4, %16, %cst {dimension_numbers = #tpu.dot_dimension_numbers<[1], [0], [0], [1], [0, 0, 1, 1], [], []>} : vector<16x32xbf16>, vector<32x96xbf16>, vector<16x96xf32> -> vector<16x96xf32>
    %18 = vector.broadcast %7 : vector<1x96xf32> to vector<16x96xf32>
    %19 = arith.addf %17, %18 : vector<16x96xf32>
    %c0_8 = arith.constant 0 : index
    %c0_9 = arith.constant 0 : index
    %20 = vector.load %arg2[%c0_8, %c0_9] : memref<2x8xf32, #tpu.memory_space<vmem>>, vector<1x8xf32>
    %cst_10 = arith.constant 0.000000e+00 : f32
    %21 = vector.broadcast %cst_10 : f32 to vector<8x32xf32>
    %22 = vector.extract_strided_slice %19 {offsets = [0, 0], sizes = [8, 16], strides = [1, 1]} : vector<16x96xf32> to vector<8x16xf32>
    %23 = vector.extract_strided_slice %19 {offsets = [0, 32], sizes = [8, 16], strides = [1, 1]} : vector<16x96xf32> to vector<8x16xf32>
    %24 = vector.extract_strided_slice %19 {offsets = [0, 64], sizes = [8, 16], strides = [1, 1]} : vector<16x96xf32> to vector<8x16xf32>
    %25 = arith.truncf %22 : vector<8x16xf32> to vector<8x16xbf16>
    %26 = arith.truncf %23 : vector<8x16xf32> to vector<8x16xbf16>
    %cst_11 = arith.constant dense<0.000000e+00> : vector<8x8xf32>
    %27 = tpu.matmul %25, %26, %cst_11 {dimension_numbers = #tpu.dot_dimension_numbers<[1], [1], [0], [0], [0, 0, 1, 0], [], []>} : vector<8x16xbf16>, vector<8x16xbf16>, vector<8x8xf32> -> vector<8x8xf32>
    %cst_12 = arith.constant 2.500000e-01 : f32
    %28 = vector.broadcast %cst_12 : f32 to vector<8x8xf32>
    %29 = arith.mulf %27, %28 : vector<8x8xf32>
    %30 = vector.broadcast %20 : vector<1x8xf32> to vector<8x8xf32>
    %31 = arith.addf %29, %30 : vector<8x8xf32>
    %cst_13 = arith.constant dense<0xFF800000> : vector<8xf32>
    %32 = vector.multi_reduction <maximumf>, %31, %cst_13 [1] : vector<8x8xf32> to vector<8xf32>
    %33 = vector.shape_cast %32 : vector<8xf32> to vector<8x1xf32>
    %34 = vector.broadcast %33 : vector<8x1xf32> to vector<8x8xf32>
    %35 = arith.subf %31, %34 : vector<8x8xf32>
    %36 = math.exp %35 : vector<8x8xf32>
    %cst_14 = arith.constant dense<0.000000e+00> : vector<8xf32>
    %37 = vector.multi_reduction <add>, %36, %cst_14 [1] : vector<8x8xf32> to vector<8xf32>
    %38 = vector.shape_cast %37 : vector<8xf32> to vector<8x1xf32>
    %39 = tpu.reciprocal %38 {approx = true} : vector<8x1xf32> -> vector<8x1xf32>
    %40 = vector.broadcast %39 : vector<8x1xf32> to vector<8x8xf32>
    %41 = arith.mulf %36, %40 : vector<8x8xf32>
    %42 = arith.truncf %41 : vector<8x8xf32> to vector<8x8xbf16>
    %43 = arith.truncf %24 : vector<8x16xf32> to vector<8x16xbf16>
    %cst_15 = arith.constant dense<0.000000e+00> : vector<8x16xf32>
    %44 = tpu.matmul %42, %43, %cst_15 {dimension_numbers = #tpu.dot_dimension_numbers<[1], [0], [0], [1], [0, 0, 1, 1], [], []>} : vector<8x8xbf16>, vector<8x16xbf16>, vector<8x16xf32> -> vector<8x16xf32>
    %45 = arith.truncf %44 : vector<8x16xf32> to vector<8x16xbf16>
    %c0_16 = arith.constant 0 : index
    %c0_17 = arith.constant 0 : index
    %c0_18 = arith.constant 0 : index
    %46 = vector.load %arg4[%c0_16, %c0_17, %c0_18] : memref<1x32x32xbf16, #tpu.memory_space<vmem>>, vector<1x16x32xbf16>
    %47 = vector.shape_cast %46 : vector<1x16x32xbf16> to vector<16x32xbf16>
    %cst_19 = arith.constant dense<0.000000e+00> : vector<8x32xf32>
    %48 = tpu.matmul %45, %47, %cst_19 {dimension_numbers = #tpu.dot_dimension_numbers<[1], [0], [0], [1], [0, 0, 1, 1], [], []>} : vector<8x16xbf16>, vector<16x32xbf16>, vector<8x32xf32> -> vector<8x32xf32>
    %49 = arith.addf %21, %48 : vector<8x32xf32>
    %50 = vector.extract_strided_slice %19 {offsets = [0, 16], sizes = [8, 16], strides = [1, 1]} : vector<16x96xf32> to vector<8x16xf32>
    %51 = vector.extract_strided_slice %19 {offsets = [0, 48], sizes = [8, 16], strides = [1, 1]} : vector<16x96xf32> to vector<8x16xf32>
    %52 = vector.extract_strided_slice %19 {offsets = [0, 80], sizes = [8, 16], strides = [1, 1]} : vector<16x96xf32> to vector<8x16xf32>
    %53 = arith.truncf %50 : vector<8x16xf32> to vector<8x16xbf16>
    %54 = arith.truncf %51 : vector<8x16xf32> to vector<8x16xbf16>
    %cst_20 = arith.constant dense<0.000000e+00> : vector<8x8xf32>
    %55 = tpu.matmul %53, %54, %cst_20 {dimension_numbers = #tpu.dot_dimension_numbers<[1], [1], [0], [0], [0, 0, 1, 0], [], []>} : vector<8x16xbf16>, vector<8x16xbf16>, vector<8x8xf32> -> vector<8x8xf32>
    %cst_21 = arith.constant 2.500000e-01 : f32
    %56 = vector.broadcast %cst_21 : f32 to vector<8x8xf32>
    %57 = arith.mulf %55, %56 : vector<8x8xf32>
    %58 = vector.broadcast %20 : vector<1x8xf32> to vector<8x8xf32>
    %59 = arith.addf %57, %58 : vector<8x8xf32>
    %cst_22 = arith.constant dense<0xFF800000> : vector<8xf32>
    %60 = vector.multi_reduction <maximumf>, %59, %cst_22 [1] : vector<8x8xf32> to vector<8xf32>
    %61 = vector.shape_cast %60 : vector<8xf32> to vector<8x1xf32>
    %62 = vector.broadcast %61 : vector<8x1xf32> to vector<8x8xf32>
    %63 = arith.subf %59, %62 : vector<8x8xf32>
    %64 = math.exp %63 : vector<8x8xf32>
    %cst_23 = arith.constant dense<0.000000e+00> : vector<8xf32>
    %65 = vector.multi_reduction <add>, %64, %cst_23 [1] : vector<8x8xf32> to vector<8xf32>
    %66 = vector.shape_cast %65 : vector<8xf32> to vector<8x1xf32>
    %67 = tpu.reciprocal %66 {approx = true} : vector<8x1xf32> -> vector<8x1xf32>
    %68 = vector.broadcast %67 : vector<8x1xf32> to vector<8x8xf32>
    %69 = arith.mulf %64, %68 : vector<8x8xf32>
    %70 = arith.truncf %69 : vector<8x8xf32> to vector<8x8xbf16>
    %71 = arith.truncf %52 : vector<8x16xf32> to vector<8x16xbf16>
    %cst_24 = arith.constant dense<0.000000e+00> : vector<8x16xf32>
    %72 = tpu.matmul %70, %71, %cst_24 {dimension_numbers = #tpu.dot_dimension_numbers<[1], [0], [0], [1], [0, 0, 1, 1], [], []>} : vector<8x8xbf16>, vector<8x16xbf16>, vector<8x16xf32> -> vector<8x16xf32>
    %73 = arith.truncf %72 : vector<8x16xf32> to vector<8x16xbf16>
    %c0_25 = arith.constant 0 : index
    %c16 = arith.constant 16 : index
    %c0_26 = arith.constant 0 : index
    %74 = vector.load %arg4[%c0_25, %c16, %c0_26] : memref<1x32x32xbf16, #tpu.memory_space<vmem>>, vector<1x16x32xbf16>
    %75 = vector.shape_cast %74 : vector<1x16x32xbf16> to vector<16x32xbf16>
    %cst_27 = arith.constant dense<0.000000e+00> : vector<8x32xf32>
    %76 = tpu.matmul %73, %75, %cst_27 {dimension_numbers = #tpu.dot_dimension_numbers<[1], [0], [0], [1], [0, 0, 1, 1], [], []>} : vector<8x16xbf16>, vector<16x32xbf16>, vector<8x32xf32> -> vector<8x32xf32>
    %77 = arith.addf %49, %76 : vector<8x32xf32>
    %c0_28 = arith.constant 0 : index
    %c0_29 = arith.constant 0 : index
    %78 = vector.load %arg12[%c0_28, %c0_29] : memref<16x32xf32, #tpu.memory_space<vmem>>, vector<8x32xf32>
    tpu.vector_store %arg12[%c0_28, %c0_29], %77 {strides = array<i32>} : memref<16x32xf32, #tpu.memory_space<vmem>>, vector<8x32xf32>,
    %c1 = arith.constant 1 : index
    %c0_30 = arith.constant 0 : index
    %79 = vector.load %arg2[%c1, %c0_30] : memref<2x8xf32, #tpu.memory_space<vmem>>, vector<1x8xf32>
    %cst_31 = arith.constant 0.000000e+00 : f32
    %80 = vector.broadcast %cst_31 : f32 to vector<8x32xf32>
    %81 = vector.extract_strided_slice %19 {offsets = [8, 0], sizes = [8, 16], strides = [1, 1]} : vector<16x96xf32> to vector<8x16xf32>
    %82 = vector.extract_strided_slice %19 {offsets = [8, 32], sizes = [8, 16], strides = [1, 1]} : vector<16x96xf32> to vector<8x16xf32>
    %83 = vector.extract_strided_slice %19 {offsets = [8, 64], sizes = [8, 16], strides = [1, 1]} : vector<16x96xf32> to vector<8x16xf32>
    %84 = arith.truncf %81 : vector<8x16xf32> to vector<8x16xbf16>
    %85 = arith.truncf %82 : vector<8x16xf32> to vector<8x16xbf16>
    %cst_32 = arith.constant dense<0.000000e+00> : vector<8x8xf32>
    %86 = tpu.matmul %84, %85, %cst_32 {dimension_numbers = #tpu.dot_dimension_numbers<[1], [1], [0], [0], [0, 0, 1, 0], [], []>} : vector<8x16xbf16>, vector<8x16xbf16>, vector<8x8xf32> -> vector<8x8xf32>
    %cst_33 = arith.constant 2.500000e-01 : f32
    %87 = vector.broadcast %cst_33 : f32 to vector<8x8xf32>
    %88 = arith.mulf %86, %87 : vector<8x8xf32>
    %89 = vector.broadcast %79 : vector<1x8xf32> to vector<8x8xf32>
    %90 = arith.addf %88, %89 : vector<8x8xf32>
    %cst_34 = arith.constant dense<0xFF800000> : vector<8xf32>
    %91 = vector.multi_reduction <maximumf>, %90, %cst_34 [1] : vector<8x8xf32> to vector<8xf32>
    %92 = vector.shape_cast %91 : vector<8xf32> to vector<8x1xf32>
    %93 = vector.broadcast %92 : vector<8x1xf32> to vector<8x8xf32>
    %94 = arith.subf %90, %93 : vector<8x8xf32>
    %95 = math.exp %94 : vector<8x8xf32>
    %cst_35 = arith.constant dense<0.000000e+00> : vector<8xf32>
    %96 = vector.multi_reduction <add>, %95, %cst_35 [1] : vector<8x8xf32> to vector<8xf32>
    %97 = vector.shape_cast %96 : vector<8xf32> to vector<8x1xf32>
    %98 = tpu.reciprocal %97 {approx = true} : vector<8x1xf32> -> vector<8x1xf32>
    %99 = vector.broadcast %98 : vector<8x1xf32> to vector<8x8xf32>
    %100 = arith.mulf %95, %99 : vector<8x8xf32>
    %101 = arith.truncf %100 : vector<8x8xf32> to vector<8x8xbf16>
    %102 = arith.truncf %83 : vector<8x16xf32> to vector<8x16xbf16>
    %cst_36 = arith.constant dense<0.000000e+00> : vector<8x16xf32>
    %103 = tpu.matmul %101, %102, %cst_36 {dimension_numbers = #tpu.dot_dimension_numbers<[1], [0], [0], [1], [0, 0, 1, 1], [], []>} : vector<8x8xbf16>, vector<8x16xbf16>, vector<8x16xf32> -> vector<8x16xf32>
    %104 = arith.truncf %103 : vector<8x16xf32> to vector<8x16xbf16>
    %c0_37 = arith.constant 0 : index
    %c0_38 = arith.constant 0 : index
    %c0_39 = arith.constant 0 : index
    %105 = vector.load %arg4[%c0_37, %c0_38, %c0_39] : memref<1x32x32xbf16, #tpu.memory_space<vmem>>, vector<1x16x32xbf16>
    %106 = vector.shape_cast %105 : vector<1x16x32xbf16> to vector<16x32xbf16>
    %cst_40 = arith.constant dense<0.000000e+00> : vector<8x32xf32>
    %107 = tpu.matmul %104, %106, %cst_40 {dimension_numbers = #tpu.dot_dimension_numbers<[1], [0], [0], [1], [0, 0, 1, 1], [], []>} : vector<8x16xbf16>, vector<16x32xbf16>, vector<8x32xf32> -> vector<8x32xf32>
    %108 = arith.addf %80, %107 : vector<8x32xf32>
    %109 = vector.extract_strided_slice %19 {offsets = [8, 16], sizes = [8, 16], strides = [1, 1]} : vector<16x96xf32> to vector<8x16xf32>
    %110 = vector.extract_strided_slice %19 {offsets = [8, 48], sizes = [8, 16], strides = [1, 1]} : vector<16x96xf32> to vector<8x16xf32>
    %111 = vector.extract_strided_slice %19 {offsets = [8, 80], sizes = [8, 16], strides = [1, 1]} : vector<16x96xf32> to vector<8x16xf32>
    %112 = arith.truncf %109 : vector<8x16xf32> to vector<8x16xbf16>
    %113 = arith.truncf %110 : vector<8x16xf32> to vector<8x16xbf16>
    %cst_41 = arith.constant dense<0.000000e+00> : vector<8x8xf32>
    %114 = tpu.matmul %112, %113, %cst_41 {dimension_numbers = #tpu.dot_dimension_numbers<[1], [1], [0], [0], [0, 0, 1, 0], [], []>} : vector<8x16xbf16>, vector<8x16xbf16>, vector<8x8xf32> -> vector<8x8xf32>
    %cst_42 = arith.constant 2.500000e-01 : f32
    %115 = vector.broadcast %cst_42 : f32 to vector<8x8xf32>
    %116 = arith.mulf %114, %115 : vector<8x8xf32>
    %117 = vector.broadcast %79 : vector<1x8xf32> to vector<8x8xf32>
    %118 = arith.addf %116, %117 : vector<8x8xf32>
    %cst_43 = arith.constant dense<0xFF800000> : vector<8xf32>
    %119 = vector.multi_reduction <maximumf>, %118, %cst_43 [1] : vector<8x8xf32> to vector<8xf32>
    %120 = vector.shape_cast %119 : vector<8xf32> to vector<8x1xf32>
    %121 = vector.broadcast %120 : vector<8x1xf32> to vector<8x8xf32>
    %122 = arith.subf %118, %121 : vector<8x8xf32>
    %123 = math.exp %122 : vector<8x8xf32>
    %cst_44 = arith.constant dense<0.000000e+00> : vector<8xf32>
    %124 = vector.multi_reduction <add>, %123, %cst_44 [1] : vector<8x8xf32> to vector<8xf32>
    %125 = vector.shape_cast %124 : vector<8xf32> to vector<8x1xf32>
    %126 = tpu.reciprocal %125 {approx = true} : vector<8x1xf32> -> vector<8x1xf32>
    %127 = vector.broadcast %126 : vector<8x1xf32> to vector<8x8xf32>
    %128 = arith.mulf %123, %127 : vector<8x8xf32>
    %129 = arith.truncf %128 : vector<8x8xf32> to vector<8x8xbf16>
    %130 = arith.truncf %111 : vector<8x16xf32> to vector<8x16xbf16>
    %cst_45 = arith.constant dense<0.000000e+00> : vector<8x16xf32>
    %131 = tpu.matmul %129, %130, %cst_45 {dimension_numbers = #tpu.dot_dimension_numbers<[1], [0], [0], [1], [0, 0, 1, 1], [], []>} : vector<8x8xbf16>, vector<8x16xbf16>, vector<8x16xf32> -> vector<8x16xf32>
    %132 = arith.truncf %131 : vector<8x16xf32> to vector<8x16xbf16>
    %c0_46 = arith.constant 0 : index
    %c16_47 = arith.constant 16 : index
    %c0_48 = arith.constant 0 : index
    %133 = vector.load %arg4[%c0_46, %c16_47, %c0_48] : memref<1x32x32xbf16, #tpu.memory_space<vmem>>, vector<1x16x32xbf16>
    %134 = vector.shape_cast %133 : vector<1x16x32xbf16> to vector<16x32xbf16>
    %cst_49 = arith.constant dense<0.000000e+00> : vector<8x32xf32>
    %135 = tpu.matmul %132, %134, %cst_49 {dimension_numbers = #tpu.dot_dimension_numbers<[1], [0], [0], [1], [0, 0, 1, 1], [], []>} : vector<8x16xbf16>, vector<16x32xbf16>, vector<8x32xf32> -> vector<8x32xf32>
    %136 = arith.addf %108, %135 : vector<8x32xf32>
    %c8 = arith.constant 8 : index
    %c0_50 = arith.constant 0 : index
    %137 = vector.load %arg12[%c8, %c0_50] : memref<16x32xf32, #tpu.memory_space<vmem>>, vector<8x32xf32>
    tpu.vector_store %arg12[%c8, %c0_50], %136 {strides = array<i32>} : memref<16x32xf32, #tpu.memory_space<vmem>>, vector<8x32xf32>,
    %c0_51 = arith.constant 0 : index
    %c0_52 = arith.constant 0 : index
    %138 = vector.load %arg12[%c0_51, %c0_52] : memref<16x32xf32, #tpu.memory_space<vmem>>, vector<16x32xf32>
    %139 = vector.broadcast %8 : vector<1x32xf32> to vector<16x32xf32>
    %140 = arith.addf %138, %139 : vector<16x32xf32>
    %141 = arith.addf %140, %3 : vector<16x32xf32>
    %cst_53 = arith.constant dense<0.000000e+00> : vector<16xf32>
    %142 = vector.multi_reduction <add>, %141, %cst_53 [1] : vector<16x32xf32> to vector<16xf32>
    %143 = vector.shape_cast %142 : vector<16xf32> to vector<16x1xf32>
    %cst_54 = arith.constant 3.200000e+01 : f32
    %144 = vector.broadcast %cst_54 : f32 to vector<16x1xf32>
    %145 = arith.divf %143, %144 : vector<16x1xf32>
    %146 = vector.broadcast %145 : vector<16x1xf32> to vector<16x32xf32>
    %147 = arith.subf %141, %146 : vector<16x32xf32>
    %148 = arith.mulf %147, %147 : vector<16x32xf32>
    %cst_55 = arith.constant dense<0.000000e+00> : vector<16xf32>
    %149 = vector.multi_reduction <add>, %148, %cst_55 [1] : vector<16x32xf32> to vector<16xf32>
    %150 = vector.shape_cast %149 : vector<16xf32> to vector<16x1xf32>
    %cst_56 = arith.constant 3.200000e+01 : f32
    %151 = vector.broadcast %cst_56 : f32 to vector<16x1xf32>
    %152 = arith.divf %150, %151 : vector<16x1xf32>
    %153 = vector.broadcast %145 : vector<16x1xf32> to vector<16x32xf32>
    %154 = arith.subf %141, %153 : vector<16x32xf32>
    %cst_57 = arith.constant 9.99999996E-13 : f32
    %155 = vector.broadcast %cst_57 : f32 to vector<16x1xf32>
    %156 = arith.addf %152, %155 : vector<16x1xf32>
    %157 = math.rsqrt %156 : vector<16x1xf32>
    %158 = vector.broadcast %157 : vector<16x1xf32> to vector<16x32xf32>
    %159 = arith.mulf %154, %158 : vector<16x32xf32>
    %160 = vector.broadcast %11 : vector<1x32xf32> to vector<16x32xf32>
    %161 = arith.mulf %159, %160 : vector<16x32xf32>
    %162 = vector.broadcast %12 : vector<1x32xf32> to vector<16x32xf32>
    %163 = arith.addf %161, %162 : vector<16x32xf32>
    %164 = arith.truncf %163 : vector<16x32xf32> to vector<16x32xbf16>
    %c0_58 = arith.constant 0 : index
    %c0_59 = arith.constant 0 : index
    %c0_60 = arith.constant 0 : index
    %165 = vector.load %arg5[%c0_58, %c0_59, %c0_60] : memref<1x32x64xbf16, #tpu.memory_space<vmem>>, vector<1x32x64xbf16>
    %166 = vector.shape_cast %165 : vector<1x32x64xbf16> to vector<32x64xbf16>
    %cst_61 = arith.constant dense<0.000000e+00> : vector<16x64xf32>
    %167 = tpu.matmul %164, %166, %cst_61 {dimension_numbers = #tpu.dot_dimension_numbers<[1], [0], [0], [1], [0, 0, 1, 1], [], []>} : vector<16x32xbf16>, vector<32x64xbf16>, vector<16x64xf32> -> vector<16x64xf32>
    %168 = vector.broadcast %9 : vector<1x64xf32> to vector<16x64xf32>
    %169 = arith.addf %167, %168 : vector<16x64xf32>
    %cst_62 = arith.constant 5.000000e-01 : f32
    %170 = vector.broadcast %cst_62 : f32 to vector<16x64xf32>
    %171 = arith.mulf %170, %169 : vector<16x64xf32>
    %cst_63 = arith.constant 4.471500e-02 : f32
    %172 = vector.broadcast %cst_63 : f32 to vector<16x64xf32>
    %173 = arith.mulf %172, %169 : vector<16x64xf32>
    %174 = arith.mulf %173, %169 : vector<16x64xf32>
    %175 = arith.mulf %174, %169 : vector<16x64xf32>
    %176 = arith.addf %169, %175 : vector<16x64xf32>
    %cst_64 = arith.constant 0.797884583 : f32
    %177 = vector.broadcast %cst_64 : f32 to vector<16x64xf32>
    %178 = arith.mulf %177, %176 : vector<16x64xf32>
    %179 = math.tanh %178 : vector<16x64xf32>
    %cst_65 = arith.constant 1.000000e+00 : f32
    %180 = vector.broadcast %cst_65 : f32 to vector<16x64xf32>
    %181 = arith.addf %180, %179 : vector<16x64xf32>
    %182 = arith.mulf %171, %181 : vector<16x64xf32>
    %183 = arith.truncf %182 : vector<16x64xf32> to vector<16x64xbf16>
    %c0_66 = arith.constant 0 : index
    %c0_67 = arith.constant 0 : index
    %c0_68 = arith.constant 0 : index
    %184 = vector.load %arg6[%c0_66, %c0_67, %c0_68] : memref<1x64x32xbf16, #tpu.memory_space<vmem>>, vector<1x64x32xbf16>
    %185 = vector.shape_cast %184 : vector<1x64x32xbf16> to vector<64x32xbf16>
    %cst_69 = arith.constant dense<0.000000e+00> : vector<16x32xf32>
    %186 = tpu.matmul %183, %185, %cst_69 {dimension_numbers = #tpu.dot_dimension_numbers<[1], [0], [0], [1], [0, 0, 1, 1], [], []>} : vector<16x64xbf16>, vector<64x32xbf16>, vector<16x32xf32> -> vector<16x32xf32>
    %187 = vector.broadcast %10 : vector<1x32xf32> to vector<16x32xf32>
    %188 = arith.addf %186, %187 : vector<16x32xf32>
    %189 = arith.addf %188, %163 : vector<16x32xf32>
    %cst_70 = arith.constant dense<0.000000e+00> : vector<16xf32>
    %190 = vector.multi_reduction <add>, %189, %cst_70 [1] : vector<16x32xf32> to vector<16xf32>
    %191 = vector.shape_cast %190 : vector<16xf32> to vector<16x1xf32>
    %cst_71 = arith.constant 3.200000e+01 : f32
    %192 = vector.broadcast %cst_71 : f32 to vector<16x1xf32>
    %193 = arith.divf %191, %192 : vector<16x1xf32>
    %194 = vector.broadcast %193 : vector<16x1xf32> to vector<16x32xf32>
    %195 = arith.subf %189, %194 : vector<16x32xf32>
    %196 = arith.mulf %195, %195 : vector<16x32xf32>
    %cst_72 = arith.constant dense<0.000000e+00> : vector<16xf32>
    %197 = vector.multi_reduction <add>, %196, %cst_72 [1] : vector<16x32xf32> to vector<16xf32>
    %198 = vector.shape_cast %197 : vector<16xf32> to vector<16x1xf32>
    %cst_73 = arith.constant 3.200000e+01 : f32
    %199 = vector.broadcast %cst_73 : f32 to vector<16x1xf32>
    %200 = arith.divf %198, %199 : vector<16x1xf32>
    %201 = vector.broadcast %193 : vector<16x1xf32> to vector<16x32xf32>
    %202 = arith.subf %189, %201 : vector<16x32xf32>
    %cst_74 = arith.constant 9.99999996E-13 : f32
    %203 = vector.broadcast %cst_74 : f32 to vector<16x1xf32>
    %204 = arith.addf %200, %203 : vector<16x1xf32>
    %205 = math.rsqrt %204 : vector<16x1xf32>
    %206 = vector.broadcast %205 : vector<16x1xf32> to vector<16x32xf32>
    %207 = arith.mulf %202, %206 : vector<16x32xf32>
    %208 = vector.broadcast %13 : vector<1x32xf32> to vector<16x32xf32>
    %209 = arith.mulf %207, %208 : vector<16x32xf32>
    %210 = vector.broadcast %14 : vector<1x32xf32> to vector<16x32xf32>
    %211 = arith.addf %209, %210 : vector<16x32xf32>
    %c0_75 = arith.constant 0 : index
    %c0_76 = arith.constant 0 : index
    %212 = vector.load %arg11[%c0_75, %c0_76] : memref<16x32xf32, #tpu.memory_space<vmem>>, vector<16x32xf32>
    tpu.vector_store %arg11[%c0_75, %c0_76], %211 {strides = array<i32>} : memref<16x32xf32, #tpu.memory_space<vmem>>, vector<16x32xf32>,
    %c1_i32 = arith.constant 1 : i32
    %213 = arith.cmpi eq, %arg0, %c1_i32 : i32
    %214 = arith.extui %213 : i1 to i32
    %c0_i32_77 = arith.constant 0 : i32
    %215 = arith.cmpi ne, %214, %c0_i32_77 : i32
    scf.if %215 {
      %216 = arith.truncf %211 : vector<16x32xf32> to vector<16x32xbf16>
      %c0_78 = arith.constant 0 : index
      %c0_79 = arith.constant 0 : index
      %217 = vector.load %arg8[%c0_78, %c0_79] : memref<128x128xbf16, #tpu.memory_space<vmem>>, vector<32x128xbf16>
      %c32 = arith.constant 32 : index
      %c0_80 = arith.constant 0 : index
      %218 = vector.load %arg8[%c32, %c0_80] : memref<128x128xbf16, #tpu.memory_space<vmem>>, vector<32x128xbf16>
      %c64 = arith.constant 64 : index
      %c0_81 = arith.constant 0 : index
      %219 = vector.load %arg8[%c64, %c0_81] : memref<128x128xbf16, #tpu.memory_space<vmem>>, vector<32x128xbf16>
      %c96 = arith.constant 96 : index
      %c0_82 = arith.constant 0 : index
      %220 = vector.load %arg8[%c96, %c0_82] : memref<128x128xbf16, #tpu.memory_space<vmem>>, vector<32x128xbf16>
      %c0_83 = arith.constant 0 : index
      %c0_84 = arith.constant 0 : index
      %221 = vector.load %arg9[%c0_83, %c0_84] : memref<4x128xf32, #tpu.memory_space<vmem>>, vector<4x128xf32>
      %222 = vector.extract_strided_slice %221 {offsets = [0, 0], sizes = [1, 128], strides = [1, 1]} : vector<4x128xf32> to vector<1x128xf32>
      %223 = vector.extract_strided_slice %221 {offsets = [1, 0], sizes = [1, 128], strides = [1, 1]} : vector<4x128xf32> to vector<1x128xf32>
      %224 = vector.extract_strided_slice %221 {offsets = [2, 0], sizes = [1, 32], strides = [1, 1]} : vector<4x128xf32> to vector<1x32xf32>
      %225 = vector.extract_strided_slice %221 {offsets = [2, 32], sizes = [1, 32], strides = [1, 1]} : vector<4x128xf32> to vector<1x32xf32>
      %226 = vector.extract_strided_slice %221 {offsets = [3, 0], sizes = [1, 1], strides = [1, 1]} : vector<4x128xf32> to vector<1x1xf32>
      %cst_85 = arith.constant dense<0.000000e+00> : vector<16x128xf32>
      %227 = tpu.matmul %216, %217, %cst_85 {dimension_numbers = #tpu.dot_dimension_numbers<[1], [0], [0], [1], [0, 0, 1, 1], [], []>} : vector<16x32xbf16>, vector<32x128xbf16>, vector<16x128xf32> -> vector<16x128xf32>
      %228 = vector.broadcast %222 : vector<1x128xf32> to vector<16x128xf32>
      %229 = arith.addf %227, %228 : vector<16x128xf32>
      %cst_86 = arith.constant 0.000000e+00 : f32
      %230 = vector.broadcast %cst_86 : f32 to vector<1x32xf32>
      %cst_87 = arith.constant 0.000000e+00 : f32
      %231 = vector.broadcast %cst_87 : f32 to vector<1x32xf32>
      %232 = vector.extract_strided_slice %229 {offsets = [0, 0], sizes = [1, 128], strides = [1, 1]} : vector<16x128xf32> to vector<1x128xf32>
      %233 = arith.truncf %230 : vector<1x32xf32> to vector<1x32xbf16>
      %cst_88 = arith.constant dense<0.000000e+00> : vector<1x128xf32>
      %234 = tpu.matmul %233, %218, %cst_88 {dimension_numbers = #tpu.dot_dimension_numbers<[1], [0], [0], [1], [0, 0, 1, 1], [], []>} : vector<1x32xbf16>, vector<32x128xbf16>, vector<1x128xf32> -> vector<1x128xf32>
      %235 = arith.addf %232, %234 : vector<1x128xf32>
      %236 = arith.negf %235 : vector<1x128xf32>
      %237 = math.exp %236 : vector<1x128xf32>
      %cst_89 = arith.constant 1.000000e+00 : f32
      %238 = vector.broadcast %cst_89 : f32 to vector<1x128xf32>
      %239 = arith.addf %238, %237 : vector<1x128xf32>
      %240 = arith.divf %238, %239 : vector<1x128xf32>
      %241 = math.tanh %235 : vector<1x128xf32>
      %242 = vector.extract_strided_slice %240 {offsets = [0, 0], sizes = [1, 32], strides = [1, 1]} : vector<1x128xf32> to vector<1x32xf32>
      %243 = vector.extract_strided_slice %240 {offsets = [0, 32], sizes = [1, 32], strides = [1, 1]} : vector<1x128xf32> to vector<1x32xf32>
      %244 = vector.extract_strided_slice %241 {offsets = [0, 64], sizes = [1, 32], strides = [1, 1]} : vector<1x128xf32> to vector<1x32xf32>
      %245 = vector.extract_strided_slice %240 {offsets = [0, 96], sizes = [1, 32], strides = [1, 1]} : vector<1x128xf32> to vector<1x32xf32>
      %246 = arith.mulf %243, %231 : vector<1x32xf32>
      %247 = arith.mulf %242, %244 : vector<1x32xf32>
      %248 = arith.addf %246, %247 : vector<1x32xf32>
      %249 = math.tanh %248 : vector<1x32xf32>
      %250 = arith.mulf %245, %249 : vector<1x32xf32>
      %251 = vector.extract_strided_slice %229 {offsets = [1, 0], sizes = [1, 128], strides = [1, 1]} : vector<16x128xf32> to vector<1x128xf32>
      %252 = arith.truncf %250 : vector<1x32xf32> to vector<1x32xbf16>
      %cst_90 = arith.constant dense<0.000000e+00> : vector<1x128xf32>
      %253 = tpu.matmul %252, %218, %cst_90 {dimension_numbers = #tpu.dot_dimension_numbers<[1], [0], [0], [1], [0, 0, 1, 1], [], []>} : vector<1x32xbf16>, vector<32x128xbf16>, vector<1x128xf32> -> vector<1x128xf32>
      %254 = arith.addf %251, %253 : vector<1x128xf32>
      %255 = arith.negf %254 : vector<1x128xf32>
      %256 = math.exp %255 : vector<1x128xf32>
      %cst_91 = arith.constant 1.000000e+00 : f32
      %257 = vector.broadcast %cst_91 : f32 to vector<1x128xf32>
      %258 = arith.addf %257, %256 : vector<1x128xf32>
      %259 = arith.divf %257, %258 : vector<1x128xf32>
      %260 = math.tanh %254 : vector<1x128xf32>
      %261 = vector.extract_strided_slice %259 {offsets = [0, 0], sizes = [1, 32], strides = [1, 1]} : vector<1x128xf32> to vector<1x32xf32>
      %262 = vector.extract_strided_slice %259 {offsets = [0, 32], sizes = [1, 32], strides = [1, 1]} : vector<1x128xf32> to vector<1x32xf32>
      %263 = vector.extract_strided_slice %260 {offsets = [0, 64], sizes = [1, 32], strides = [1, 1]} : vector<1x128xf32> to vector<1x32xf32>
      %264 = vector.extract_strided_slice %259 {offsets = [0, 96], sizes = [1, 32], strides = [1, 1]} : vector<1x128xf32> to vector<1x32xf32>
      %265 = arith.mulf %262, %248 : vector<1x32xf32>
      %266 = arith.mulf %261, %263 : vector<1x32xf32>
      %267 = arith.addf %265, %266 : vector<1x32xf32>
      %268 = math.tanh %267 : vector<1x32xf32>
      %269 = arith.mulf %264, %268 : vector<1x32xf32>
      %270 = vector.extract_strided_slice %229 {offsets = [2, 0], sizes = [1, 128], strides = [1, 1]} : vector<16x128xf32> to vector<1x128xf32>
      %271 = arith.truncf %269 : vector<1x32xf32> to vector<1x32xbf16>
      %cst_92 = arith.constant dense<0.000000e+00> : vector<1x128xf32>
      %272 = tpu.matmul %271, %218, %cst_92 {dimension_numbers = #tpu.dot_dimension_numbers<[1], [0], [0], [1], [0, 0, 1, 1], [], []>} : vector<1x32xbf16>, vector<32x128xbf16>, vector<1x128xf32> -> vector<1x128xf32>
      %273 = arith.addf %270, %272 : vector<1x128xf32>
      %274 = arith.negf %273 : vector<1x128xf32>
      %275 = math.exp %274 : vector<1x128xf32>
      %cst_93 = arith.constant 1.000000e+00 : f32
      %276 = vector.broadcast %cst_93 : f32 to vector<1x128xf32>
      %277 = arith.addf %276, %275 : vector<1x128xf32>
      %278 = arith.divf %276, %277 : vector<1x128xf32>
      %279 = math.tanh %273 : vector<1x128xf32>
      %280 = vector.extract_strided_slice %278 {offsets = [0, 0], sizes = [1, 32], strides = [1, 1]} : vector<1x128xf32> to vector<1x32xf32>
      %281 = vector.extract_strided_slice %278 {offsets = [0, 32], sizes = [1, 32], strides = [1, 1]} : vector<1x128xf32> to vector<1x32xf32>
      %282 = vector.extract_strided_slice %279 {offsets = [0, 64], sizes = [1, 32], strides = [1, 1]} : vector<1x128xf32> to vector<1x32xf32>
      %283 = vector.extract_strided_slice %278 {offsets = [0, 96], sizes = [1, 32], strides = [1, 1]} : vector<1x128xf32> to vector<1x32xf32>
      %284 = arith.mulf %281, %267 : vector<1x32xf32>
      %285 = arith.mulf %280, %282 : vector<1x32xf32>
      %286 = arith.addf %284, %285 : vector<1x32xf32>
      %287 = math.tanh %286 : vector<1x32xf32>
      %288 = arith.mulf %283, %287 : vector<1x32xf32>
      %289 = vector.extract_strided_slice %229 {offsets = [3, 0], sizes = [1, 128], strides = [1, 1]} : vector<16x128xf32> to vector<1x128xf32>
      %290 = arith.truncf %288 : vector<1x32xf32> to vector<1x32xbf16>
      %cst_94 = arith.constant dense<0.000000e+00> : vector<1x128xf32>
      %291 = tpu.matmul %290, %218, %cst_94 {dimension_numbers = #tpu.dot_dimension_numbers<[1], [0], [0], [1], [0, 0, 1, 1], [], []>} : vector<1x32xbf16>, vector<32x128xbf16>, vector<1x128xf32> -> vector<1x128xf32>
      %292 = arith.addf %289, %291 : vector<1x128xf32>
      %293 = arith.negf %292 : vector<1x128xf32>
      %294 = math.exp %293 : vector<1x128xf32>
      %cst_95 = arith.constant 1.000000e+00 : f32
      %295 = vector.broadcast %cst_95 : f32 to vector<1x128xf32>
      %296 = arith.addf %295, %294 : vector<1x128xf32>
      %297 = arith.divf %295, %296 : vector<1x128xf32>
      %298 = math.tanh %292 : vector<1x128xf32>
      %299 = vector.extract_strided_slice %297 {offsets = [0, 0], sizes = [1, 32], strides = [1, 1]} : vector<1x128xf32> to vector<1x32xf32>
      %300 = vector.extract_strided_slice %297 {offsets = [0, 32], sizes = [1, 32], strides = [1, 1]} : vector<1x128xf32> to vector<1x32xf32>
      %301 = vector.extract_strided_slice %298 {offsets = [0, 64], sizes = [1, 32], strides = [1, 1]} : vector<1x128xf32> to vector<1x32xf32>
      %302 = vector.extract_strided_slice %297 {offsets = [0, 96], sizes = [1, 32], strides = [1, 1]} : vector<1x128xf32> to vector<1x32xf32>
      %303 = arith.mulf %300, %286 : vector<1x32xf32>
      %304 = arith.mulf %299, %301 : vector<1x32xf32>
      %305 = arith.addf %303, %304 : vector<1x32xf32>
      %306 = math.tanh %305 : vector<1x32xf32>
      %307 = arith.mulf %302, %306 : vector<1x32xf32>
      %308 = vector.extract_strided_slice %229 {offsets = [4, 0], sizes = [1, 128], strides = [1, 1]} : vector<16x128xf32> to vector<1x128xf32>
      %309 = arith.truncf %307 : vector<1x32xf32> to vector<1x32xbf16>
      %cst_96 = arith.constant dense<0.000000e+00> : vector<1x128xf32>
      %310 = tpu.matmul %309, %218, %cst_96 {dimension_numbers = #tpu.dot_dimension_numbers<[1], [0], [0], [1], [0, 0, 1, 1], [], []>} : vector<1x32xbf16>, vector<32x128xbf16>, vector<1x128xf32> -> vector<1x128xf32>
      %311 = arith.addf %308, %310 : vector<1x128xf32>
      %312 = arith.negf %311 : vector<1x128xf32>
      %313 = math.exp %312 : vector<1x128xf32>
      %cst_97 = arith.constant 1.000000e+00 : f32
      %314 = vector.broadcast %cst_97 : f32 to vector<1x128xf32>
      %315 = arith.addf %314, %313 : vector<1x128xf32>
      %316 = arith.divf %314, %315 : vector<1x128xf32>
      %317 = math.tanh %311 : vector<1x128xf32>
      %318 = vector.extract_strided_slice %316 {offsets = [0, 0], sizes = [1, 32], strides = [1, 1]} : vector<1x128xf32> to vector<1x32xf32>
      %319 = vector.extract_strided_slice %316 {offsets = [0, 32], sizes = [1, 32], strides = [1, 1]} : vector<1x128xf32> to vector<1x32xf32>
      %320 = vector.extract_strided_slice %317 {offsets = [0, 64], sizes = [1, 32], strides = [1, 1]} : vector<1x128xf32> to vector<1x32xf32>
      %321 = vector.extract_strided_slice %316 {offsets = [0, 96], sizes = [1, 32], strides = [1, 1]} : vector<1x128xf32> to vector<1x32xf32>
      %322 = arith.mulf %319, %305 : vector<1x32xf32>
      %323 = arith.mulf %318, %320 : vector<1x32xf32>
      %324 = arith.addf %322, %323 : vector<1x32xf32>
      %325 = math.tanh %324 : vector<1x32xf32>
      %326 = arith.mulf %321, %325 : vector<1x32xf32>
      %327 = vector.extract_strided_slice %229 {offsets = [5, 0], sizes = [1, 128], strides = [1, 1]} : vector<16x128xf32> to vector<1x128xf32>
      %328 = arith.truncf %326 : vector<1x32xf32> to vector<1x32xbf16>
      %cst_98 = arith.constant dense<0.000000e+00> : vector<1x128xf32>
      %329 = tpu.matmul %328, %218, %cst_98 {dimension_numbers = #tpu.dot_dimension_numbers<[1], [0], [0], [1], [0, 0, 1, 1], [], []>} : vector<1x32xbf16>, vector<32x128xbf16>, vector<1x128xf32> -> vector<1x128xf32>
      %330 = arith.addf %327, %329 : vector<1x128xf32>
      %331 = arith.negf %330 : vector<1x128xf32>
      %332 = math.exp %331 : vector<1x128xf32>
      %cst_99 = arith.constant 1.000000e+00 : f32
      %333 = vector.broadcast %cst_99 : f32 to vector<1x128xf32>
      %334 = arith.addf %333, %332 : vector<1x128xf32>
      %335 = arith.divf %333, %334 : vector<1x128xf32>
      %336 = math.tanh %330 : vector<1x128xf32>
      %337 = vector.extract_strided_slice %335 {offsets = [0, 0], sizes = [1, 32], strides = [1, 1]} : vector<1x128xf32> to vector<1x32xf32>
      %338 = vector.extract_strided_slice %335 {offsets = [0, 32], sizes = [1, 32], strides = [1, 1]} : vector<1x128xf32> to vector<1x32xf32>
      %339 = vector.extract_strided_slice %336 {offsets = [0, 64], sizes = [1, 32], strides = [1, 1]} : vector<1x128xf32> to vector<1x32xf32>
      %340 = vector.extract_strided_slice %335 {offsets = [0, 96], sizes = [1, 32], strides = [1, 1]} : vector<1x128xf32> to vector<1x32xf32>
      %341 = arith.mulf %338, %324 : vector<1x32xf32>
      %342 = arith.mulf %337, %339 : vector<1x32xf32>
      %343 = arith.addf %341, %342 : vector<1x32xf32>
      %344 = math.tanh %343 : vector<1x32xf32>
      %345 = arith.mulf %340, %344 : vector<1x32xf32>
      %346 = vector.extract_strided_slice %229 {offsets = [6, 0], sizes = [1, 128], strides = [1, 1]} : vector<16x128xf32> to vector<1x128xf32>
      %347 = arith.truncf %345 : vector<1x32xf32> to vector<1x32xbf16>
      %cst_100 = arith.constant dense<0.000000e+00> : vector<1x128xf32>
      %348 = tpu.matmul %347, %218, %cst_100 {dimension_numbers = #tpu.dot_dimension_numbers<[1], [0], [0], [1], [0, 0, 1, 1], [], []>} : vector<1x32xbf16>, vector<32x128xbf16>, vector<1x128xf32> -> vector<1x128xf32>
      %349 = arith.addf %346, %348 : vector<1x128xf32>
      %350 = arith.negf %349 : vector<1x128xf32>
      %351 = math.exp %350 : vector<1x128xf32>
      %cst_101 = arith.constant 1.000000e+00 : f32
      %352 = vector.broadcast %cst_101 : f32 to vector<1x128xf32>
      %353 = arith.addf %352, %351 : vector<1x128xf32>
      %354 = arith.divf %352, %353 : vector<1x128xf32>
      %355 = math.tanh %349 : vector<1x128xf32>
      %356 = vector.extract_strided_slice %354 {offsets = [0, 0], sizes = [1, 32], strides = [1, 1]} : vector<1x128xf32> to vector<1x32xf32>
      %357 = vector.extract_strided_slice %354 {offsets = [0, 32], sizes = [1, 32], strides = [1, 1]} : vector<1x128xf32> to vector<1x32xf32>
      %358 = vector.extract_strided_slice %355 {offsets = [0, 64], sizes = [1, 32], strides = [1, 1]} : vector<1x128xf32> to vector<1x32xf32>
      %359 = vector.extract_strided_slice %354 {offsets = [0, 96], sizes = [1, 32], strides = [1, 1]} : vector<1x128xf32> to vector<1x32xf32>
      %360 = arith.mulf %357, %343 : vector<1x32xf32>
      %361 = arith.mulf %356, %358 : vector<1x32xf32>
      %362 = arith.addf %360, %361 : vector<1x32xf32>
      %363 = math.tanh %362 : vector<1x32xf32>
      %364 = arith.mulf %359, %363 : vector<1x32xf32>
      %365 = vector.extract_strided_slice %229 {offsets = [7, 0], sizes = [1, 128], strides = [1, 1]} : vector<16x128xf32> to vector<1x128xf32>
      %366 = arith.truncf %364 : vector<1x32xf32> to vector<1x32xbf16>
      %cst_102 = arith.constant dense<0.000000e+00> : vector<1x128xf32>
      %367 = tpu.matmul %366, %218, %cst_102 {dimension_numbers = #tpu.dot_dimension_numbers<[1], [0], [0], [1], [0, 0, 1, 1], [], []>} : vector<1x32xbf16>, vector<32x128xbf16>, vector<1x128xf32> -> vector<1x128xf32>
      %368 = arith.addf %365, %367 : vector<1x128xf32>
      %369 = arith.negf %368 : vector<1x128xf32>
      %370 = math.exp %369 : vector<1x128xf32>
      %cst_103 = arith.constant 1.000000e+00 : f32
      %371 = vector.broadcast %cst_103 : f32 to vector<1x128xf32>
      %372 = arith.addf %371, %370 : vector<1x128xf32>
      %373 = arith.divf %371, %372 : vector<1x128xf32>
      %374 = math.tanh %368 : vector<1x128xf32>
      %375 = vector.extract_strided_slice %373 {offsets = [0, 0], sizes = [1, 32], strides = [1, 1]} : vector<1x128xf32> to vector<1x32xf32>
      %376 = vector.extract_strided_slice %373 {offsets = [0, 32], sizes = [1, 32], strides = [1, 1]} : vector<1x128xf32> to vector<1x32xf32>
      %377 = vector.extract_strided_slice %374 {offsets = [0, 64], sizes = [1, 32], strides = [1, 1]} : vector<1x128xf32> to vector<1x32xf32>
      %378 = vector.extract_strided_slice %373 {offsets = [0, 96], sizes = [1, 32], strides = [1, 1]} : vector<1x128xf32> to vector<1x32xf32>
      %379 = arith.mulf %376, %362 : vector<1x32xf32>
      %380 = arith.mulf %375, %377 : vector<1x32xf32>
      %381 = arith.addf %379, %380 : vector<1x32xf32>
      %382 = math.tanh %381 : vector<1x32xf32>
      %383 = arith.mulf %378, %382 : vector<1x32xf32>
      %384 = vector.extract_strided_slice %216 {offsets = [7, 0], sizes = [1, 32], strides = [1, 1]} : vector<16x32xbf16> to vector<1x32xbf16>
      %cst_104 = arith.constant dense<0.000000e+00> : vector<1x128xf32>
      %385 = tpu.matmul %384, %219, %cst_104 {dimension_numbers = #tpu.dot_dimension_numbers<[1], [0], [0], [1], [0, 0, 1, 1], [], []>} : vector<1x32xbf16>, vector<32x128xbf16>, vector<1x128xf32> -> vector<1x128xf32>
      %386 = arith.addf %385, %223 : vector<1x128xf32>
      %cst_105 = arith.constant 0.000000e+00 : f32
      %387 = vector.broadcast %cst_105 : f32 to vector<1x32xf32>
      %cst_106 = arith.constant 0.000000e+00 : f32
      %388 = vector.broadcast %cst_106 : f32 to vector<1x32xf32>
      %389 = arith.truncf %387 : vector<1x32xf32> to vector<1x32xbf16>
      %cst_107 = arith.constant dense<0.000000e+00> : vector<1x128xf32>
      %390 = tpu.matmul %389, %220, %cst_107 {dimension_numbers = #tpu.dot_dimension_numbers<[1], [0], [0], [1], [0, 0, 1, 1], [], []>} : vector<1x32xbf16>, vector<32x128xbf16>, vector<1x128xf32> -> vector<1x128xf32>
      %391 = arith.addf %386, %390 : vector<1x128xf32>
      %392 = arith.negf %391 : vector<1x128xf32>
      %393 = math.exp %392 : vector<1x128xf32>
      %cst_108 = arith.constant 1.000000e+00 : f32
      %394 = vector.broadcast %cst_108 : f32 to vector<1x128xf32>
      %395 = arith.addf %394, %393 : vector<1x128xf32>
      %396 = arith.divf %394, %395 : vector<1x128xf32>
      %397 = math.tanh %391 : vector<1x128xf32>
      %398 = vector.extract_strided_slice %396 {offsets = [0, 0], sizes = [1, 32], strides = [1, 1]} : vector<1x128xf32> to vector<1x32xf32>
      %399 = vector.extract_strided_slice %396 {offsets = [0, 32], sizes = [1, 32], strides = [1, 1]} : vector<1x128xf32> to vector<1x32xf32>
      %400 = vector.extract_strided_slice %397 {offsets = [0, 64], sizes = [1, 32], strides = [1, 1]} : vector<1x128xf32> to vector<1x32xf32>
      %401 = vector.extract_strided_slice %396 {offsets = [0, 96], sizes = [1, 32], strides = [1, 1]} : vector<1x128xf32> to vector<1x32xf32>
      %402 = arith.mulf %399, %388 : vector<1x32xf32>
      %403 = arith.mulf %398, %400 : vector<1x32xf32>
      %404 = arith.addf %402, %403 : vector<1x32xf32>
      %405 = math.tanh %404 : vector<1x32xf32>
      %406 = arith.mulf %401, %405 : vector<1x32xf32>
      %407 = arith.mulf %383, %224 : vector<1x32xf32>
      %cst_109 = arith.constant dense<0.000000e+00> : vector<1xf32>
      %408 = vector.multi_reduction <add>, %407, %cst_109 [1] : vector<1x32xf32> to vector<1xf32>
      %409 = vector.shape_cast %408 : vector<1xf32> to vector<1x1xf32>
      %410 = arith.mulf %406, %225 : vector<1x32xf32>
      %cst_110 = arith.constant dense<0.000000e+00> : vector<1xf32>
      %411 = vector.multi_reduction <add>, %410, %cst_110 [1] : vector<1x32xf32> to vector<1xf32>
      %412 = vector.shape_cast %411 : vector<1xf32> to vector<1x1xf32>
      %413 = arith.addf %409, %412 : vector<1x1xf32>
      %414 = arith.addf %413, %226 : vector<1x1xf32>
      %c0_111 = arith.constant 0 : index
      %c0_112 = arith.constant 0 : index
      %415 = vector.load %arg10[%c0_111, %c0_112] : memref<2x1xf32, #tpu.memory_space<vmem>>, vector<1x1xf32>
      tpu.vector_store %arg10[%c0_111, %c0_112], %414 {strides = array<i32>} : memref<2x1xf32, #tpu.memory_space<vmem>>, vector<1x1xf32>,
      %cst_113 = arith.constant 0.000000e+00 : f32
      %416 = vector.broadcast %cst_113 : f32 to vector<1x32xf32>
      %cst_114 = arith.constant 0.000000e+00 : f32
      %417 = vector.broadcast %cst_114 : f32 to vector<1x32xf32>
      %418 = vector.extract_strided_slice %229 {offsets = [8, 0], sizes = [1, 128], strides = [1, 1]} : vector<16x128xf32> to vector<1x128xf32>
      %419 = arith.truncf %416 : vector<1x32xf32> to vector<1x32xbf16>
      %cst_115 = arith.constant dense<0.000000e+00> : vector<1x128xf32>
      %420 = tpu.matmul %419, %218, %cst_115 {dimension_numbers = #tpu.dot_dimension_numbers<[1], [0], [0], [1], [0, 0, 1, 1], [], []>} : vector<1x32xbf16>, vector<32x128xbf16>, vector<1x128xf32> -> vector<1x128xf32>
      %421 = arith.addf %418, %420 : vector<1x128xf32>
      %422 = arith.negf %421 : vector<1x128xf32>
      %423 = math.exp %422 : vector<1x128xf32>
      %cst_116 = arith.constant 1.000000e+00 : f32
      %424 = vector.broadcast %cst_116 : f32 to vector<1x128xf32>
      %425 = arith.addf %424, %423 : vector<1x128xf32>
      %426 = arith.divf %424, %425 : vector<1x128xf32>
      %427 = math.tanh %421 : vector<1x128xf32>
      %428 = vector.extract_strided_slice %426 {offsets = [0, 0], sizes = [1, 32], strides = [1, 1]} : vector<1x128xf32> to vector<1x32xf32>
      %429 = vector.extract_strided_slice %426 {offsets = [0, 32], sizes = [1, 32], strides = [1, 1]} : vector<1x128xf32> to vector<1x32xf32>
      %430 = vector.extract_strided_slice %427 {offsets = [0, 64], sizes = [1, 32], strides = [1, 1]} : vector<1x128xf32> to vector<1x32xf32>
      %431 = vector.extract_strided_slice %426 {offsets = [0, 96], sizes = [1, 32], strides = [1, 1]} : vector<1x128xf32> to vector<1x32xf32>
      %432 = arith.mulf %429, %417 : vector<1x32xf32>
      %433 = arith.mulf %428, %430 : vector<1x32xf32>
      %434 = arith.addf %432, %433 : vector<1x32xf32>
      %435 = math.tanh %434 : vector<1x32xf32>
      %436 = arith.mulf %431, %435 : vector<1x32xf32>
      %437 = vector.extract_strided_slice %229 {offsets = [9, 0], sizes = [1, 128], strides = [1, 1]} : vector<16x128xf32> to vector<1x128xf32>
      %438 = arith.truncf %436 : vector<1x32xf32> to vector<1x32xbf16>
      %cst_117 = arith.constant dense<0.000000e+00> : vector<1x128xf32>
      %439 = tpu.matmul %438, %218, %cst_117 {dimension_numbers = #tpu.dot_dimension_numbers<[1], [0], [0], [1], [0, 0, 1, 1], [], []>} : vector<1x32xbf16>, vector<32x128xbf16>, vector<1x128xf32> -> vector<1x128xf32>
      %440 = arith.addf %437, %439 : vector<1x128xf32>
      %441 = arith.negf %440 : vector<1x128xf32>
      %442 = math.exp %441 : vector<1x128xf32>
      %cst_118 = arith.constant 1.000000e+00 : f32
      %443 = vector.broadcast %cst_118 : f32 to vector<1x128xf32>
      %444 = arith.addf %443, %442 : vector<1x128xf32>
      %445 = arith.divf %443, %444 : vector<1x128xf32>
      %446 = math.tanh %440 : vector<1x128xf32>
      %447 = vector.extract_strided_slice %445 {offsets = [0, 0], sizes = [1, 32], strides = [1, 1]} : vector<1x128xf32> to vector<1x32xf32>
      %448 = vector.extract_strided_slice %445 {offsets = [0, 32], sizes = [1, 32], strides = [1, 1]} : vector<1x128xf32> to vector<1x32xf32>
      %449 = vector.extract_strided_slice %446 {offsets = [0, 64], sizes = [1, 32], strides = [1, 1]} : vector<1x128xf32> to vector<1x32xf32>
      %450 = vector.extract_strided_slice %445 {offsets = [0, 96], sizes = [1, 32], strides = [1, 1]} : vector<1x128xf32> to vector<1x32xf32>
      %451 = arith.mulf %448, %434 : vector<1x32xf32>
      %452 = arith.mulf %447, %449 : vector<1x32xf32>
      %453 = arith.addf %451, %452 : vector<1x32xf32>
      %454 = math.tanh %453 : vector<1x32xf32>
      %455 = arith.mulf %450, %454 : vector<1x32xf32>
      %456 = vector.extract_strided_slice %229 {offsets = [10, 0], sizes = [1, 128], strides = [1, 1]} : vector<16x128xf32> to vector<1x128xf32>
      %457 = arith.truncf %455 : vector<1x32xf32> to vector<1x32xbf16>
      %cst_119 = arith.constant dense<0.000000e+00> : vector<1x128xf32>
      %458 = tpu.matmul %457, %218, %cst_119 {dimension_numbers = #tpu.dot_dimension_numbers<[1], [0], [0], [1], [0, 0, 1, 1], [], []>} : vector<1x32xbf16>, vector<32x128xbf16>, vector<1x128xf32> -> vector<1x128xf32>
      %459 = arith.addf %456, %458 : vector<1x128xf32>
      %460 = arith.negf %459 : vector<1x128xf32>
      %461 = math.exp %460 : vector<1x128xf32>
      %cst_120 = arith.constant 1.000000e+00 : f32
      %462 = vector.broadcast %cst_120 : f32 to vector<1x128xf32>
      %463 = arith.addf %462, %461 : vector<1x128xf32>
      %464 = arith.divf %462, %463 : vector<1x128xf32>
      %465 = math.tanh %459 : vector<1x128xf32>
      %466 = vector.extract_strided_slice %464 {offsets = [0, 0], sizes = [1, 32], strides = [1, 1]} : vector<1x128xf32> to vector<1x32xf32>
      %467 = vector.extract_strided_slice %464 {offsets = [0, 32], sizes = [1, 32], strides = [1, 1]} : vector<1x128xf32> to vector<1x32xf32>
      %468 = vector.extract_strided_slice %465 {offsets = [0, 64], sizes = [1, 32], strides = [1, 1]} : vector<1x128xf32> to vector<1x32xf32>
      %469 = vector.extract_strided_slice %464 {offsets = [0, 96], sizes = [1, 32], strides = [1, 1]} : vector<1x128xf32> to vector<1x32xf32>
      %470 = arith.mulf %467, %453 : vector<1x32xf32>
      %471 = arith.mulf %466, %468 : vector<1x32xf32>
      %472 = arith.addf %470, %471 : vector<1x32xf32>
      %473 = math.tanh %472 : vector<1x32xf32>
      %474 = arith.mulf %469, %473 : vector<1x32xf32>
      %475 = vector.extract_strided_slice %229 {offsets = [11, 0], sizes = [1, 128], strides = [1, 1]} : vector<16x128xf32> to vector<1x128xf32>
      %476 = arith.truncf %474 : vector<1x32xf32> to vector<1x32xbf16>
      %cst_121 = arith.constant dense<0.000000e+00> : vector<1x128xf32>
      %477 = tpu.matmul %476, %218, %cst_121 {dimension_numbers = #tpu.dot_dimension_numbers<[1], [0], [0], [1], [0, 0, 1, 1], [], []>} : vector<1x32xbf16>, vector<32x128xbf16>, vector<1x128xf32> -> vector<1x128xf32>
      %478 = arith.addf %475, %477 : vector<1x128xf32>
      %479 = arith.negf %478 : vector<1x128xf32>
      %480 = math.exp %479 : vector<1x128xf32>
      %cst_122 = arith.constant 1.000000e+00 : f32
      %481 = vector.broadcast %cst_122 : f32 to vector<1x128xf32>
      %482 = arith.addf %481, %480 : vector<1x128xf32>
      %483 = arith.divf %481, %482 : vector<1x128xf32>
      %484 = math.tanh %478 : vector<1x128xf32>
      %485 = vector.extract_strided_slice %483 {offsets = [0, 0], sizes = [1, 32], strides = [1, 1]} : vector<1x128xf32> to vector<1x32xf32>
      %486 = vector.extract_strided_slice %483 {offsets = [0, 32], sizes = [1, 32], strides = [1, 1]} : vector<1x128xf32> to vector<1x32xf32>
      %487 = vector.extract_strided_slice %484 {offsets = [0, 64], sizes = [1, 32], strides = [1, 1]} : vector<1x128xf32> to vector<1x32xf32>
      %488 = vector.extract_strided_slice %483 {offsets = [0, 96], sizes = [1, 32], strides = [1, 1]} : vector<1x128xf32> to vector<1x32xf32>
      %489 = arith.mulf %486, %472 : vector<1x32xf32>
      %490 = arith.mulf %485, %487 : vector<1x32xf32>
      %491 = arith.addf %489, %490 : vector<1x32xf32>
      %492 = math.tanh %491 : vector<1x32xf32>
      %493 = arith.mulf %488, %492 : vector<1x32xf32>
      %494 = vector.extract_strided_slice %229 {offsets = [12, 0], sizes = [1, 128], strides = [1, 1]} : vector<16x128xf32> to vector<1x128xf32>
      %495 = arith.truncf %493 : vector<1x32xf32> to vector<1x32xbf16>
      %cst_123 = arith.constant dense<0.000000e+00> : vector<1x128xf32>
      %496 = tpu.matmul %495, %218, %cst_123 {dimension_numbers = #tpu.dot_dimension_numbers<[1], [0], [0], [1], [0, 0, 1, 1], [], []>} : vector<1x32xbf16>, vector<32x128xbf16>, vector<1x128xf32> -> vector<1x128xf32>
      %497 = arith.addf %494, %496 : vector<1x128xf32>
      %498 = arith.negf %497 : vector<1x128xf32>
      %499 = math.exp %498 : vector<1x128xf32>
      %cst_124 = arith.constant 1.000000e+00 : f32
      %500 = vector.broadcast %cst_124 : f32 to vector<1x128xf32>
      %501 = arith.addf %500, %499 : vector<1x128xf32>
      %502 = arith.divf %500, %501 : vector<1x128xf32>
      %503 = math.tanh %497 : vector<1x128xf32>
      %504 = vector.extract_strided_slice %502 {offsets = [0, 0], sizes = [1, 32], strides = [1, 1]} : vector<1x128xf32> to vector<1x32xf32>
      %505 = vector.extract_strided_slice %502 {offsets = [0, 32], sizes = [1, 32], strides = [1, 1]} : vector<1x128xf32> to vector<1x32xf32>
      %506 = vector.extract_strided_slice %503 {offsets = [0, 64], sizes = [1, 32], strides = [1, 1]} : vector<1x128xf32> to vector<1x32xf32>
      %507 = vector.extract_strided_slice %502 {offsets = [0, 96], sizes = [1, 32], strides = [1, 1]} : vector<1x128xf32> to vector<1x32xf32>
      %508 = arith.mulf %505, %491 : vector<1x32xf32>
      %509 = arith.mulf %504, %506 : vector<1x32xf32>
      %510 = arith.addf %508, %509 : vector<1x32xf32>
      %511 = math.tanh %510 : vector<1x32xf32>
      %512 = arith.mulf %507, %511 : vector<1x32xf32>
      %513 = vector.extract_strided_slice %229 {offsets = [13, 0], sizes = [1, 128], strides = [1, 1]} : vector<16x128xf32> to vector<1x128xf32>
      %514 = arith.truncf %512 : vector<1x32xf32> to vector<1x32xbf16>
      %cst_125 = arith.constant dense<0.000000e+00> : vector<1x128xf32>
      %515 = tpu.matmul %514, %218, %cst_125 {dimension_numbers = #tpu.dot_dimension_numbers<[1], [0], [0], [1], [0, 0, 1, 1], [], []>} : vector<1x32xbf16>, vector<32x128xbf16>, vector<1x128xf32> -> vector<1x128xf32>
      %516 = arith.addf %513, %515 : vector<1x128xf32>
      %517 = arith.negf %516 : vector<1x128xf32>
      %518 = math.exp %517 : vector<1x128xf32>
      %cst_126 = arith.constant 1.000000e+00 : f32
      %519 = vector.broadcast %cst_126 : f32 to vector<1x128xf32>
      %520 = arith.addf %519, %518 : vector<1x128xf32>
      %521 = arith.divf %519, %520 : vector<1x128xf32>
      %522 = math.tanh %516 : vector<1x128xf32>
      %523 = vector.extract_strided_slice %521 {offsets = [0, 0], sizes = [1, 32], strides = [1, 1]} : vector<1x128xf32> to vector<1x32xf32>
      %524 = vector.extract_strided_slice %521 {offsets = [0, 32], sizes = [1, 32], strides = [1, 1]} : vector<1x128xf32> to vector<1x32xf32>
      %525 = vector.extract_strided_slice %522 {offsets = [0, 64], sizes = [1, 32], strides = [1, 1]} : vector<1x128xf32> to vector<1x32xf32>
      %526 = vector.extract_strided_slice %521 {offsets = [0, 96], sizes = [1, 32], strides = [1, 1]} : vector<1x128xf32> to vector<1x32xf32>
      %527 = arith.mulf %524, %510 : vector<1x32xf32>
      %528 = arith.mulf %523, %525 : vector<1x32xf32>
      %529 = arith.addf %527, %528 : vector<1x32xf32>
      %530 = math.tanh %529 : vector<1x32xf32>
      %531 = arith.mulf %526, %530 : vector<1x32xf32>
      %532 = vector.extract_strided_slice %229 {offsets = [14, 0], sizes = [1, 128], strides = [1, 1]} : vector<16x128xf32> to vector<1x128xf32>
      %533 = arith.truncf %531 : vector<1x32xf32> to vector<1x32xbf16>
      %cst_127 = arith.constant dense<0.000000e+00> : vector<1x128xf32>
      %534 = tpu.matmul %533, %218, %cst_127 {dimension_numbers = #tpu.dot_dimension_numbers<[1], [0], [0], [1], [0, 0, 1, 1], [], []>} : vector<1x32xbf16>, vector<32x128xbf16>, vector<1x128xf32> -> vector<1x128xf32>
      %535 = arith.addf %532, %534 : vector<1x128xf32>
      %536 = arith.negf %535 : vector<1x128xf32>
      %537 = math.exp %536 : vector<1x128xf32>
      %cst_128 = arith.constant 1.000000e+00 : f32
      %538 = vector.broadcast %cst_128 : f32 to vector<1x128xf32>
      %539 = arith.addf %538, %537 : vector<1x128xf32>
      %540 = arith.divf %538, %539 : vector<1x128xf32>
      %541 = math.tanh %535 : vector<1x128xf32>
      %542 = vector.extract_strided_slice %540 {offsets = [0, 0], sizes = [1, 32], strides = [1, 1]} : vector<1x128xf32> to vector<1x32xf32>
      %543 = vector.extract_strided_slice %540 {offsets = [0, 32], sizes = [1, 32], strides = [1, 1]} : vector<1x128xf32> to vector<1x32xf32>
      %544 = vector.extract_strided_slice %541 {offsets = [0, 64], sizes = [1, 32], strides = [1, 1]} : vector<1x128xf32> to vector<1x32xf32>
      %545 = vector.extract_strided_slice %540 {offsets = [0, 96], sizes = [1, 32], strides = [1, 1]} : vector<1x128xf32> to vector<1x32xf32>
      %546 = arith.mulf %543, %529 : vector<1x32xf32>
      %547 = arith.mulf %542, %544 : vector<1x32xf32>
      %548 = arith.addf %546, %547 : vector<1x32xf32>
      %549 = math.tanh %548 : vector<1x32xf32>
      %550 = arith.mulf %545, %549 : vector<1x32xf32>
      %551 = vector.extract_strided_slice %229 {offsets = [15, 0], sizes = [1, 128], strides = [1, 1]} : vector<16x128xf32> to vector<1x128xf32>
      %552 = arith.truncf %550 : vector<1x32xf32> to vector<1x32xbf16>
      %cst_129 = arith.constant dense<0.000000e+00> : vector<1x128xf32>
      %553 = tpu.matmul %552, %218, %cst_129 {dimension_numbers = #tpu.dot_dimension_numbers<[1], [0], [0], [1], [0, 0, 1, 1], [], []>} : vector<1x32xbf16>, vector<32x128xbf16>, vector<1x128xf32> -> vector<1x128xf32>
      %554 = arith.addf %551, %553 : vector<1x128xf32>
      %555 = arith.negf %554 : vector<1x128xf32>
      %556 = math.exp %555 : vector<1x128xf32>
      %cst_130 = arith.constant 1.000000e+00 : f32
      %557 = vector.broadcast %cst_130 : f32 to vector<1x128xf32>
      %558 = arith.addf %557, %556 : vector<1x128xf32>
      %559 = arith.divf %557, %558 : vector<1x128xf32>
      %560 = math.tanh %554 : vector<1x128xf32>
      %561 = vector.extract_strided_slice %559 {offsets = [0, 0], sizes = [1, 32], strides = [1, 1]} : vector<1x128xf32> to vector<1x32xf32>
      %562 = vector.extract_strided_slice %559 {offsets = [0, 32], sizes = [1, 32], strides = [1, 1]} : vector<1x128xf32> to vector<1x32xf32>
      %563 = vector.extract_strided_slice %560 {offsets = [0, 64], sizes = [1, 32], strides = [1, 1]} : vector<1x128xf32> to vector<1x32xf32>
      %564 = vector.extract_strided_slice %559 {offsets = [0, 96], sizes = [1, 32], strides = [1, 1]} : vector<1x128xf32> to vector<1x32xf32>
      %565 = arith.mulf %562, %548 : vector<1x32xf32>
      %566 = arith.mulf %561, %563 : vector<1x32xf32>
      %567 = arith.addf %565, %566 : vector<1x32xf32>
      %568 = math.tanh %567 : vector<1x32xf32>
      %569 = arith.mulf %564, %568 : vector<1x32xf32>
      %570 = vector.extract_strided_slice %216 {offsets = [15, 0], sizes = [1, 32], strides = [1, 1]} : vector<16x32xbf16> to vector<1x32xbf16>
      %cst_131 = arith.constant dense<0.000000e+00> : vector<1x128xf32>
      %571 = tpu.matmul %570, %219, %cst_131 {dimension_numbers = #tpu.dot_dimension_numbers<[1], [0], [0], [1], [0, 0, 1, 1], [], []>} : vector<1x32xbf16>, vector<32x128xbf16>, vector<1x128xf32> -> vector<1x128xf32>
      %572 = arith.addf %571, %223 : vector<1x128xf32>
      %cst_132 = arith.constant 0.000000e+00 : f32
      %573 = vector.broadcast %cst_132 : f32 to vector<1x32xf32>
      %cst_133 = arith.constant 0.000000e+00 : f32
      %574 = vector.broadcast %cst_133 : f32 to vector<1x32xf32>
      %575 = arith.truncf %573 : vector<1x32xf32> to vector<1x32xbf16>
      %cst_134 = arith.constant dense<0.000000e+00> : vector<1x128xf32>
      %576 = tpu.matmul %575, %220, %cst_134 {dimension_numbers = #tpu.dot_dimension_numbers<[1], [0], [0], [1], [0, 0, 1, 1], [], []>} : vector<1x32xbf16>, vector<32x128xbf16>, vector<1x128xf32> -> vector<1x128xf32>
      %577 = arith.addf %572, %576 : vector<1x128xf32>
      %578 = arith.negf %577 : vector<1x128xf32>
      %579 = math.exp %578 : vector<1x128xf32>
      %cst_135 = arith.constant 1.000000e+00 : f32
      %580 = vector.broadcast %cst_135 : f32 to vector<1x128xf32>
      %581 = arith.addf %580, %579 : vector<1x128xf32>
      %582 = arith.divf %580, %581 : vector<1x128xf32>
      %583 = math.tanh %577 : vector<1x128xf32>
      %584 = vector.extract_strided_slice %582 {offsets = [0, 0], sizes = [1, 32], strides = [1, 1]} : vector<1x128xf32> to vector<1x32xf32>
      %585 = vector.extract_strided_slice %582 {offsets = [0, 32], sizes = [1, 32], strides = [1, 1]} : vector<1x128xf32> to vector<1x32xf32>
      %586 = vector.extract_strided_slice %583 {offsets = [0, 64], sizes = [1, 32], strides = [1, 1]} : vector<1x128xf32> to vector<1x32xf32>
      %587 = vector.extract_strided_slice %582 {offsets = [0, 96], sizes = [1, 32], strides = [1, 1]} : vector<1x128xf32> to vector<1x32xf32>
      %588 = arith.mulf %585, %574 : vector<1x32xf32>
      %589 = arith.mulf %584, %586 : vector<1x32xf32>
      %590 = arith.addf %588, %589 : vector<1x32xf32>
      %591 = math.tanh %590 : vector<1x32xf32>
      %592 = arith.mulf %587, %591 : vector<1x32xf32>
      %593 = arith.mulf %569, %224 : vector<1x32xf32>
      %cst_136 = arith.constant dense<0.000000e+00> : vector<1xf32>
      %594 = vector.multi_reduction <add>, %593, %cst_136 [1] : vector<1x32xf32> to vector<1xf32>
      %595 = vector.shape_cast %594 : vector<1xf32> to vector<1x1xf32>
      %596 = arith.mulf %592, %225 : vector<1x32xf32>
      %cst_137 = arith.constant dense<0.000000e+00> : vector<1xf32>
      %597 = vector.multi_reduction <add>, %596, %cst_137 [1] : vector<1x32xf32> to vector<1xf32>
      %598 = vector.shape_cast %597 : vector<1xf32> to vector<1x1xf32>
      %599 = arith.addf %595, %598 : vector<1x1xf32>
      %600 = arith.addf %599, %226 : vector<1x1xf32>
      %c1_138 = arith.constant 1 : index
      %c0_139 = arith.constant 0 : index
      %601 = vector.load %arg10[%c1_138, %c0_139] : memref<2x1xf32, #tpu.memory_space<vmem>>, vector<1x1xf32>
      tpu.vector_store %arg10[%c1_138, %c0_139], %600 {strides = array<i32>} : memref<2x1xf32, #tpu.memory_space<vmem>>, vector<1x1xf32>,
    } else {
    }
    return
  }
  func.func @transform_0(%arg0: i32) -> (i32, i32) {
    %c0_i32 = arith.constant 0 : i32
    %c0_i32_0 = arith.constant 0 : i32
    %c0_i32_1 = arith.constant 0 : i32
    return %c0_i32, %c0_i32_0 : i32, i32
  }
  func.func @transform_1(%arg0: i32) -> (i32, i32) {
    %c0_i32 = arith.constant 0 : i32
    %c0_i32_0 = arith.constant 0 : i32
    %c0_i32_1 = arith.constant 0 : i32
    return %c0_i32, %c0_i32_0 : i32, i32
  }
  func.func @transform_2(%arg0: i32) -> (i32, i32, i32) {
    %c0_i32 = arith.constant 0 : i32
    %c0_i32_0 = arith.constant 0 : i32
    %c0_i32_1 = arith.constant 0 : i32
    return %arg0, %c0_i32, %c0_i32_0 : i32, i32, i32
  }
  func.func @transform_3(%arg0: i32) -> (i32, i32, i32) {
    %c0_i32 = arith.constant 0 : i32
    %c0_i32_0 = arith.constant 0 : i32
    %c0_i32_1 = arith.constant 0 : i32
    return %arg0, %c0_i32, %c0_i32_0 : i32, i32, i32
  }
  func.func @transform_4(%arg0: i32) -> (i32, i32, i32) {
    %c0_i32 = arith.constant 0 : i32
    %c0_i32_0 = arith.constant 0 : i32
    %c0_i32_1 = arith.constant 0 : i32
    return %arg0, %c0_i32, %c0_i32_0 : i32, i32, i32
  }
  func.func @transform_5(%arg0: i32) -> (i32, i32, i32) {
    %c0_i32 = arith.constant 0 : i32
    %c0_i32_0 = arith.constant 0 : i32
    %c0_i32_1 = arith.constant 0 : i32
    return %arg0, %c0_i32, %c0_i32_0 : i32, i32, i32
  }
  func.func @transform_6(%arg0: i32) -> (i32, i32, i32) {
    %c0_i32 = arith.constant 0 : i32
    %c0_i32_0 = arith.constant 0 : i32
    %c0_i32_1 = arith.constant 0 : i32
    return %arg0, %c0_i32, %c0_i32_0 : i32, i32, i32
  }
  func.func @transform_7(%arg0: i32) -> (i32, i32) {
    %c0_i32 = arith.constant 0 : i32
    %c0_i32_0 = arith.constant 0 : i32
    %c0_i32_1 = arith.constant 0 : i32
    return %c0_i32, %c0_i32_0 : i32, i32
  }
  func.func @transform_8(%arg0: i32) -> (i32, i32) {
    %c0_i32 = arith.constant 0 : i32
    %c0_i32_0 = arith.constant 0 : i32
    %c0_i32_1 = arith.constant 0 : i32
    return %c0_i32, %c0_i32_0 : i32, i32
  }
  func.func @transform_9(%arg0: i32) -> (i32, i32) {
    %c0_i32 = arith.constant 0 : i32
    %c0_i32_0 = arith.constant 0 : i32
    %c0_i32_1 = arith.constant 0 : i32
    return %c0_i32, %c0_i32_0 : i32, i32
  }
}

</mosaic_0001>

<llo_original>
// kernel: indobert_bic_forward.1
$region0: #{indobert_bic_forward.1}
  #allocation0 [shape = 'u32[]', space=smem, size = 0x4, offset = 0x4, fixed_abs, tag = 'smem constant byte address 0x4 - core index']
  #allocation1 [shape = 'u32[144,128]{1,0:T(1,128)}', space=vmem, size = 0x12000, scoped, tag = 'internal scratch']
  #allocation2 [shape = 'f32[16,32]{1,0:T(8,128)}', space=vmem, size = 0x2000, scoped, tag = 'scratch operand']
  #allocation3 [shape = 'f32[16,32]{1,0:T(8,128)}', space=vmem, size = 0x2000, scoped, tag = 'scratch operand']
  %s0 = inlined_call_operand.vmem [shape: f32[16,32], index: 0, kind: input, shape index: {}]
  %s1 = inlined_call_operand.vmem [shape: f32[2,8], index: 1, kind: input, shape index: {}]
  %s2 = inlined_call_operand.vmem [shape: bf16[2,32,96], index: 2, kind: input, shape index: {}]
  %s3 = inlined_call_operand.vmem [shape: bf16[2,32,32], index: 3, kind: input, shape index: {}]
  %s4 = inlined_call_operand.vmem [shape: bf16[2,32,64], index: 4, kind: input, shape index: {}]
  %s5 = inlined_call_operand.vmem [shape: bf16[2,64,32], index: 5, kind: input, shape index: {}]
  %s6 = inlined_call_operand.vmem [shape: f32[2,8,96], index: 6, kind: input, shape index: {}]
  %s7 = inlined_call_operand.vmem [shape: bf16[128,128], index: 7, kind: input, shape index: {}]
  %s8 = inlined_call_operand.vmem [shape: f32[4,128], index: 8, kind: input, shape index: {}]
  %s9 = inlined_call_operand.vmem [shape: f32[2,1], index: 9, kind: output, shape index: {}]
  %s10 = sld [smem:[#allocation0]]
  $region77: #{indobert_bic_forward.1} parent=0
    _
  %s12 = ssub.s32 1, %s10
  %s13 = scalar_select 0, %s12, %s10
  loop: start=0, step=1, limit=4
  $region2: #{indobert_bic_forward.1} parent=0 // loop_pre_header
    _
  $region3: #{indobert_bic_forward.1} parent=0 // loop_header
    %s15 = sphi 0, %s19
    %p16 = scmp.ge.s32.totalorder %s15, 4
    %s23 = sphi 0, %s23
    %s25 = sphi 0, %s23
    %s26 = sphi 0, %s25
    %s40 = sphi 0, %s26
    %s44 = sphi 0, %s44
    %s46 = sphi 0, %s44
    %s47 = sphi 0, %s46
    %s61 = sphi 0, %s47
    %s67 = sphi 0, %s69
    %s70 = sphi 0, %s67
    %s71 = sphi 0, %s70
    %s87 = sphi 0, %s71
    %s93 = sphi 0, %s95
    %s96 = sphi 0, %s93
    %s97 = sphi 0, %s96
    %s113 = sphi 0, %s97
    %s119 = sphi 0, %s121
    %s122 = sphi 0, %s119
    %s123 = sphi 0, %s122
    %s139 = sphi 0, %s123
    %s145 = sphi 0, %s147
    %s148 = sphi 0, %s145
    %s149 = sphi 0, %s148
    %s165 = sphi 0, %s149
    %s171 = sphi 0, %s173
    %s174 = sphi 0, %s171
    %s175 = sphi 0, %s174
    %s191 = sphi 0, %s175
    %s195 = sphi 0, %s195
    %s197 = sphi 0, %s195
    %s198 = sphi 0, %s197
    %s212 = sphi 0, %s198
    %s216 = sphi 0, %s216
    %s218 = sphi 0, %s216
    %s219 = sphi 0, %s218
    %s233 = sphi 0, %s219
    %s237 = sphi 0, %s237
    %s239 = sphi 0, %s237
    %s240 = sphi 0, %s239
    %s254 = sphi 0, %s240
  $region4: #{indobert_bic_forward.1} parent=0 // loop_header_branch
    %18 = sbr.rel (%p16) target = $region8
  $region5: #{indobert_bic_forward.1} parent=0 // loop_body
    %s20 = ssub.s32 %s15, 1
    %s21 = ssub.s32 %s15, 2
    %s22 = sadd.s32 %s15, 1
    %s24 = sadd.s32 %s23, 1
    %p27 = scmp.eq.s32.totalorder %s15, 1
    %p28 = scmp.ne.s32.totalorder %s23, %s25
    %p29 = scmp.eq.s32.totalorder %s15, 0
    %p30 = por %p28, %p29
    %p31 = scmp.ne.s32.totalorder %s23, %s25
    %p32 = scmp.eq.s32.totalorder %s20, 1
    %p33 = por %p31, %p32
    %p34 = scmp.ne.s32.totalorder %s25, %s26
    %p35 = scmp.eq.s32.totalorder %s20, 0
    %p36 = por %p34, %p35
    %p37 = scmp.ne.s32.totalorder %s25, %s26
    %p38 = scmp.eq.s32.totalorder %s21, 1
    %p39 = por %p37, %p38
    %p41 = scmp.ne.s32.totalorder %s26, %s40
    %p42 = scmp.eq.s32.totalorder %s21, 0
    %p43 = por %p41, %p42
    %s45 = sadd.s32 %s44, 1
    %p48 = scmp.eq.s32.totalorder %s15, 1
    %p49 = scmp.ne.s32.totalorder %s44, %s46
    %p50 = scmp.eq.s32.totalorder %s15, 0
    %p51 = por %p49, %p50
    %p52 = scmp.ne.s32.totalorder %s44, %s46
    %p53 = scmp.eq.s32.totalorder %s20, 1
    %p54 = por %p52, %p53
    %p55 = scmp.ne.s32.totalorder %s46, %s47
    %p56 = scmp.eq.s32.totalorder %s20, 0
    %p57 = por %p55, %p56
    %p58 = scmp.ne.s32.totalorder %s46, %s47
    %p59 = scmp.eq.s32.totalorder %s21, 1
    %p60 = por %p58, %p59
    %p62 = scmp.ne.s32.totalorder %s47, %s61
    %p63 = scmp.eq.s32.totalorder %s21, 0
    %p64 = por %p62, %p63
    %s65 = ssub.s32 %s15, %s22
    %p66 = scmp.eq.s32.totalorder %s65, 0
    %s68 = sadd.s32 %s67, 1
    %s69 = scalar_select %p66, %s67, %s68
    %p72 = pneg %p66
    %p73 = scmp.eq.s32.totalorder %s15, 1
    %p74 = por %p72, %p73
    %p75 = scmp.ne.s32.totalorder %s67, %s70
    %p76 = scmp.eq.s32.totalorder %s15, 0
    %p77 = por %p75, %p76
    %p78 = scmp.ne.s32.totalorder %s67, %s70
    %p79 = scmp.eq.s32.totalorder %s20, 1
    %p80 = por %p78, %p79
    %p81 = scmp.ne.s32.totalorder %s70, %s71
    %p82 = scmp.eq.s32.totalorder %s20, 0
    %p83 = por %p81, %p82
    %p84 = scmp.ne.s32.totalorder %s70, %s71
    %p85 = scmp.eq.s32.totalorder %s21, 1
    %p86 = por %p84, %p85
    %p88 = scmp.ne.s32.totalorder %s71, %s87
    %p89 = scmp.eq.s32.totalorder %s21, 0
    %p90 = por %p88, %p89
    %s91 = ssub.s32 %s15, %s22
    %p92 = scmp.eq.s32.totalorder %s91, 0
    %s94 = sadd.s32 %s93, 1
    %s95 = scalar_select %p92, %s93, %s94
    %p98 = pneg %p92
    %p99 = scmp.eq.s32.totalorder %s15, 1
    %p100 = por %p98, %p99
    %p101 = scmp.ne.s32.totalorder %s93, %s96
    %p102 = scmp.eq.s32.totalorder %s15, 0
    %p103 = por %p101, %p102
    %p104 = scmp.ne.s32.totalorder %s93, %s96
    %p105 = scmp.eq.s32.totalorder %s20, 1
    %p106 = por %p104, %p105
    %p107 = scmp.ne.s32.totalorder %s96, %s97
    %p108 = scmp.eq.s32.totalorder %s20, 0
    %p109 = por %p107, %p108
    %p110 = scmp.ne.s32.totalorder %s96, %s97
    %p111 = scmp.eq.s32.totalorder %s21, 1
    %p112 = por %p110, %p111
    %p114 = scmp.ne.s32.totalorder %s97, %s113
    %p115 = scmp.eq.s32.totalorder %s21, 0
    %p116 = por %p114, %p115
    %s117 = ssub.s32 %s15, %s22
    %p118 = scmp.eq.s32.totalorder %s117, 0
    %s120 = sadd.s32 %s119, 1
    %s121 = scalar_select %p118, %s119, %s120
    %p124 = pneg %p118
    %p125 = scmp.eq.s32.totalorder %s15, 1
    %p126 = por %p124, %p125
    %p127 = scmp.ne.s32.totalorder %s119, %s122
    %p128 = scmp.eq.s32.totalorder %s15, 0
    %p129 = por %p127, %p128
    %p130 = scmp.ne.s32.totalorder %s119, %s122
    %p131 = scmp.eq.s32.totalorder %s20, 1
    %p132 = por %p130, %p131
    %p133 = scmp.ne.s32.totalorder %s122, %s123
    %p134 = scmp.eq.s32.totalorder %s20, 0
    %p135 = por %p133, %p134
    %p136 = scmp.ne.s32.totalorder %s122, %s123
    %p137 = scmp.eq.s32.totalorder %s21, 1
    %p138 = por %p136, %p137
    %p140 = scmp.ne.s32.totalorder %s123, %s139
    %p141 = scmp.eq.s32.totalorder %s21, 0
    %p142 = por %p140, %p141
    %s143 = ssub.s32 %s15, %s22
    %p144 = scmp.eq.s32.totalorder %s143, 0
    %s146 = sadd.s32 %s145, 1
    %s147 = scalar_select %p144, %s145, %s146
    %p150 = pneg %p144
    %p151 = scmp.eq.s32.totalorder %s15, 1
    %p152 = por %p150, %p151
    %p153 = scmp.ne.s32.totalorder %s145, %s148
    %p154 = scmp.eq.s32.totalorder %s15, 0
    %p155 = por %p153, %p154
    %p156 = scmp.ne.s32.totalorder %s145, %s148
    %p157 = scmp.eq.s32.totalorder %s20, 1
    %p158 = por %p156, %p157
    %p159 = scmp.ne.s32.totalorder %s148, %s149
    %p160 = scmp.eq.s32.totalorder %s20, 0
    %p161 = por %p159, %p160
    %p162 = scmp.ne.s32.totalorder %s148, %s149
    %p163 = scmp.eq.s32.totalorder %s21, 1
    %p164 = por %p162, %p163
    %p166 = scmp.ne.s32.totalorder %s149, %s165
    %p167 = scmp.eq.s32.totalorder %s21, 0
    %p168 = por %p166, %p167
    %s169 = ssub.s32 %s15, %s22
    %p170 = scmp.eq.s32.totalorder %s169, 0
    %s172 = sadd.s32 %s171, 1
    %s173 = scalar_select %p170, %s171, %s172
    %p176 = pneg %p170
    %p177 = scmp.eq.s32.totalorder %s15, 1
    %p178 = por %p176, %p177
    %p179 = scmp.ne.s32.totalorder %s171, %s174
    %p180 = scmp.eq.s32.totalorder %s15, 0
    %p181 = por %p179, %p180
    %p182 = scmp.ne.s32.totalorder %s171, %s174
    %p183 = scmp.eq.s32.totalorder %s20, 1
    %p184 = por %p182, %p183
    %p185 = scmp.ne.s32.totalorder %s174, %s175
    %p186 = scmp.eq.s32.totalorder %s20, 0
    %p187 = por %p185, %p186
    %p188 = scmp.ne.s32.totalorder %s174, %s175
    %p189 = scmp.eq.s32.totalorder %s21, 1
    %p190 = por %p188, %p189
    %p192 = scmp.ne.s32.totalorder %s175, %s191
    %p193 = scmp.eq.s32.totalorder %s21, 0
    %p194 = por %p192, %p193
    %s196 = sadd.s32 %s195, 1
    %p199 = scmp.eq.s32.totalorder %s15, 1
    %p200 = scmp.ne.s32.totalorder %s195, %s197
    %p201 = scmp.eq.s32.totalorder %s15, 0
    %p202 = por %p200, %p201
    %p203 = scmp.ne.s32.totalorder %s195, %s197
    %p204 = scmp.eq.s32.totalorder %s20, 1
    %p205 = por %p203, %p204
    %p206 = scmp.ne.s32.totalorder %s197, %s198
    %p207 = scmp.eq.s32.totalorder %s20, 0
    %p208 = por %p206, %p207
    %p209 = scmp.ne.s32.totalorder %s197, %s198
    %p210 = scmp.eq.s32.totalorder %s21, 1
    %p211 = por %p209, %p210
    %p213 = scmp.ne.s32.totalorder %s198, %s212
    %p214 = scmp.eq.s32.totalorder %s21, 0
    %p215 = por %p213, %p214
    %s217 = sadd.s32 %s216, 1
    %p220 = scmp.eq.s32.totalorder %s15, 1
    %p221 = scmp.ne.s32.totalorder %s216, %s218
    %p222 = scmp.eq.s32.totalorder %s15, 0
    %p223 = por %p221, %p222
    %p224 = scmp.ne.s32.totalorder %s216, %s218
    %p225 = scmp.eq.s32.totalorder %s20, 1
    %p226 = por %p224, %p225
    %p227 = scmp.ne.s32.totalorder %s218, %s219
    %p228 = scmp.eq.s32.totalorder %s20, 0
    %p229 = por %p227, %p228
    %p230 = scmp.ne.s32.totalorder %s218, %s219
    %p231 = scmp.eq.s32.totalorder %s21, 1
    %p232 = por %p230, %p231
    %p234 = scmp.ne.s32.totalorder %s219, %s233
    %p235 = scmp.eq.s32.totalorder %s21, 0
    %p236 = por %p234, %p235
    %s238 = sadd.s32 %s237, 1
    %p241 = scmp.eq.s32.totalorder %s15, 1
    %p242 = scmp.ne.s32.totalorder %s237, %s239
    %p243 = scmp.eq.s32.totalorder %s15, 0
    %p244 = por %p242, %p243
    %p245 = scmp.ne.s32.totalorder %s237, %s239
    %p246 = scmp.eq.s32.totalorder %s20, 1
    %p247 = por %p245, %p246
    %p248 = scmp.ne.s32.totalorder %s239, %s240
    %p249 = scmp.eq.s32.totalorder %s20, 0
    %p250 = por %p248, %p249
    %p251 = scmp.ne.s32.totalorder %s239, %s240
    %p252 = scmp.eq.s32.totalorder %s21, 1
    %p253 = por %p251, %p252
    %p255 = scmp.ne.s32.totalorder %s240, %s254
    %p256 = scmp.eq.s32.totalorder %s21, 0
    %p257 = por %p255, %p256
    %p258 = scmp.le.s32.totalorder 1, %s15
    %p259 = scmp.lt.s32.totalorder %s15, 3
    %p260 = pnand %p258, %p259
    %p261 = pneg %p260
    // Predicated region
    $region9: #{indobert_bic_forward.1} parent=5 // pred_check
      _
    $region10: #{indobert_bic_forward.1} parent=5 // pred_check_branch
      %263 = sbr.rel (%p260) target = $region12
    $region11: #{indobert_bic_forward.1} parent=5 // pred_region
      %s264 = ssub.s32 %s15, 1
      // Predicated region
      $region13: #{indobert_bic_forward.1} parent=11 // pred_check
        %p265 = pneg %p36
      $region14: #{indobert_bic_forward.1} parent=11 // pred_check_branch
        %267 = sbr.rel (%p265) target = $region16
      $region15: #{indobert_bic_forward.1} parent=11 // pred_region
        _
      $region16: #{indobert_bic_forward.1} parent=11 // pred_fallthru
        _
      // Predicated region
      $region17: #{indobert_bic_forward.1} parent=11 // pred_check
        %p268 = pneg %p57
      $region18: #{indobert_bic_forward.1} parent=11 // pred_check_branch
        %270 = sbr.rel (%p268) target = $region20
      $region19: #{indobert_bic_forward.1} parent=11 // pred_region
        _
      $region20: #{indobert_bic_forward.1} parent=11 // pred_fallthru
        _
      // Predicated region
      $region21: #{indobert_bic_forward.1} parent=11 // pred_check
        %p271 = pneg %p208
      $region22: #{indobert_bic_forward.1} parent=11 // pred_check_branch
        %273 = sbr.rel (%p271) target = $region24
      $region23: #{indobert_bic_forward.1} parent=11 // pred_region
        _
      $region24: #{indobert_bic_forward.1} parent=11 // pred_fallthru
        _
      // Predicated region
      $region25: #{indobert_bic_forward.1} parent=11 // pred_check
        %p274 = pneg %p229
      $region26: #{indobert_bic_forward.1} parent=11 // pred_check_branch
        %276 = sbr.rel (%p274) target = $region28
      $region27: #{indobert_bic_forward.1} parent=11 // pred_region
        _
      $region28: #{indobert_bic_forward.1} parent=11 // pred_fallthru
        _
    $region12: #{indobert_bic_forward.1} parent=5 // pred_fallthru
      _
    %p277 = scmp.lt.s32.totalorder %s15, 2
    // Predicated region
    $region29: #{indobert_bic_forward.1} parent=5 // pred_check
      %p278 = pneg %p277
    $region30: #{indobert_bic_forward.1} parent=5 // pred_check_branch
      %280 = sbr.rel (%p278) target = $region32
    $region31: #{indobert_bic_forward.1} parent=5 // pred_region
      // Predicated region
      $region33: #{indobert_bic_forward.1} parent=31 // pred_check
        %p281 = pneg %p77
      $region34: #{indobert_bic_forward.1} parent=31 // pred_check_branch
        %283 = sbr.rel (%p281) target = $region36
      $region35: #{indobert_bic_forward.1} parent=31 // pred_region
        %p284 = scmp.lt.s32.totalorder %s15, 1
        %s285 = scalar_select %p284, %s15, 1
        %s286 = smul.addr %s285, 4
        %s287 = smul.addr %s286, 4
        %s288 = scalar_lea.vmem %s2, %s287
      $region36: #{indobert_bic_forward.1} parent=31 // pred_fallthru
        _
      // Predicated region
      $region37: #{indobert_bic_forward.1} parent=31 // pred_check
        %p289 = pneg %p103
      $region38: #{indobert_bic_forward.1} parent=31 // pred_check_branch
        %291 = sbr.rel (%p289) target = $region40
      $region39: #{indobert_bic_forward.1} parent=31 // pred_region
        %p292 = scmp.lt.s32.totalorder %s15, 1
        %s293 = scalar_select %p292, %s15, 1
        %s294 = smul.addr %s293, 4
        %s295 = smul.addr %s294, 4
        %s296 = scalar_lea.vmem %s3, %s295
      $region40: #{indobert_bic_forward.1} parent=31 // pred_fallthru
        _
      // Predicated region
      $region41: #{indobert_bic_forward.1} parent=31 // pred_check
        %p297 = pneg %p129
      $region42: #{indobert_bic_forward.1} parent=31 // pred_check_branch
        %299 = sbr.rel (%p297) target = $region44
      $region43: #{indobert_bic_forward.1} parent=31 // pred_region
        %p300 = scmp.lt.s32.totalorder %s15, 1
        %s301 = scalar_select %p300, %s15, 1
        %s302 = smul.addr %s301, 4
        %s303 = smul.addr %s302, 4
        %s304 = scalar_lea.vmem %s4, %s303
      $region44: #{indobert_bic_forward.1} parent=31 // pred_fallthru
        _
      // Predicated region
      $region45: #{indobert_bic_forward.1} parent=31 // pred_check
        %p305 = pneg %p155
      $region46: #{indobert_bic_forward.1} parent=31 // pred_check_branch
        %307 = sbr.rel (%p305) target = $region48
      $region47: #{indobert_bic_forward.1} parent=31 // pred_region
        %p308 = scmp.lt.s32.totalorder %s15, 1
        %s309 = scalar_select %p308, %s15, 1
        %s310 = smul.addr %s309, 8
        %s311 = smul.addr %s310, 4
        %s312 = scalar_lea.vmem %s5, %s311
      $region48: #{indobert_bic_forward.1} parent=31 // pred_fallthru
        _
      // Predicated region
      $region49: #{indobert_bic_forward.1} parent=31 // pred_check
        %p313 = pneg %p181
      $region50: #{indobert_bic_forward.1} parent=31 // pred_check_branch
        %315 = sbr.rel (%p313) target = $region52
      $region51: #{indobert_bic_forward.1} parent=31 // pred_region
        %p316 = scmp.lt.s32.totalorder %s15, 1
        %s317 = scalar_select %p316, %s15, 1
        %s318 = smul.addr %s317, 8
        %s319 = scalar_lea.vmem %s6, %s318
      $region52: #{indobert_bic_forward.1} parent=31 // pred_fallthru
        _
    $region32: #{indobert_bic_forward.1} parent=5 // pred_fallthru
      _
    %p320 = scmp.le.s32.totalorder 1, %s15
    %p321 = scmp.lt.s32.totalorder %s15, 3
    %p322 = pnand %p320, %p321
    %p323 = pneg %p322
    // Predicated region
    $region53: #{indobert_bic_forward.1} parent=5 // pred_check
      _
    $region54: #{indobert_bic_forward.1} parent=5 // pred_check_branch
      %325 = sbr.rel (%p322) target = $region56
    $region55: #{indobert_bic_forward.1} parent=5 // pred_region
      %s326 = ssub.s32 %s15, 1
      %p327 = pneg %p36
      %p328 = pneg %p33
      %p329 = pneg %p57
      %p330 = pneg %p54
      %p331 = scmp.lt.s32.totalorder %s20, 1
      %s332 = scalar_select %p331, %s20, 1
      %s333 = smul.addr %s332, 4
      %s334 = smul.addr %s333, 4
      %s335 = scalar_lea.vmem %s2, %s334
      %p336 = pneg %p83
      %p337 = pneg %p80
      %p338 = scmp.lt.s32.totalorder %s20, 1
      %s339 = scalar_select %p338, %s20, 1
      %s340 = smul.addr %s339, 4
      %s341 = smul.addr %s340, 4
      %s342 = scalar_lea.vmem %s3, %s341
      %p343 = pneg %p109
      %p344 = pneg %p106
      %p345 = scmp.lt.s32.totalorder %s20, 1
      %s346 = scalar_select %p345, %s20, 1
      %s347 = smul.addr %s346, 4
      %s348 = smul.addr %s347, 4
      %s349 = scalar_lea.vmem %s4, %s348
      %p350 = pneg %p135
      %p351 = pneg %p132
      %p352 = scmp.lt.s32.totalorder %s20, 1
      %s353 = scalar_select %p352, %s20, 1
      %s354 = smul.addr %s353, 8
      %s355 = smul.addr %s354, 4
      %s356 = scalar_lea.vmem %s5, %s355
      %p357 = pneg %p161
      %p358 = pneg %p158
      %p359 = scmp.lt.s32.totalorder %s20, 1
      %s360 = scalar_select %p359, %s20, 1
      %s361 = smul.addr %s360, 8
      %s362 = scalar_lea.vmem %s6, %s361
      %p363 = pneg %p187
      %p364 = pneg %p184
      %p365 = pneg %p208
      %p366 = pneg %p205
      %p367 = pneg %p229
      %p368 = pneg %p226
      %p369 = pneg %p250
      %p370 = pneg %p247
      %p371 = scmp.lt.s32.totalorder %s20, 1
      %s372 = scalar_select %p371, %s20, 1
      %s373 = smul.addr %s372, 4
      %s374 = smul.addr %s373, 4
      %s375 = scalar_lea.vmem %s2, %s374
      %p376 = scmp.lt.s32.totalorder %s20, 1
      %s377 = scalar_select %p376, %s20, 1
      %s378 = smul.addr %s377, 4
      %s379 = smul.addr %s378, 4
      %s380 = scalar_lea.vmem %s3, %s379
      %p381 = scmp.lt.s32.totalorder %s20, 1
      %s382 = scalar_select %p381, %s20, 1
      %s383 = smul.addr %s382, 4
      %s384 = smul.addr %s383, 4
      %s385 = scalar_lea.vmem %s4, %s384
      %p386 = scmp.lt.s32.totalorder %s20, 1
      %s387 = scalar_select %p386, %s20, 1
      %s388 = smul.addr %s387, 8
      %s389 = smul.addr %s388, 4
      %s390 = scalar_lea.vmem %s5, %s389
      %p391 = scmp.lt.s32.totalorder %s20, 1
      %s392 = scalar_select %p391, %s20, 1
      %s393 = smul.addr %s392, 8
      %s394 = scalar_lea.vmem %s6, %s393
      %p396 = scmp.eq.s32.totalorder %s20, 0
      // Predicated region
      $region57: #{indobert_bic_forward.1} parent=55 // pred_check
        %p397 = pneg %p396
      $region58: #{indobert_bic_forward.1} parent=55 // pred_check_branch
        %399 = sbr.rel (%p397) target = $region60
      $region59: #{indobert_bic_forward.1} parent=55 // pred_region
        %v400 = vld [vmem:[%s0] sm:$0xff]
        %v401 = vld [vmem:[%s0 + $0x8] sm:$0xff]
        %vm402 = vcmask 261120
        %403 = vst.msk [vmem:[#allocation2] sm:$0xff] %vm402, %v400
        %404 = vst.msk [vmem:[#allocation2 + $0x8] sm:$0xff] %vm402, %v401
      $region60: #{indobert_bic_forward.1} parent=55 // pred_fallthru
        _
      %v405 = vld [vmem:[#allocation2] sm:$0xff]
      %v406 = vld [vmem:[#allocation2 + $0x8] sm:$0xff]
      %v407 = vpack.c.bf16 %v406, %v405
      %v408 = vld [vmem:[%s394] sm:$0xff]
      %v409 = vld [vmem:[%s375] sm:$0xf]
      %v410 = vld [vmem:[%s375 + $0x4] sm:$0xf]
      %v411 = vld [vmem:[%s375 + $0x8] sm:$0xf]
      %v412 = vld [vmem:[%s375 + $0xc] sm:$0xf]
      %v413 = vlaneseq
      %v414 = vshrl.u32 %v413, 7
      %v415 = vsub.s32 0, %v414
      %v416 = vrot.slane %v408, %v415
      %v421 = vunpack.c.l.b16 %v409
      %v422 = vunpack.c.l.b16 %v410
      %v423 = vunpack.c.l.b16 %v411
      %v424 = vunpack.c.l.b16 %v412
      %v425 = vpack.c.b16 %v422, %v421
      %v426 = vpack.c.b16 %v424, %v423
      %vm429 = vcmask 261120
      %v431 = vsel %vm429, %v407, 0
      %433 = vmatprep.subr.bf16.mxu0 0
      %434 = vmatpush1.bf16.msra.mxu0 0
      %435 = vmatprep.subr.bf16.mxu0 0
      %436 = vmatpush1.bf16.msra.mxu0 0
      %437 = vmatprep.subr.bf16.mxu0 0
      %438 = vmatpush1.bf16.msra.mxu0 0
      %439 = vmatprep.subr.bf16.mxu0 0
      %440 = vmatpush1.bf16.msra.mxu0 0
      %441 = vmatprep.subr.bf16.mxu0 0
      %442 = vmatpush1.bf16.msra.mxu0 0
      %443 = vmatprep.subr.bf16.mxu0 0
      %444 = vmatpush1.bf16.msra.mxu0 0
      %445 = vmatprep.subr.bf16.mxu0 0
      %446 = vmatpush1.bf16.msra.mxu0 %v426
      %447 = vmatprep.subr.bf16.mxu0 0
      %448 = vmatpush1.bf16.msra.mxu0 %v425
      %449 = vmatprep.subr.bf16.mxu0 0
      %450 = vmatpush2.bf16.msra.mxu0 0
      %451 = vmatprep.subr.bf16.mxu0 0
      %452 = vmatpush2.bf16.msra.mxu0 0
      %453 = vmatprep.subr.bf16.mxu0 0
      %454 = vmatpush2.bf16.msra.mxu0 0
      %455 = vmatprep.subr.bf16.mxu0 0
      %456 = vmatpush2.bf16.msra.mxu0 0
      %457 = vmatprep.subr.bf16.mxu0 0
      %458 = vmatpush2.bf16.msra.mxu0 0
      %459 = vmatprep.subr.bf16.mxu0 0
      %460 = vmatpush2.bf16.msra.mxu0 0
      %461 = vmatprep.subr.bf16.mxu0 0
      %462 = vmatpush2.bf16.msra.mxu0 0
      %463 = vmatprep.subr.bf16.mxu0 0
      %464 = vmatpush2.bf16.msra.mxu0 0
      %465 = vmatprep.mubr.bf16.mxu0 0
      %466 = vmatmul.mubr.bf16.gmra.mxu0 %v431
      %v467 = vpop.f32.mrf.mxu0
      %v468 = vadd.f32 %v416, %v467
      %v469 = vpop.f32.mrf.mxu0
      %v470 = vpop.f32.mrf.mxu0
      %v471 = vadd.f32 %v416, %v470
      %v472 = vpop.f32.mrf.mxu0
      %473 = vdwg.mxu0
      %v474 = vld [vmem:[%s1] sm:$0x1]
      %v475 = vpack.c.bf16 %v468, %v468
      %477 = vrot.lane.b32.xlu0 %v475, 96
      %v478 = vpop.permute.xlu0 %477
      %vm479 = vcmask 130048
      %v481 = vsel %vm479, %v475, 0
      %v484 = vsel %vm479, %v478, 0
      %486 = vmatprep.subr.bf16.mxu0 0
      %487 = vmatpush1.bf16.xpose.msra.mxu0 0
      %488 = vmatprep.subr.bf16.mxu0 0
      %489 = vmatpush1.bf16.xpose.msra.mxu0 0
      %490 = vmatprep.subr.bf16.mxu0 0
      %491 = vmatpush1.bf16.xpose.msra.mxu0 0
      %492 = vmatprep.subr.bf16.mxu0 0
      %493 = vmatpush1.bf16.xpose.msra.mxu0 0
      %494 = vmatprep.subr.bf16.mxu0 0
      %495 = vmatpush1.bf16.xpose.msra.mxu0 0
      %496 = vmatprep.subr.bf16.mxu0 0
      %497 = vmatpush1.bf16.xpose.msra.mxu0 0
      %498 = vmatprep.subr.bf16.mxu0 0
      %499 = vmatpush1.bf16.xpose.msra.mxu0 0
      %500 = vmatprep.subr.bf16.mxu0 0
      %501 = vmatpush1.bf16.xpose.msra.mxu0 %v484
      %502 = vmatprep.subr.bf16.mxu0 0
      %503 = vmatpush2.bf16.xpose.msra.mxu0 0
      %504 = vmatprep.subr.bf16.mxu0 0
      %505 = vmatpush2.bf16.xpose.msra.mxu0 0
      %506 = vmatprep.subr.bf16.mxu0 0
      %507 = vmatpush2.bf16.xpose.msra.mxu0 0
      %508 = vmatprep.subr.bf16.mxu0 0
      %509 = vmatpush2.bf16.xpose.msra.mxu0 0
      %510 = vmatprep.subr.bf16.mxu0 0
      %511 = vmatpush2.bf16.xpose.msra.mxu0 0
      %512 = vmatprep.subr.bf16.mxu0 0
      %513 = vmatpush2.bf16.xpose.msra.mxu0 0
      %514 = vmatprep.subr.bf16.mxu0 0
      %515 = vmatpush2.bf16.xpose.msra.mxu0 0
      %516 = vmatprep.subr.bf16.mxu0 0
      %517 = vmatpush2.bf16.xpose.msra.mxu0 0
      %518 = vmatprep.mubr.bf16.mxu0 0
      %519 = vmatmul.mubr.bf16.gmra.mxu0 %v481
      %v520 = vpop.f32.mrf.mxu0
      %v521 = vadd.f32 0.0, %v520
      %v522 = vpop.f32.mrf.mxu0
      %v523 = vpop.f32.mrf.mxu0
      %v524 = vpop.f32.mrf.mxu0
      %525 = vdwg.mxu0
      %v526 = vmul.f32 %v521, 0.25
      %v527 = vlaneseq
      %v528 = vshrl.u32 %v527, 7
      %v529 = vsub.s32 0, %v528
      %v530 = vrot.slane %v474, %v529
      %v531 = vadd.f32 %v526, %v530
      %vm532 = vcmask 64512
      %v533 = vsel %vm532, %v531, -inf
      %534 = vmax.xlane.f32.xlu0 %v533
      %v535 = vpop.xlane.xlu0 %534
      %v536 = vsub.f32 %v531, %v535
      %v537 = vmul.f32 %v536, 1.442695
      %v538 = vpow.pop %v537
      %v539 = vsel %vm532, %v538, 0.0
      %540 = vadd.xlane.f32.xlu0 %v539
      %v541 = vpop.xlane.xlu0 %540
      %v542 = vrcp.pop %v541
      %v543 = vmul.f32 %v538, %v542
      %v544 = vpack.c.bf16 %v543, %v543
      %545 = vrot.lane.b32.xlu0 %v475, 64
      %v546 = vpop.permute.xlu0 %545
      %v548 = vsel %vm532, %v544, 0
      %vm550 = vcmask 1043456
      %v552 = vsel %vm550, %v546, 0
      %554 = vmatprep.subr.bf16.mxu0 0
      %555 = vmatpush1.bf16.msra.mxu0 0
      %556 = vmatprep.subr.bf16.mxu0 0
      %557 = vmatpush1.bf16.msra.mxu0 0
      %558 = vmatprep.subr.bf16.mxu0 0
      %559 = vmatpush1.bf16.msra.mxu0 0
      %560 = vmatprep.subr.bf16.mxu0 0
      %561 = vmatpush1.bf16.msra.mxu0 0
      %562 = vmatprep.subr.bf16.mxu0 0
      %563 = vmatpush1.bf16.msra.mxu0 0
      %564 = vmatprep.subr.bf16.mxu0 0
      %565 = vmatpush1.bf16.msra.mxu0 0
      %566 = vmatprep.subr.bf16.mxu0 0
      %567 = vmatpush1.bf16.msra.mxu0 0
      %568 = vmatprep.subr.bf16.mxu0 0
      %569 = vmatpush1.bf16.msra.mxu0 %v552
      %570 = vmatprep.subr.bf16.mxu0 0
      %571 = vmatpush2.bf16.msra.mxu0 0
      %572 = vmatprep.subr.bf16.mxu0 0
      %573 = vmatpush2.bf16.msra.mxu0 0
      %574 = vmatprep.subr.bf16.mxu0 0
      %575 = vmatpush2.bf16.msra.mxu0 0
      %576 = vmatprep.subr.bf16.mxu0 0
      %577 = vmatpush2.bf16.msra.mxu0 0
      %578 = vmatprep.subr.bf16.mxu0 0
      %579 = vmatpush2.bf16.msra.mxu0 0
      %580 = vmatprep.subr.bf16.mxu0 0
      %581 = vmatpush2.bf16.msra.mxu0 0
      %582 = vmatprep.subr.bf16.mxu0 0
      %583 = vmatpush2.bf16.msra.mxu0 0
      %584 = vmatprep.subr.bf16.mxu0 0
      %585 = vmatpush2.bf16.msra.mxu0 0
      %586 = vmatprep.mubr.bf16.mxu0 0
      %587 = vmatmul.mubr.bf16.gmra.mxu0 %v548
      %v588 = vpop.f32.mrf.mxu0
      %v589 = vadd.f32 0.0, %v588
      %v590 = vpop.f32.mrf.mxu0
      %v591 = vpop.f32.mrf.mxu0
      %v592 = vpop.f32.mrf.mxu0
      %593 = vdwg.mxu0
      %v594 = vpack.c.bf16 %v589, %v589
      %v595 = vld [vmem:[%s380] sm:$0xf]
      %v596 = vld [vmem:[%s380 + $0x4] sm:$0xf]
      %597 = vrot.lane.b32.xlu0 %v475, 112
      %v598 = vpop.permute.xlu0 %597
      %599 = vrot.lane.b32.xlu0 %v475, 80
      %v600 = vpop.permute.xlu0 %599
      %v602 = vsel %vm479, %v598, 0
      %v605 = vsel %vm479, %v600, 0
      %607 = vmatprep.subr.bf16.mxu0 0
      %608 = vmatpush1.bf16.xpose.msra.mxu0 0
      %609 = vmatprep.subr.bf16.mxu0 0
      %610 = vmatpush1.bf16.xpose.msra.mxu0 0
      %611 = vmatprep.subr.bf16.mxu0 0
      %612 = vmatpush1.bf16.xpose.msra.mxu0 0
      %613 = vmatprep.subr.bf16.mxu0 0
      %614 = vmatpush1.bf16.xpose.msra.mxu0 0
      %615 = vmatprep.subr.bf16.mxu0 0
      %616 = vmatpush1.bf16.xpose.msra.mxu0 0
      %617 = vmatprep.subr.bf16.mxu0 0
      %618 = vmatpush1.bf16.xpose.msra.mxu0 0
      %619 = vmatprep.subr.bf16.mxu0 0
      %620 = vmatpush1.bf16.xpose.msra.mxu0 0
      %621 = vmatprep.subr.bf16.mxu0 0
      %622 = vmatpush1.bf16.xpose.msra.mxu0 %v605
      %623 = vmatprep.subr.bf16.mxu0 0
      %624 = vmatpush2.bf16.xpose.msra.mxu0 0
      %625 = vmatprep.subr.bf16.mxu0 0
      %626 = vmatpush2.bf16.xpose.msra.mxu0 0
      %627 = vmatprep.subr.bf16.mxu0 0
      %628 = vmatpush2.bf16.xpose.msra.mxu0 0
      %629 = vmatprep.subr.bf16.mxu0 0
      %630 = vmatpush2.bf16.xpose.msra.mxu0 0
      %631 = vmatprep.subr.bf16.mxu0 0
      %632 = vmatpush2.bf16.xpose.msra.mxu0 0
      %633 = vmatprep.subr.bf16.mxu0 0
      %634 = vmatpush2.bf16.xpose.msra.mxu0 0
      %635 = vmatprep.subr.bf16.mxu0 0
      %636 = vmatpush2.bf16.xpose.msra.mxu0 0
      %637 = vmatprep.subr.bf16.mxu0 0
      %638 = vmatpush2.bf16.xpose.msra.mxu0 0
      %639 = vmatprep.mubr.bf16.mxu0 0
      %640 = vmatmul.mubr.bf16.gmra.mxu0 %v602
      %v641 = vpop.f32.mrf.mxu0
      %v642 = vadd.f32 0.0, %v641
      %v643 = vpop.f32.mrf.mxu0
      %v644 = vpop.f32.mrf.mxu0
      %v645 = vpop.f32.mrf.mxu0
      %646 = vdwg.mxu0
      %v647 = vmul.f32 %v642, 0.25
      %v648 = vadd.f32 %v647, %v530
      %v649 = vsel %vm532, %v648, -inf
      %650 = vmax.xlane.f32.xlu0 %v649
      %v651 = vpop.xlane.xlu0 %650
      %v652 = vsub.f32 %v648, %v651
      %v653 = vmul.f32 %v652, 1.442695
      %v654 = vpow.pop %v653
      %v655 = vsel %vm532, %v654, 0.0
      %656 = vadd.xlane.f32.xlu0 %v655
      %v657 = vpop.xlane.xlu0 %656
      %v658 = vrcp.pop %v657
      %v659 = vmul.f32 %v654, %v658
      %v660 = vpack.c.bf16 %v659, %v659
      %661 = vrot.lane.b32.xlu0 %v475, 48
      %v662 = vpop.permute.xlu0 %661
      %v664 = vsel %vm532, %v660, 0
      %v667 = vsel %vm550, %v662, 0
      %669 = vmatprep.subr.bf16.mxu0 0
      %670 = vmatpush1.bf16.msra.mxu0 0
      %671 = vmatprep.subr.bf16.mxu0 0
      %672 = vmatpush1.bf16.msra.mxu0 0
      %673 = vmatprep.subr.bf16.mxu0 0
      %674 = vmatpush1.bf16.msra.mxu0 0
      %675 = vmatprep.subr.bf16.mxu0 0
      %676 = vmatpush1.bf16.msra.mxu0 0
      %677 = vmatprep.subr.bf16.mxu0 0
      %678 = vmatpush1.bf16.msra.mxu0 0
      %679 = vmatprep.subr.bf16.mxu0 0
      %680 = vmatpush1.bf16.msra.mxu0 0
      %681 = vmatprep.subr.bf16.mxu0 0
      %682 = vmatpush1.bf16.msra.mxu0 0
      %683 = vmatprep.subr.bf16.mxu0 0
      %684 = vmatpush1.bf16.msra.mxu0 %v667
      %685 = vmatprep.subr.bf16.mxu0 0
      %686 = vmatpush2.bf16.msra.mxu0 0
      %687 = vmatprep.subr.bf16.mxu0 0
      %688 = vmatpush2.bf16.msra.mxu0 0
      %689 = vmatprep.subr.bf16.mxu0 0
      %690 = vmatpush2.bf16.msra.mxu0 0
      %691 = vmatprep.subr.bf16.mxu0 0
      %692 = vmatpush2.bf16.msra.mxu0 0
      %693 = vmatprep.subr.bf16.mxu0 0
      %694 = vmatpush2.bf16.msra.mxu0 0
      %695 = vmatprep.subr.bf16.mxu0 0
      %696 = vmatpush2.bf16.msra.mxu0 0
      %697 = vmatprep.subr.bf16.mxu0 0
      %698 = vmatpush2.bf16.msra.mxu0 0
      %699 = vmatprep.subr.bf16.mxu0 0
      %700 = vmatpush2.bf16.msra.mxu0 0
      %701 = vmatprep.mubr.bf16.mxu0 0
      %702 = vmatmul.mubr.bf16.gmra.mxu0 %v664
      %v703 = vpop.f32.mrf.mxu0
      %v704 = vadd.f32 0.0, %v703
      %v705 = vpop.f32.mrf.mxu0
      %v706 = vpop.f32.mrf.mxu0
      %v707 = vpop.f32.mrf.mxu0
      %708 = vdwg.mxu0
      %v709 = vpack.c.bf16 %v704, %v704
      %v710 = vld [vmem:[%s380 + $0x8] sm:$0xf]
      %v711 = vld [vmem:[%s380 + $0xc] sm:$0xf]
      %v714 = vunpack.c.l.b16 %v710
      %v715 = vunpack.c.l.b16 %v711
      %v716 = vpack.c.b16 %v715, %v714
      %v719 = vsel %vm479, %v709, 0
      %721 = vmatprep.subr.bf16.mxu0 0
      %722 = vmatpush1.bf16.msra.mxu0 0
      %723 = vmatprep.subr.bf16.mxu0 0
      %724 = vmatpush1.bf16.msra.mxu0 0
      %725 = vmatprep.subr.bf16.mxu0 0
      %726 = vmatpush1.bf16.msra.mxu0 0
      %727 = vmatprep.subr.bf16.mxu0 0
      %728 = vmatpush1.bf16.msra.mxu0 0
      %729 = vmatprep.subr.bf16.mxu0 0
      %730 = vmatpush1.bf16.msra.mxu0 0
      %731 = vmatprep.subr.bf16.mxu0 0
      %732 = vmatpush1.bf16.msra.mxu0 0
      %733 = vmatprep.subr.bf16.mxu0 0
      %734 = vmatpush1.bf16.msra.mxu0 0
      %735 = vmatprep.subr.bf16.mxu0 0
      %736 = vmatpush1.bf16.msra.mxu0 %v716
      %737 = vmatprep.subr.bf16.mxu0 0
      %738 = vmatpush2.bf16.msra.mxu0 0
      %739 = vmatprep.subr.bf16.mxu0 0
      %740 = vmatpush2.bf16.msra.mxu0 0
      %741 = vmatprep.subr.bf16.mxu0 0
      %742 = vmatpush2.bf16.msra.mxu0 0
      %743 = vmatprep.subr.bf16.mxu0 0
      %744 = vmatpush2.bf16.msra.mxu0 0
      %745 = vmatprep.subr.bf16.mxu0 0
      %746 = vmatpush2.bf16.msra.mxu0 0
      %747 = vmatprep.subr.bf16.mxu0 0
      %748 = vmatpush2.bf16.msra.mxu0 0
      %749 = vmatprep.subr.bf16.mxu0 0
      %750 = vmatpush2.bf16.msra.mxu0 0
      %751 = vmatprep.subr.bf16.mxu0 0
      %752 = vmatpush2.bf16.msra.mxu0 0
      %753 = vmatprep.mubr.bf16.mxu0 0
      %754 = vmatmul.mubr.bf16.gmra.mxu0 %v719
      %v755 = vpop.f32.mrf.mxu0
      %v756 = vadd.f32 0.0, %v755
      %v757 = vpop.f32.mrf.mxu0
      %v758 = vpop.f32.mrf.mxu0
      %v759 = vpop.f32.mrf.mxu0
      %760 = vdwg.mxu0
      %v763 = vunpack.c.l.b16 %v595
      %v764 = vunpack.c.l.b16 %v596
      %v765 = vpack.c.b16 %v764, %v763
      %v768 = vsel %vm479, %v594, 0
      %770 = vmatprep.subr.bf16.mxu0 0
      %771 = vmatpush1.bf16.msra.mxu0 0
      %772 = vmatprep.subr.bf16.mxu0 0
      %773 = vmatpush1.bf16.msra.mxu0 0
      %774 = vmatprep.subr.bf16.mxu0 0
      %775 = vmatpush1.bf16.msra.mxu0 0
      %776 = vmatprep.subr.bf16.mxu0 0
      %777 = vmatpush1.bf16.msra.mxu0 0
      %778 = vmatprep.subr.bf16.mxu0 0
      %779 = vmatpush1.bf16.msra.mxu0 0
      %780 = vmatprep.subr.bf16.mxu0 0
      %781 = vmatpush1.bf16.msra.mxu0 0
      %782 = vmatprep.subr.bf16.mxu0 0
      %783 = vmatpush1.bf16.msra.mxu0 0
      %784 = vmatprep.subr.bf16.mxu0 0
      %785 = vmatpush1.bf16.msra.mxu0 %v765
      %786 = vmatprep.subr.bf16.mxu0 0
      %787 = vmatpush2.bf16.msra.mxu0 0
      %788 = vmatprep.subr.bf16.mxu0 0
      %789 = vmatpush2.bf16.msra.mxu0 0
      %790 = vmatprep.subr.bf16.mxu0 0
      %791 = vmatpush2.bf16.msra.mxu0 0
      %792 = vmatprep.subr.bf16.mxu0 0
      %793 = vmatpush2.bf16.msra.mxu0 0
      %794 = vmatprep.subr.bf16.mxu0 0
      %795 = vmatpush2.bf16.msra.mxu0 0
      %796 = vmatprep.subr.bf16.mxu0 0
      %797 = vmatpush2.bf16.msra.mxu0 0
      %798 = vmatprep.subr.bf16.mxu0 0
      %799 = vmatpush2.bf16.msra.mxu0 0
      %800 = vmatprep.subr.bf16.mxu0 0
      %801 = vmatpush2.bf16.msra.mxu0 0
      %802 = vmatprep.mubr.bf16.mxu0 0
      %803 = vmatmul.mubr.bf16.gmra.mxu0 %v768
      %v804 = vpop.f32.mrf.mxu0
      %v805 = vadd.f32 %v756, %v804
      %v806 = vpop.f32.mrf.mxu0
      %v807 = vpop.f32.mrf.mxu0
      %v808 = vpop.f32.mrf.mxu0
      %809 = vdwg.mxu0
      %810 = vst.msk [vmem:[#allocation3] sm:$0xff] %vm429, %v805
      %v811 = vld [vmem:[%s1 + $0x1] sm:$0x1]
      %v812 = vpack.c.bf16 %v471, %v471
      %814 = vrot.lane.b32.xlu0 %v812, 96
      %v815 = vpop.permute.xlu0 %814
      %v817 = vsel %vm479, %v812, 0
      %v820 = vsel %vm479, %v815, 0
      %822 = vmatprep.subr.bf16.mxu0 0
      %823 = vmatpush1.bf16.xpose.msra.mxu0 0
      %824 = vmatprep.subr.bf16.mxu0 0
      %825 = vmatpush1.bf16.xpose.msra.mxu0 0
      %826 = vmatprep.subr.bf16.mxu0 0
      %827 = vmatpush1.bf16.xpose.msra.mxu0 0
      %828 = vmatprep.subr.bf16.mxu0 0
      %829 = vmatpush1.bf16.xpose.msra.mxu0 0
      %830 = vmatprep.subr.bf16.mxu0 0
      %831 = vmatpush1.bf16.xpose.msra.mxu0 0
      %832 = vmatprep.subr.bf16.mxu0 0
      %833 = vmatpush1.bf16.xpose.msra.mxu0 0
      %834 = vmatprep.subr.bf16.mxu0 0
      %835 = vmatpush1.bf16.xpose.msra.mxu0 0
      %836 = vmatprep.subr.bf16.mxu0 0
      %837 = vmatpush1.bf16.xpose.msra.mxu0 %v820
      %838 = vmatprep.subr.bf16.mxu0 0
      %839 = vmatpush2.bf16.xpose.msra.mxu0 0
      %840 = vmatprep.subr.bf16.mxu0 0
      %841 = vmatpush2.bf16.xpose.msra.mxu0 0
      %842 = vmatprep.subr.bf16.mxu0 0
      %843 = vmatpush2.bf16.xpose.msra.mxu0 0
      %844 = vmatprep.subr.bf16.mxu0 0
      %845 = vmatpush2.bf16.xpose.msra.mxu0 0
      %846 = vmatprep.subr.bf16.mxu0 0
      %847 = vmatpush2.bf16.xpose.msra.mxu0 0
      %848 = vmatprep.subr.bf16.mxu0 0
      %849 = vmatpush2.bf16.xpose.msra.mxu0 0
      %850 = vmatprep.subr.bf16.mxu0 0
      %851 = vmatpush2.bf16.xpose.msra.mxu0 0
      %852 = vmatprep.subr.bf16.mxu0 0
      %853 = vmatpush2.bf16.xpose.msra.mxu0 0
      %854 = vmatprep.mubr.bf16.mxu0 0
      %855 = vmatmul.mubr.bf16.gmra.mxu0 %v817
      %v856 = vpop.f32.mrf.mxu0
      %v857 = vadd.f32 0.0, %v856
      %v858 = vpop.f32.mrf.mxu0
      %v859 = vpop.f32.mrf.mxu0
      %v860 = vpop.f32.mrf.mxu0
      %861 = vdwg.mxu0
      %v862 = vmul.f32 %v857, 0.25
      %v863 = vlaneseq
      %v864 = vshrl.u32 %v863, 7
      %v865 = vsub.s32 0, %v864
      %v866 = vrot.slane %v811, %v865
      %v867 = vadd.f32 %v862, %v866
      %v868 = vsel %vm532, %v867, -inf
      %869 = vmax.xlane.f32.xlu0 %v868
      %v870 = vpop.xlane.xlu0 %869
      %v871 = vsub.f32 %v867, %v870
      %v872 = vmul.f32 %v871, 1.442695
      %v873 = vpow.pop %v872
      %v874 = vsel %vm532, %v873, 0.0
      %875 = vadd.xlane.f32.xlu0 %v874
      %v876 = vpop.xlane.xlu0 %875
      %v877 = vrcp.pop %v876
      %v878 = vmul.f32 %v873, %v877
      %v879 = vpack.c.bf16 %v878, %v878
      %880 = vrot.lane.b32.xlu0 %v812, 64
      %v881 = vpop.permute.xlu0 %880
      %v883 = vsel %vm532, %v879, 0
      %v886 = vsel %vm550, %v881, 0
      %888 = vmatprep.subr.bf16.mxu0 0
      %889 = vmatpush1.bf16.msra.mxu0 0
      %890 = vmatprep.subr.bf16.mxu0 0
      %891 = vmatpush1.bf16.msra.mxu0 0
      %892 = vmatprep.subr.bf16.mxu0 0
      %893 = vmatpush1.bf16.msra.mxu0 0
      %894 = vmatprep.subr.bf16.mxu0 0
      %895 = vmatpush1.bf16.msra.mxu0 0
      %896 = vmatprep.subr.bf16.mxu0 0
      %897 = vmatpush1.bf16.msra.mxu0 0
      %898 = vmatprep.subr.bf16.mxu0 0
      %899 = vmatpush1.bf16.msra.mxu0 0
      %900 = vmatprep.subr.bf16.mxu0 0
      %901 = vmatpush1.bf16.msra.mxu0 0
      %902 = vmatprep.subr.bf16.mxu0 0
      %903 = vmatpush1.bf16.msra.mxu0 %v886
      %904 = vmatprep.subr.bf16.mxu0 0
      %905 = vmatpush2.bf16.msra.mxu0 0
      %906 = vmatprep.subr.bf16.mxu0 0
      %907 = vmatpush2.bf16.msra.mxu0 0
      %908 = vmatprep.subr.bf16.mxu0 0
      %909 = vmatpush2.bf16.msra.mxu0 0
      %910 = vmatprep.subr.bf16.mxu0 0
      %911 = vmatpush2.bf16.msra.mxu0 0
      %912 = vmatprep.subr.bf16.mxu0 0
      %913 = vmatpush2.bf16.msra.mxu0 0
      %914 = vmatprep.subr.bf16.mxu0 0
      %915 = vmatpush2.bf16.msra.mxu0 0
      %916 = vmatprep.subr.bf16.mxu0 0
      %917 = vmatpush2.bf16.msra.mxu0 0
      %918 = vmatprep.subr.bf16.mxu0 0
      %919 = vmatpush2.bf16.msra.mxu0 0
      %920 = vmatprep.mubr.bf16.mxu0 0
      %921 = vmatmul.mubr.bf16.gmra.mxu0 %v883
      %v922 = vpop.f32.mrf.mxu0
      %v923 = vadd.f32 0.0, %v922
      %v924 = vpop.f32.mrf.mxu0
      %v925 = vpop.f32.mrf.mxu0
      %v926 = vpop.f32.mrf.mxu0
      %927 = vdwg.mxu0
      %v928 = vpack.c.bf16 %v923, %v923
      %v929 = vld [vmem:[%s380] sm:$0xf]
      %v930 = vld [vmem:[%s380 + $0x4] sm:$0xf]
      %931 = vrot.lane.b32.xlu0 %v812, 112
      %v932 = vpop.permute.xlu0 %931
      %933 = vrot.lane.b32.xlu0 %v812, 80
      %v934 = vpop.permute.xlu0 %933
      %v936 = vsel %vm479, %v932, 0
      %v939 = vsel %vm479, %v934, 0
      %941 = vmatprep.subr.bf16.mxu0 0
      %942 = vmatpush1.bf16.xpose.msra.mxu0 0
      %943 = vmatprep.subr.bf16.mxu0 0
      %944 = vmatpush1.bf16.xpose.msra.mxu0 0
      %945 = vmatprep.subr.bf16.mxu0 0
      %946 = vmatpush1.bf16.xpose.msra.mxu0 0
      %947 = vmatprep.subr.bf16.mxu0 0
      %948 = vmatpush1.bf16.xpose.msra.mxu0 0
      %949 = vmatprep.subr.bf16.mxu0 0
      %950 = vmatpush1.bf16.xpose.msra.mxu0 0
      %951 = vmatprep.subr.bf16.mxu0 0
      %952 = vmatpush1.bf16.xpose.msra.mxu0 0
      %953 = vmatprep.subr.bf16.mxu0 0
      %954 = vmatpush1.bf16.xpose.msra.mxu0 0
      %955 = vmatprep.subr.bf16.mxu0 0
      %956 = vmatpush1.bf16.xpose.msra.mxu0 %v939
      %957 = vmatprep.subr.bf16.mxu0 0
      %958 = vmatpush2.bf16.xpose.msra.mxu0 0
      %959 = vmatprep.subr.bf16.mxu0 0
      %960 = vmatpush2.bf16.xpose.msra.mxu0 0
      %961 = vmatprep.subr.bf16.mxu0 0
      %962 = vmatpush2.bf16.xpose.msra.mxu0 0
      %963 = vmatprep.subr.bf16.mxu0 0
      %964 = vmatpush2.bf16.xpose.msra.mxu0 0
      %965 = vmatprep.subr.bf16.mxu0 0
      %966 = vmatpush2.bf16.xpose.msra.mxu0 0
      %967 = vmatprep.subr.bf16.mxu0 0
      %968 = vmatpush2.bf16.xpose.msra.mxu0 0
      %969 = vmatprep.subr.bf16.mxu0 0
      %970 = vmatpush2.bf16.xpose.msra.mxu0 0
      %971 = vmatprep.subr.bf16.mxu0 0
      %972 = vmatpush2.bf16.xpose.msra.mxu0 0
      %973 = vmatprep.mubr.bf16.mxu0 0
      %974 = vmatmul.mubr.bf16.gmra.mxu0 %v936
      %v975 = vpop.f32.mrf.mxu0
      %v976 = vadd.f32 0.0, %v975
      %v977 = vpop.f32.mrf.mxu0
      %v978 = vpop.f32.mrf.mxu0
      %v979 = vpop.f32.mrf.mxu0
      %980 = vdwg.mxu0
      %v981 = vmul.f32 %v976, 0.25
      %v982 = vadd.f32 %v981, %v866
      %v983 = vsel %vm532, %v982, -inf
      %984 = vmax.xlane.f32.xlu0 %v983
      %v985 = vpop.xlane.xlu0 %984
      %v986 = vsub.f32 %v982, %v985
      %v987 = vmul.f32 %v986, 1.442695
      %v988 = vpow.pop %v987
      %v989 = vsel %vm532, %v988, 0.0
      %990 = vadd.xlane.f32.xlu0 %v989
      %v991 = vpop.xlane.xlu0 %990
      %v992 = vrcp.pop %v991
      %v993 = vmul.f32 %v988, %v992
      %v994 = vpack.c.bf16 %v993, %v993
      %995 = vrot.lane.b32.xlu0 %v812, 48
      %v996 = vpop.permute.xlu0 %995
      %v998 = vsel %vm532, %v994, 0
      %v1001 = vsel %vm550, %v996, 0
      %1003 = vmatprep.subr.bf16.mxu0 0
      %1004 = vmatpush1.bf16.msra.mxu0 0
      %1005 = vmatprep.subr.bf16.mxu0 0
      %1006 = vmatpush1.bf16.msra.mxu0 0
      %1007 = vmatprep.subr.bf16.mxu0 0
      %1008 = vmatpush1.bf16.msra.mxu0 0
      %1009 = vmatprep.subr.bf16.mxu0 0
      %1010 = vmatpush1.bf16.msra.mxu0 0
      %1011 = vmatprep.subr.bf16.mxu0 0
      %1012 = vmatpush1.bf16.msra.mxu0 0
      %1013 = vmatprep.subr.bf16.mxu0 0
      %1014 = vmatpush1.bf16.msra.mxu0 0
      %1015 = vmatprep.subr.bf16.mxu0 0
      %1016 = vmatpush1.bf16.msra.mxu0 0
      %1017 = vmatprep.subr.bf16.mxu0 0
      %1018 = vmatpush1.bf16.msra.mxu0 %v1001
      %1019 = vmatprep.subr.bf16.mxu0 0
      %1020 = vmatpush2.bf16.msra.mxu0 0
      %1021 = vmatprep.subr.bf16.mxu0 0
      %1022 = vmatpush2.bf16.msra.mxu0 0
      %1023 = vmatprep.subr.bf16.mxu0 0
      %1024 = vmatpush2.bf16.msra.mxu0 0
      %1025 = vmatprep.subr.bf16.mxu0 0
      %1026 = vmatpush2.bf16.msra.mxu0 0
      %1027 = vmatprep.subr.bf16.mxu0 0
      %1028 = vmatpush2.bf16.msra.mxu0 0
      %1029 = vmatprep.subr.bf16.mxu0 0
      %1030 = vmatpush2.bf16.msra.mxu0 0
      %1031 = vmatprep.subr.bf16.mxu0 0
      %1032 = vmatpush2.bf16.msra.mxu0 0
      %1033 = vmatprep.subr.bf16.mxu0 0
      %1034 = vmatpush2.bf16.msra.mxu0 0
      %1035 = vmatprep.mubr.bf16.mxu0 0
      %1036 = vmatmul.mubr.bf16.gmra.mxu0 %v998
      %v1037 = vpop.f32.mrf.mxu0
      %v1038 = vadd.f32 0.0, %v1037
      %v1039 = vpop.f32.mrf.mxu0
      %v1040 = vpop.f32.mrf.mxu0
      %v1041 = vpop.f32.mrf.mxu0
      %1042 = vdwg.mxu0
      %v1043 = vpack.c.bf16 %v1038, %v1038
      %v1044 = vld [vmem:[%s380 + $0x8] sm:$0xf]
      %v1045 = vld [vmem:[%s380 + $0xc] sm:$0xf]
      %v1048 = vunpack.c.l.b16 %v1044
      %v1049 = vunpack.c.l.b16 %v1045
      %v1050 = vpack.c.b16 %v1049, %v1048
      %v1053 = vsel %vm479, %v1043, 0
      %1055 = vmatprep.subr.bf16.mxu0 0
      %1056 = vmatpush1.bf16.msra.mxu0 0
      %1057 = vmatprep.subr.bf16.mxu0 0
      %1058 = vmatpush1.bf16.msra.mxu0 0
      %1059 = vmatprep.subr.bf16.mxu0 0
      %1060 = vmatpush1.bf16.msra.mxu0 0
      %1061 = vmatprep.subr.bf16.mxu0 0
      %1062 = vmatpush1.bf16.msra.mxu0 0
      %1063 = vmatprep.subr.bf16.mxu0 0
      %1064 = vmatpush1.bf16.msra.mxu0 0
      %1065 = vmatprep.subr.bf16.mxu0 0
      %1066 = vmatpush1.bf16.msra.mxu0 0
      %1067 = vmatprep.subr.bf16.mxu0 0
      %1068 = vmatpush1.bf16.msra.mxu0 0
      %1069 = vmatprep.subr.bf16.mxu0 0
      %1070 = vmatpush1.bf16.msra.mxu0 %v1050
      %1071 = vmatprep.subr.bf16.mxu0 0
      %1072 = vmatpush2.bf16.msra.mxu0 0
      %1073 = vmatprep.subr.bf16.mxu0 0
      %1074 = vmatpush2.bf16.msra.mxu0 0
      %1075 = vmatprep.subr.bf16.mxu0 0
      %1076 = vmatpush2.bf16.msra.mxu0 0
      %1077 = vmatprep.subr.bf16.mxu0 0
      %1078 = vmatpush2.bf16.msra.mxu0 0
      %1079 = vmatprep.subr.bf16.mxu0 0
      %1080 = vmatpush2.bf16.msra.mxu0 0
      %1081 = vmatprep.subr.bf16.mxu0 0
      %1082 = vmatpush2.bf16.msra.mxu0 0
      %1083 = vmatprep.subr.bf16.mxu0 0
      %1084 = vmatpush2.bf16.msra.mxu0 0
      %1085 = vmatprep.subr.bf16.mxu0 0
      %1086 = vmatpush2.bf16.msra.mxu0 0
      %1087 = vmatprep.mubr.bf16.mxu0 0
      %1088 = vmatmul.mubr.bf16.gmra.mxu0 %v1053
      %v1089 = vpop.f32.mrf.mxu0
      %v1090 = vadd.f32 0.0, %v1089
      %v1091 = vpop.f32.mrf.mxu0
      %v1092 = vpop.f32.mrf.mxu0
      %v1093 = vpop.f32.mrf.mxu0
      %1094 = vdwg.mxu0
      %v1097 = vunpack.c.l.b16 %v929
      %v1098 = vunpack.c.l.b16 %v930
      %v1099 = vpack.c.b16 %v1098, %v1097
      %v1102 = vsel %vm479, %v928, 0
      %1104 = vmatprep.subr.bf16.mxu0 0
      %1105 = vmatpush1.bf16.msra.mxu0 0
      %1106 = vmatprep.subr.bf16.mxu0 0
      %1107 = vmatpush1.bf16.msra.mxu0 0
      %1108 = vmatprep.subr.bf16.mxu0 0
      %1109 = vmatpush1.bf16.msra.mxu0 0
      %1110 = vmatprep.subr.bf16.mxu0 0
      %1111 = vmatpush1.bf16.msra.mxu0 0
      %1112 = vmatprep.subr.bf16.mxu0 0
      %1113 = vmatpush1.bf16.msra.mxu0 0
      %1114 = vmatprep.subr.bf16.mxu0 0
      %1115 = vmatpush1.bf16.msra.mxu0 0
      %1116 = vmatprep.subr.bf16.mxu0 0
      %1117 = vmatpush1.bf16.msra.mxu0 0
      %1118 = vmatprep.subr.bf16.mxu0 0
      %1119 = vmatpush1.bf16.msra.mxu0 %v1099
      %1120 = vmatprep.subr.bf16.mxu0 0
      %1121 = vmatpush2.bf16.msra.mxu0 0
      %1122 = vmatprep.subr.bf16.mxu0 0
      %1123 = vmatpush2.bf16.msra.mxu0 0
      %1124 = vmatprep.subr.bf16.mxu0 0
      %1125 = vmatpush2.bf16.msra.mxu0 0
      %1126 = vmatprep.subr.bf16.mxu0 0
      %1127 = vmatpush2.bf16.msra.mxu0 0
      %1128 = vmatprep.subr.bf16.mxu0 0
      %1129 = vmatpush2.bf16.msra.mxu0 0
      %1130 = vmatprep.subr.bf16.mxu0 0
      %1131 = vmatpush2.bf16.msra.mxu0 0
      %1132 = vmatprep.subr.bf16.mxu0 0
      %1133 = vmatpush2.bf16.msra.mxu0 0
      %1134 = vmatprep.subr.bf16.mxu0 0
      %1135 = vmatpush2.bf16.msra.mxu0 0
      %1136 = vmatprep.mubr.bf16.mxu0 0
      %1137 = vmatmul.mubr.bf16.gmra.mxu0 %v1102
      %v1138 = vpop.f32.mrf.mxu0
      %v1139 = vadd.f32 %v1090, %v1138
      %v1140 = vpop.f32.mrf.mxu0
      %v1141 = vpop.f32.mrf.mxu0
      %v1142 = vpop.f32.mrf.mxu0
      %1143 = vdwg.mxu0
      %1144 = vst.msk [vmem:[#allocation3 + $0x8] sm:$0xff] %vm429, %v1139
      %v1145 = vld [vmem:[#allocation3] sm:$0xff]
      %v1146 = vld [vmem:[#allocation3 + $0x8] sm:$0xff]
      %v1147 = vlaneseq
      %v1148 = vshrl.u32 %v1147, 7
      %v1149 = vsub.s32 1, %v1148
      %v1150 = vrot.slane %v408, %v1149
      %v1151 = vadd.f32 %v1145, %v1150
      %v1152 = vadd.f32 %v1146, %v1150
      %v1153 = vadd.f32 %v1151, %v405
      %v1154 = vadd.f32 %v1152, %v406
      %v1155 = vsel %vm429, %v1153, 0.0
      %1156 = vadd.xlane.f32.xlu0 %v1155
      %v1157 = vpop.xlane.xlu0 %1156
      %v1158 = vsel %vm429, %v1154, 0.0
      %1159 = vadd.xlane.f32.xlu0 %v1158
      %v1160 = vpop.xlane.xlu0 %1159
      %v1161 = vrcp.pop 32.0
      %v1162 = vmul.f32 %v1157, %v1161
      %v1163 = vmul.f32 %v1160, %v1161
      %v1164 = vsub.f32 %v1153, %v1162
      %v1165 = vsub.f32 %v1154, %v1163
      %v1166 = vmul.f32 %v1164, %v1164
      %v1167 = vmul.f32 %v1165, %v1165
      %v1168 = vsel %vm429, %v1166, 0.0
      %1169 = vadd.xlane.f32.xlu0 %v1168
      %v1170 = vpop.xlane.xlu0 %1169
      %v1171 = vsel %vm429, %v1167, 0.0
      %1172 = vadd.xlane.f32.xlu0 %v1171
      %v1173 = vpop.xlane.xlu0 %1172
      %v1174 = vmul.f32 %v1170, %v1161
      %v1175 = vmul.f32 %v1173, %v1161
      %v1176 = vadd.f32 %v1174, 1e-12
      %v1177 = vadd.f32 %v1175, 1e-12
      %v1178 = vrsqrt.pop %v1176
      %v1179 = vrsqrt.pop %v1177
      %v1180 = vmul.f32 %v1164, %v1178
      %v1181 = vmul.f32 %v1165, %v1179
      %v1182 = vlaneseq
      %v1183 = vshrl.u32 %v1182, 7
      %v1184 = vsub.s32 4, %v1183
      %v1185 = vrot.slane %v408, %v1184
      %v1186 = vmul.f32 %v1180, %v1185
      %v1187 = vmul.f32 %v1181, %v1185
      %v1188 = vlaneseq
      %v1189 = vshrl.u32 %v1188, 7
      %v1190 = vsub.s32 5, %v1189
      %v1191 = vrot.slane %v408, %v1190
      %v1192 = vadd.f32 %v1186, %v1191
      %v1193 = vadd.f32 %v1187, %v1191
      %v1194 = vpack.c.bf16 %v1193, %v1192
      %v1195 = vld [vmem:[%s385] sm:$0xf]
      %v1196 = vld [vmem:[%s385 + $0x4] sm:$0xf]
      %v1197 = vld [vmem:[%s385 + $0x8] sm:$0xf]
      %v1198 = vld [vmem:[%s385 + $0xc] sm:$0xf]
      %v1199 = vlaneseq
      %v1200 = vshrl.u32 %v1199, 7
      %v1201 = vsub.s32 2, %v1200
      %v1202 = vrot.slane %v408, %v1201
      %v1207 = vunpack.c.l.b16 %v1195
      %v1208 = vunpack.c.l.b16 %v1196
      %v1209 = vunpack.c.l.b16 %v1197
      %v1210 = vunpack.c.l.b16 %v1198
      %v1211 = vpack.c.b16 %v1208, %v1207
      %v1212 = vpack.c.b16 %v1210, %v1209
      %v1216 = vsel %vm429, %v1194, 0
      %1218 = vmatprep.subr.bf16.mxu0 0
      %1219 = vmatpush1.bf16.msra.mxu0 0
      %1220 = vmatprep.subr.bf16.mxu0 0
      %1221 = vmatpush1.bf16.msra.mxu0 0
      %1222 = vmatprep.subr.bf16.mxu0 0
      %1223 = vmatpush1.bf16.msra.mxu0 0
      %1224 = vmatprep.subr.bf16.mxu0 0
      %1225 = vmatpush1.bf16.msra.mxu0 0
      %1226 = vmatprep.subr.bf16.mxu0 0
      %1227 = vmatpush1.bf16.msra.mxu0 0
      %1228 = vmatprep.subr.bf16.mxu0 0
      %1229 = vmatpush1.bf16.msra.mxu0 0
      %1230 = vmatprep.subr.bf16.mxu0 0
      %1231 = vmatpush1.bf16.msra.mxu0 %v1212
      %1232 = vmatprep.subr.bf16.mxu0 0
      %1233 = vmatpush1.bf16.msra.mxu0 %v1211
      %1234 = vmatprep.subr.bf16.mxu0 0
      %1235 = vmatpush2.bf16.msra.mxu0 0
      %1236 = vmatprep.subr.bf16.mxu0 0
      %1237 = vmatpush2.bf16.msra.mxu0 0
      %1238 = vmatprep.subr.bf16.mxu0 0
      %1239 = vmatpush2.bf16.msra.mxu0 0
      %1240 = vmatprep.subr.bf16.mxu0 0
      %1241 = vmatpush2.bf16.msra.mxu0 0
      %1242 = vmatprep.subr.bf16.mxu0 0
      %1243 = vmatpush2.bf16.msra.mxu0 0
      %1244 = vmatprep.subr.bf16.mxu0 0
      %1245 = vmatpush2.bf16.msra.mxu0 0
      %1246 = vmatprep.subr.bf16.mxu0 0
      %1247 = vmatpush2.bf16.msra.mxu0 0
      %1248 = vmatprep.subr.bf16.mxu0 0
      %1249 = vmatpush2.bf16.msra.mxu0 0
      %1250 = vmatprep.mubr.bf16.mxu0 0
      %1251 = vmatmul.mubr.bf16.gmra.mxu0 %v1216
      %v1252 = vpop.f32.mrf.mxu0
      %v1253 = vadd.f32 %v1202, %v1252
      %v1254 = vpop.f32.mrf.mxu0
      %v1255 = vpop.f32.mrf.mxu0
      %v1256 = vadd.f32 %v1202, %v1255
      %v1257 = vpop.f32.mrf.mxu0
      %1258 = vdwg.mxu0
      %v1259 = vmul.f32 %v1253, 0.5
      %v1260 = vmul.f32 %v1256, 0.5
      %v1261 = vmul.f32 %v1253, 0.044715
      %v1262 = vmul.f32 %v1256, 0.044715
      %v1263 = vmul.f32 %v1261, %v1253
      %v1264 = vmul.f32 %v1262, %v1256
      %v1265 = vmul.f32 %v1263, %v1253
      %v1266 = vmul.f32 %v1264, %v1256
      %v1267 = vadd.f32 %v1253, %v1265
      %v1268 = vadd.f32 %v1256, %v1266
      %v1269 = vmul.f32 %v1267, 0.7978846
      %v1270 = vmul.f32 %v1268, 0.7978846
      %v1271 = vtanh.pop %v1269
      %v1272 = vtanh.pop %v1270
      %v1273 = vadd.f32 %v1271, 1.0
      %v1274 = vadd.f32 %v1272, 1.0
      %v1275 = vmul.f32 %v1259, %v1273
      %v1276 = vmul.f32 %v1260, %v1274
      %v1277 = vpack.c.bf16 %v1276, %v1275
      %v1278 = vld [vmem:[%s390] sm:$0xf]
      %v1279 = vld [vmem:[%s390 + $0x4] sm:$0xf]
      %v1280 = vld [vmem:[%s390 + $0x8] sm:$0xf]
      %v1281 = vld [vmem:[%s390 + $0xc] sm:$0xf]
      %v1282 = vld [vmem:[%s390 + $0x10] sm:$0xf]
      %v1283 = vld [vmem:[%s390 + $0x14] sm:$0xf]
      %v1284 = vld [vmem:[%s390 + $0x18] sm:$0xf]
      %v1285 = vld [vmem:[%s390 + $0x1c] sm:$0xf]
      %v1286 = vlaneseq
      %v1287 = vshrl.u32 %v1286, 7
      %v1288 = vsub.s32 3, %v1287
      %v1289 = vrot.slane %v408, %v1288
      %v1298 = vunpack.c.l.b16 %v1278
      %v1299 = vunpack.c.l.b16 %v1279
      %v1300 = vunpack.c.l.b16 %v1280
      %v1301 = vunpack.c.l.b16 %v1281
      %v1302 = vunpack.c.l.b16 %v1282
      %v1303 = vunpack.c.l.b16 %v1283
      %v1304 = vunpack.c.l.b16 %v1284
      %v1305 = vunpack.c.l.b16 %v1285
      %v1306 = vpack.c.b16 %v1299, %v1298
      %v1307 = vpack.c.b16 %v1301, %v1300
      %v1308 = vpack.c.b16 %v1303, %v1302
      %v1309 = vpack.c.b16 %v1305, %v1304
      %vm1314 = vcmask 523264
      %v1316 = vsel %vm1314, %v1277, 0
      %1318 = vmatprep.subr.bf16.mxu0 0
      %1319 = vmatpush1.bf16.msra.mxu0 0
      %1320 = vmatprep.subr.bf16.mxu0 0
      %1321 = vmatpush1.bf16.msra.mxu0 0
      %1322 = vmatprep.subr.bf16.mxu0 0
      %1323 = vmatpush1.bf16.msra.mxu0 0
      %1324 = vmatprep.subr.bf16.mxu0 0
      %1325 = vmatpush1.bf16.msra.mxu0 0
      %1326 = vmatprep.subr.bf16.mxu0 0
      %1327 = vmatpush1.bf16.msra.mxu0 %v1309
      %1328 = vmatprep.subr.bf16.mxu0 0
      %1329 = vmatpush1.bf16.msra.mxu0 %v1308
      %1330 = vmatprep.subr.bf16.mxu0 0
      %1331 = vmatpush1.bf16.msra.mxu0 %v1307
      %1332 = vmatprep.subr.bf16.mxu0 0
      %1333 = vmatpush1.bf16.msra.mxu0 %v1306
      %1334 = vmatprep.subr.bf16.mxu0 0
      %1335 = vmatpush2.bf16.msra.mxu0 0
      %1336 = vmatprep.subr.bf16.mxu0 0
      %1337 = vmatpush2.bf16.msra.mxu0 0
      %1338 = vmatprep.subr.bf16.mxu0 0
      %1339 = vmatpush2.bf16.msra.mxu0 0
      %1340 = vmatprep.subr.bf16.mxu0 0
      %1341 = vmatpush2.bf16.msra.mxu0 0
      %1342 = vmatprep.subr.bf16.mxu0 0
      %1343 = vmatpush2.bf16.msra.mxu0 0
      %1344 = vmatprep.subr.bf16.mxu0 0
      %1345 = vmatpush2.bf16.msra.mxu0 0
      %1346 = vmatprep.subr.bf16.mxu0 0
      %1347 = vmatpush2.bf16.msra.mxu0 0
      %1348 = vmatprep.subr.bf16.mxu0 0
      %1349 = vmatpush2.bf16.msra.mxu0 0
      %1350 = vmatprep.mubr.bf16.mxu0 0
      %1351 = vmatmul.mubr.bf16.gmra.mxu0 %v1316
      %v1352 = vpop.f32.mrf.mxu0
      %v1353 = vadd.f32 %v1289, %v1352
      %v1354 = vpop.f32.mrf.mxu0
      %v1355 = vpop.f32.mrf.mxu0
      %v1356 = vadd.f32 %v1289, %v1355
      %v1357 = vpop.f32.mrf.mxu0
      %1358 = vdwg.mxu0
      %v1359 = vadd.f32 %v1353, %v1192
      %v1360 = vadd.f32 %v1356, %v1193
      %v1361 = vsel %vm429, %v1359, 0.0
      %1362 = vadd.xlane.f32.xlu0 %v1361
      %v1363 = vpop.xlane.xlu0 %1362
      %v1364 = vsel %vm429, %v1360, 0.0
      %1365 = vadd.xlane.f32.xlu0 %v1364
      %v1366 = vpop.xlane.xlu0 %1365
      %v1367 = vmul.f32 %v1363, %v1161
      %v1368 = vmul.f32 %v1366, %v1161
      %v1369 = vsub.f32 %v1359, %v1367
      %v1370 = vsub.f32 %v1360, %v1368
      %v1371 = vmul.f32 %v1369, %v1369
      %v1372 = vmul.f32 %v1370, %v1370
      %v1373 = vsel %vm429, %v1371, 0.0
      %1374 = vadd.xlane.f32.xlu0 %v1373
      %v1375 = vpop.xlane.xlu0 %1374
      %v1376 = vsel %vm429, %v1372, 0.0
      %1377 = vadd.xlane.f32.xlu0 %v1376
      %v1378 = vpop.xlane.xlu0 %1377
      %v1379 = vmul.f32 %v1375, %v1161
      %v1380 = vmul.f32 %v1378, %v1161
      %v1381 = vadd.f32 %v1379, 1e-12
      %v1382 = vadd.f32 %v1380, 1e-12
      %v1383 = vrsqrt.pop %v1381
      %v1384 = vrsqrt.pop %v1382
      %v1385 = vmul.f32 %v1369, %v1383
      %v1386 = vmul.f32 %v1370, %v1384
      %v1387 = vlaneseq
      %v1388 = vshrl.u32 %v1387, 7
      %v1389 = vsub.s32 6, %v1388
      %v1390 = vrot.slane %v408, %v1389
      %v1391 = vmul.f32 %v1385, %v1390
      %v1392 = vmul.f32 %v1386, %v1390
      %v1393 = vlaneseq
      %v1394 = vshrl.u32 %v1393, 7
      %v1395 = vsub.s32 7, %v1394
      %v1396 = vrot.slane %v408, %v1395
      %v1397 = vadd.f32 %v1391, %v1396
      %v1398 = vadd.f32 %v1392, %v1396
      %1399 = vst.msk [vmem:[#allocation2] sm:$0xff] %vm429, %v1397
      %1400 = vst.msk [vmem:[#allocation2 + $0x8] sm:$0xff] %vm429, %v1398
      %p1401 = scmp.eq.s32.totalorder %s20, 1
      // Predicated region
      $region61: #{indobert_bic_forward.1} parent=55 // pred_check
        %p1402 = pneg %p1401
      $region62: #{indobert_bic_forward.1} parent=55 // pred_check_branch
        %1404 = sbr.rel (%p1402) target = $region64
      $region63: #{indobert_bic_forward.1} parent=55 // pred_region
        %v1405 = vpack.c.bf16 %v1398, %v1397
        %v1406 = vld [vmem:[%s7] sm:$0xf]
        %v1407 = vld [vmem:[%s7 + $0x4] sm:$0xf]
        %v1408 = vld [vmem:[%s7 + $0x8] sm:$0xf]
        %v1409 = vld [vmem:[%s7 + $0xc] sm:$0xf]
        %v1410 = vld [vmem:[%s7 + $0x10] sm:$0xf]
        %v1411 = vld [vmem:[%s7 + $0x14] sm:$0xf]
        %v1412 = vld [vmem:[%s7 + $0x18] sm:$0xf]
        %v1413 = vld [vmem:[%s7 + $0x1c] sm:$0xf]
        %v1414 = vld [vmem:[%s7 + $0x20] sm:$0xf]
        %v1415 = vld [vmem:[%s7 + $0x24] sm:$0xf]
        %v1416 = vld [vmem:[%s7 + $0x28] sm:$0xf]
        %v1417 = vld [vmem:[%s7 + $0x2c] sm:$0xf]
        %v1418 = vld [vmem:[%s7 + $0x30] sm:$0xf]
        %v1419 = vld [vmem:[%s7 + $0x34] sm:$0xf]
        %v1420 = vld [vmem:[%s7 + $0x38] sm:$0xf]
        %v1421 = vld [vmem:[%s7 + $0x3c] sm:$0xf]
        %v1422 = vld [vmem:[%s8] sm:$0xf]
        %v1423 = vlaneseq
        %v1424 = vshrl.u32 %v1423, 7
        %v1425 = vsub.s32 0, %v1424
        %v1426 = vrot.slane %v1422, %v1425
        %v1431 = vunpack.c.l.b16 %v1406
        %v1432 = vunpack.c.l.b16 %v1407
        %v1433 = vunpack.c.l.b16 %v1408
        %v1434 = vunpack.c.l.b16 %v1409
        %v1435 = vpack.c.b16 %v1432, %v1431
        %v1436 = vpack.c.b16 %v1434, %v1433
        %v1440 = vsel %vm429, %v1405, 0
        %1442 = vmatprep.subr.bf16.mxu0 0
        %1443 = vmatpush1.bf16.msra.mxu0 0
        %1444 = vmatprep.subr.bf16.mxu0 0
        %1445 = vmatpush1.bf16.msra.mxu0 0
        %1446 = vmatprep.subr.bf16.mxu0 0
        %1447 = vmatpush1.bf16.msra.mxu0 0
        %1448 = vmatprep.subr.bf16.mxu0 0
        %1449 = vmatpush1.bf16.msra.mxu0 0
        %1450 = vmatprep.subr.bf16.mxu0 0
        %1451 = vmatpush1.bf16.msra.mxu0 0
        %1452 = vmatprep.subr.bf16.mxu0 0
        %1453 = vmatpush1.bf16.msra.mxu0 0
        %1454 = vmatprep.subr.bf16.mxu0 0
        %1455 = vmatpush1.bf16.msra.mxu0 %v1436
        %1456 = vmatprep.subr.bf16.mxu0 0
        %1457 = vmatpush1.bf16.msra.mxu0 %v1435
        %1458 = vmatprep.subr.bf16.mxu0 0
        %1459 = vmatpush2.bf16.msra.mxu0 0
        %1460 = vmatprep.subr.bf16.mxu0 0
        %1461 = vmatpush2.bf16.msra.mxu0 0
        %1462 = vmatprep.subr.bf16.mxu0 0
        %1463 = vmatpush2.bf16.msra.mxu0 0
        %1464 = vmatprep.subr.bf16.mxu0 0
        %1465 = vmatpush2.bf16.msra.mxu0 0
        %1466 = vmatprep.subr.bf16.mxu0 0
        %1467 = vmatpush2.bf16.msra.mxu0 0
        %1468 = vmatprep.subr.bf16.mxu0 0
        %1469 = vmatpush2.bf16.msra.mxu0 0
        %1470 = vmatprep.subr.bf16.mxu0 0
        %1471 = vmatpush2.bf16.msra.mxu0 0
        %1472 = vmatprep.subr.bf16.mxu0 0
        %1473 = vmatpush2.bf16.msra.mxu0 0
        %1474 = vmatprep.mubr.bf16.mxu0 0
        %1475 = vmatmul.mubr.bf16.gmra.mxu0 %v1440
        %v1476 = vpop.f32.mrf.mxu0
        %v1477 = vadd.f32 %v1426, %v1476
        %v1478 = vpop.f32.mrf.mxu0
        %v1479 = vpop.f32.mrf.mxu0
        %v1480 = vadd.f32 %v1426, %v1479
        %v1481 = vpop.f32.mrf.mxu0
        %1482 = vdwg.mxu0
        %v1487 = vunpack.c.l.b16 %v1410
        %v1488 = vunpack.c.l.b16 %v1411
        %v1489 = vunpack.c.l.b16 %v1412
        %v1490 = vunpack.c.l.b16 %v1413
        %v1491 = vpack.c.b16 %v1488, %v1487
        %v1492 = vpack.c.b16 %v1490, %v1489
        %v1496 = vsel %vm429, 0, 0
        %1498 = vmatprep.subr.bf16.mxu0 0
        %1499 = vmatpush1.bf16.msra.mxu0 0
        %1500 = vmatprep.subr.bf16.mxu0 0
        %1501 = vmatpush1.bf16.msra.mxu0 0
        %1502 = vmatprep.subr.bf16.mxu0 0
        %1503 = vmatpush1.bf16.msra.mxu0 0
        %1504 = vmatprep.subr.bf16.mxu0 0
        %1505 = vmatpush1.bf16.msra.mxu0 0
        %1506 = vmatprep.subr.bf16.mxu0 0
        %1507 = vmatpush1.bf16.msra.mxu0 0
        %1508 = vmatprep.subr.bf16.mxu0 0
        %1509 = vmatpush1.bf16.msra.mxu0 0
        %1510 = vmatprep.subr.bf16.mxu0 0
        %1511 = vmatpush1.bf16.msra.mxu0 %v1492
        %1512 = vmatprep.subr.bf16.mxu0 0
        %1513 = vmatpush1.bf16.msra.mxu0 %v1491
        %1514 = vmatprep.subr.bf16.mxu0 0
        %1515 = vmatpush2.bf16.msra.mxu0 0
        %1516 = vmatprep.subr.bf16.mxu0 0
        %1517 = vmatpush2.bf16.msra.mxu0 0
        %1518 = vmatprep.subr.bf16.mxu0 0
        %1519 = vmatpush2.bf16.msra.mxu0 0
        %1520 = vmatprep.subr.bf16.mxu0 0
        %1521 = vmatpush2.bf16.msra.mxu0 0
        %1522 = vmatprep.subr.bf16.mxu0 0
        %1523 = vmatpush2.bf16.msra.mxu0 0
        %1524 = vmatprep.subr.bf16.mxu0 0
        %1525 = vmatpush2.bf16.msra.mxu0 0
        %1526 = vmatprep.subr.bf16.mxu0 0
        %1527 = vmatpush2.bf16.msra.mxu0 0
        %1528 = vmatprep.subr.bf16.mxu0 0
        %1529 = vmatpush2.bf16.msra.mxu0 0
        %1530 = vmatprep.mubr.bf16.mxu0 0
        %1531 = vmatmul.mubr.bf16.gmra.mxu0 %v1496
        %v1532 = vpop.f32.mrf.mxu0
        %v1533 = vadd.f32 0.0, %v1532
        %v1534 = vpop.f32.mrf.mxu0
        %v1535 = vpop.f32.mrf.mxu0
        %v1536 = vpop.f32.mrf.mxu0
        %1537 = vdwg.mxu0
        %v1538 = vadd.f32 %v1477, %v1533
        %v1539 = vxor.u32 %v1538, 2147483648
        %v1540 = vmul.f32 %v1539, 1.442695
        %v1541 = vpow.pop %v1540
        %v1542 = vadd.f32 %v1541, 1.0
        %v1543 = vrcp.pop %v1542
        %v1544 = vmul.f32 1.0, %v1543
        %v1545 = vtanh.pop %v1538
        %v1546 = vmul.f32 %v1544, 0.0
        %1548 = vrot.lane.b32.xlu0 %v1545, 64
        %v1549 = vpop.permute.xlu0 %1548
        %v1551 = vmul.f32 %v1544, %v1549
        %1553 = vrot.lane.b32.xlu0 %v1551, 32
        %v1554 = vpop.permute.xlu0 %1553
        %v1556 = vadd.f32 %v1546, %v1554
        %v1557 = vtanh.pop %v1556
        %1559 = vrot.lane.b32.xlu0 %v1557, 64
        %v1560 = vpop.permute.xlu0 %1559
        %v1562 = vmul.f32 %v1544, %v1560
        %v1563 = vpack.c.bf16 %v1562, %v1562
        %1565 = vrot.lane.b32.xlu0 %v1563, 32
        %v1566 = vpop.permute.xlu0 %1565
        %v1568 = vsel %vm429, %v1566, 0
        %1570 = vmatprep.subr.bf16.mxu0 0
        %1571 = vmatpush1.bf16.msra.mxu0 0
        %1572 = vmatprep.subr.bf16.mxu0 0
        %1573 = vmatpush1.bf16.msra.mxu0 0
        %1574 = vmatprep.subr.bf16.mxu0 0
        %1575 = vmatpush1.bf16.msra.mxu0 0
        %1576 = vmatprep.subr.bf16.mxu0 0
        %1577 = vmatpush1.bf16.msra.mxu0 0
        %1578 = vmatprep.subr.bf16.mxu0 0
        %1579 = vmatpush1.bf16.msra.mxu0 0
        %1580 = vmatprep.subr.bf16.mxu0 0
        %1581 = vmatpush1.bf16.msra.mxu0 0
        %1582 = vmatprep.subr.bf16.mxu0 0
        %1583 = vmatpush1.bf16.msra.mxu0 %v1492
        %1584 = vmatprep.subr.bf16.mxu0 0
        %1585 = vmatpush1.bf16.msra.mxu0 %v1491
        %1586 = vmatprep.subr.bf16.mxu0 0
        %1587 = vmatpush2.bf16.msra.mxu0 0
        %1588 = vmatprep.subr.bf16.mxu0 0
        %1589 = vmatpush2.bf16.msra.mxu0 0
        %1590 = vmatprep.subr.bf16.mxu0 0
        %1591 = vmatpush2.bf16.msra.mxu0 0
        %1592 = vmatprep.subr.bf16.mxu0 0
        %1593 = vmatpush2.bf16.msra.mxu0 0
        %1594 = vmatprep.subr.bf16.mxu0 0
        %1595 = vmatpush2.bf16.msra.mxu0 0
        %1596 = vmatprep.subr.bf16.mxu0 0
        %1597 = vmatpush2.bf16.msra.mxu0 0
        %1598 = vmatprep.subr.bf16.mxu0 0
        %1599 = vmatpush2.bf16.msra.mxu0 0
        %1600 = vmatprep.subr.bf16.mxu0 0
        %1601 = vmatpush2.bf16.msra.mxu0 0
        %1602 = vmatprep.mubr.bf16.mxu0 0
        %1603 = vmatmul.mubr.bf16.gmra.mxu0 %v1568
        %v1604 = vpop.f32.mrf.mxu0
        %v1605 = vadd.f32 0.0, %v1604
        %v1606 = vpop.f32.mrf.mxu0
        %v1607 = vpop.f32.mrf.mxu0
        %v1608 = vpop.f32.mrf.mxu0
        %1609 = vdwg.mxu0
        %v1611 = vrot.slane %v1605, 7
        %v1613 = vadd.f32 %v1477, %v1611
        %v1614 = vxor.u32 %v1613, 2147483648
        %v1615 = vmul.f32 %v1614, 1.442695
        %v1616 = vpow.pop %v1615
        %v1617 = vadd.f32 %v1616, 1.0
        %v1618 = vrcp.pop %v1617
        %v1619 = vmul.f32 1.0, %v1618
        %v1620 = vtanh.pop %v1613
        %v1622 = vrot.slane %v1556, 7
        %v1624 = vmul.f32 %v1619, %v1622
        %1626 = vrot.lane.b32.xlu0 %v1620, 64
        %v1627 = vpop.permute.xlu0 %1626
        %v1629 = vmul.f32 %v1619, %v1627
        %1631 = vrot.lane.b32.xlu0 %v1629, 32
        %v1632 = vpop.permute.xlu0 %1631
        %v1634 = vadd.f32 %v1624, %v1632
        %v1635 = vtanh.pop %v1634
        %1637 = vrot.lane.b32.xlu0 %v1635, 64
        %v1638 = vpop.permute.xlu0 %1637
        %v1640 = vmul.f32 %v1619, %v1638
        %v1641 = vpack.c.bf16 %v1640, %v1640
        %v1643 = vshrl.u32 %v1641, 16
        %1645 = vrot.lane.b32.xlu0 %v1643, 32
        %v1646 = vpop.permute.xlu0 %1645
        %v1648 = vsel %vm429, %v1646, 0
        %1650 = vmatprep.subr.bf16.mxu0 0
        %1651 = vmatpush1.bf16.msra.mxu0 0
        %1652 = vmatprep.subr.bf16.mxu0 0
        %1653 = vmatpush1.bf16.msra.mxu0 0
        %1654 = vmatprep.subr.bf16.mxu0 0
        %1655 = vmatpush1.bf16.msra.mxu0 0
        %1656 = vmatprep.subr.bf16.mxu0 0
        %1657 = vmatpush1.bf16.msra.mxu0 0
        %1658 = vmatprep.subr.bf16.mxu0 0
        %1659 = vmatpush1.bf16.msra.mxu0 0
        %1660 = vmatprep.subr.bf16.mxu0 0
        %1661 = vmatpush1.bf16.msra.mxu0 0
        %1662 = vmatprep.subr.bf16.mxu0 0
        %1663 = vmatpush1.bf16.msra.mxu0 %v1492
        %1664 = vmatprep.subr.bf16.mxu0 0
        %1665 = vmatpush1.bf16.msra.mxu0 %v1491
        %1666 = vmatprep.subr.bf16.mxu0 0
        %1667 = vmatpush2.bf16.msra.mxu0 0
        %1668 = vmatprep.subr.bf16.mxu0 0
        %1669 = vmatpush2.bf16.msra.mxu0 0
        %1670 = vmatprep.subr.bf16.mxu0 0
        %1671 = vmatpush2.bf16.msra.mxu0 0
        %1672 = vmatprep.subr.bf16.mxu0 0
        %1673 = vmatpush2.bf16.msra.mxu0 0
        %1674 = vmatprep.subr.bf16.mxu0 0
        %1675 = vmatpush2.bf16.msra.mxu0 0
        %1676 = vmatprep.subr.bf16.mxu0 0
        %1677 = vmatpush2.bf16.msra.mxu0 0
        %1678 = vmatprep.subr.bf16.mxu0 0
        %1679 = vmatpush2.bf16.msra.mxu0 0
        %1680 = vmatprep.subr.bf16.mxu0 0
        %1681 = vmatpush2.bf16.msra.mxu0 0
        %1682 = vmatprep.mubr.bf16.mxu0 0
        %1683 = vmatmul.mubr.bf16.gmra.mxu0 %v1648
        %v1684 = vpop.f32.mrf.mxu0
        %v1685 = vadd.f32 0.0, %v1684
        %v1686 = vpop.f32.mrf.mxu0
        %v1687 = vpop.f32.mrf.mxu0
        %v1688 = vpop.f32.mrf.mxu0
        %1689 = vdwg.mxu0
        %v1691 = vrot.slane %v1685, 6
        %v1693 = vadd.f32 %v1477, %v1691
        %v1694 = vxor.u32 %v1693, 2147483648
        %v1695 = vmul.f32 %v1694, 1.442695
        %v1696 = vpow.pop %v1695
        %v1697 = vadd.f32 %v1696, 1.0
        %v1698 = vrcp.pop %v1697
        %v1699 = vmul.f32 1.0, %v1698
        %v1700 = vtanh.pop %v1693
        %v1702 = vrot.slane %v1634, 7
        %v1704 = vmul.f32 %v1699, %v1702
        %1706 = vrot.lane.b32.xlu0 %v1700, 64
        %v1707 = vpop.permute.xlu0 %1706
        %v1709 = vmul.f32 %v1699, %v1707
        %1711 = vrot.lane.b32.xlu0 %v1709, 32
        %v1712 = vpop.permute.xlu0 %1711
        %v1714 = vadd.f32 %v1704, %v1712
        %v1715 = vtanh.pop %v1714
        %1717 = vrot.lane.b32.xlu0 %v1715, 64
        %v1718 = vpop.permute.xlu0 %1717
        %v1720 = vmul.f32 %v1699, %v1718
        %v1721 = vpack.c.bf16 %v1720, %v1720
        %v1723 = vrot.slane %v1721, 1
        %1724 = vrot.lane.b32.xlu0 %v1723, 32
        %v1725 = vpop.permute.xlu0 %1724
        %v1727 = vsel %vm429, %v1725, 0
        %1729 = vmatprep.subr.bf16.mxu0 0
        %1730 = vmatpush1.bf16.msra.mxu0 0
        %1731 = vmatprep.subr.bf16.mxu0 0
        %1732 = vmatpush1.bf16.msra.mxu0 0
        %1733 = vmatprep.subr.bf16.mxu0 0
        %1734 = vmatpush1.bf16.msra.mxu0 0
        %1735 = vmatprep.subr.bf16.mxu0 0
        %1736 = vmatpush1.bf16.msra.mxu0 0
        %1737 = vmatprep.subr.bf16.mxu0 0
        %1738 = vmatpush1.bf16.msra.mxu0 0
        %1739 = vmatprep.subr.bf16.mxu0 0
        %1740 = vmatpush1.bf16.msra.mxu0 0
        %1741 = vmatprep.subr.bf16.mxu0 0
        %1742 = vmatpush1.bf16.msra.mxu0 %v1492
        %1743 = vmatprep.subr.bf16.mxu0 0
        %1744 = vmatpush1.bf16.msra.mxu0 %v1491
        %1745 = vmatprep.subr.bf16.mxu0 0
        %1746 = vmatpush2.bf16.msra.mxu0 0
        %1747 = vmatprep.subr.bf16.mxu0 0
        %1748 = vmatpush2.bf16.msra.mxu0 0
        %1749 = vmatprep.subr.bf16.mxu0 0
        %1750 = vmatpush2.bf16.msra.mxu0 0
        %1751 = vmatprep.subr.bf16.mxu0 0
        %1752 = vmatpush2.bf16.msra.mxu0 0
        %1753 = vmatprep.subr.bf16.mxu0 0
        %1754 = vmatpush2.bf16.msra.mxu0 0
        %1755 = vmatprep.subr.bf16.mxu0 0
        %1756 = vmatpush2.bf16.msra.mxu0 0
        %1757 = vmatprep.subr.bf16.mxu0 0
        %1758 = vmatpush2.bf16.msra.mxu0 0
        %1759 = vmatprep.subr.bf16.mxu0 0
        %1760 = vmatpush2.bf16.msra.mxu0 0
        %1761 = vmatprep.mubr.bf16.mxu0 0
        %1762 = vmatmul.mubr.bf16.gmra.mxu0 %v1727
        %v1763 = vpop.f32.mrf.mxu0
        %v1764 = vadd.f32 0.0, %v1763
        %v1765 = vpop.f32.mrf.mxu0
        %v1766 = vpop.f32.mrf.mxu0
        %v1767 = vpop.f32.mrf.mxu0
        %1768 = vdwg.mxu0
        %v1770 = vrot.slane %v1764, 5
        %v1772 = vadd.f32 %v1477, %v1770
        %v1773 = vxor.u32 %v1772, 2147483648
        %v1774 = vmul.f32 %v1773, 1.442695
        %v1775 = vpow.pop %v1774
        %v1776 = vadd.f32 %v1775, 1.0
        %v1777 = vrcp.pop %v1776
        %v1778 = vmul.f32 1.0, %v1777
        %v1779 = vtanh.pop %v1772
        %v1781 = vrot.slane %v1714, 7
        %v1783 = vmul.f32 %v1778, %v1781
        %1785 = vrot.lane.b32.xlu0 %v1779, 64
        %v1786 = vpop.permute.xlu0 %1785
        %v1788 = vmul.f32 %v1778, %v1786
        %1790 = vrot.lane.b32.xlu0 %v1788, 32
        %v1791 = vpop.permute.xlu0 %1790
        %v1793 = vadd.f32 %v1783, %v1791
        %v1794 = vtanh.pop %v1793
        %1796 = vrot.lane.b32.xlu0 %v1794, 64
        %v1797 = vpop.permute.xlu0 %1796
        %v1799 = vmul.f32 %v1778, %v1797
        %v1800 = vpack.c.bf16 %v1799, %v1799
        %v1802 = vshrl.u32 %v1800, 16
        %v1804 = vrot.slane %v1802, 1
        %1805 = vrot.lane.b32.xlu0 %v1804, 32
        %v1806 = vpop.permute.xlu0 %1805
        %v1808 = vsel %vm429, %v1806, 0
        %1810 = vmatprep.subr.bf16.mxu0 0
        %1811 = vmatpush1.bf16.msra.mxu0 0
        %1812 = vmatprep.subr.bf16.mxu0 0
        %1813 = vmatpush1.bf16.msra.mxu0 0
        %1814 = vmatprep.subr.bf16.mxu0 0
        %1815 = vmatpush1.bf16.msra.mxu0 0
        %1816 = vmatprep.subr.bf16.mxu0 0
        %1817 = vmatpush1.bf16.msra.mxu0 0
        %1818 = vmatprep.subr.bf16.mxu0 0
        %1819 = vmatpush1.bf16.msra.mxu0 0
        %1820 = vmatprep.subr.bf16.mxu0 0
        %1821 = vmatpush1.bf16.msra.mxu0 0
        %1822 = vmatprep.subr.bf16.mxu0 0
        %1823 = vmatpush1.bf16.msra.mxu0 %v1492
        %1824 = vmatprep.subr.bf16.mxu0 0
        %1825 = vmatpush1.bf16.msra.mxu0 %v1491
        %1826 = vmatprep.subr.bf16.mxu0 0
        %1827 = vmatpush2.bf16.msra.mxu0 0
        %1828 = vmatprep.subr.bf16.mxu0 0
        %1829 = vmatpush2.bf16.msra.mxu0 0
        %1830 = vmatprep.subr.bf16.mxu0 0
        %1831 = vmatpush2.bf16.msra.mxu0 0
        %1832 = vmatprep.subr.bf16.mxu0 0
        %1833 = vmatpush2.bf16.msra.mxu0 0
        %1834 = vmatprep.subr.bf16.mxu0 0
        %1835 = vmatpush2.bf16.msra.mxu0 0
        %1836 = vmatprep.subr.bf16.mxu0 0
        %1837 = vmatpush2.bf16.msra.mxu0 0
        %1838 = vmatprep.subr.bf16.mxu0 0
        %1839 = vmatpush2.bf16.msra.mxu0 0
        %1840 = vmatprep.subr.bf16.mxu0 0
        %1841 = vmatpush2.bf16.msra.mxu0 0
        %1842 = vmatprep.mubr.bf16.mxu0 0
        %1843 = vmatmul.mubr.bf16.gmra.mxu0 %v1808
        %v1844 = vpop.f32.mrf.mxu0
        %v1845 = vadd.f32 0.0, %v1844
        %v1846 = vpop.f32.mrf.mxu0
        %v1847 = vpop.f32.mrf.mxu0
        %v1848 = vpop.f32.mrf.mxu0
        %1849 = vdwg.mxu0
        %v1851 = vrot.slane %v1845, 4
        %v1853 = vadd.f32 %v1477, %v1851
        %v1854 = vxor.u32 %v1853, 2147483648
        %v1855 = vmul.f32 %v1854, 1.442695
        %v1856 = vpow.pop %v1855
        %v1857 = vadd.f32 %v1856, 1.0
        %v1858 = vrcp.pop %v1857
        %v1859 = vmul.f32 1.0, %v1858
        %v1860 = vtanh.pop %v1853
        %v1862 = vrot.slane %v1793, 7
        %v1864 = vmul.f32 %v1859, %v1862
        %1866 = vrot.lane.b32.xlu0 %v1860, 64
        %v1867 = vpop.permute.xlu0 %1866
        %v1869 = vmul.f32 %v1859, %v1867
        %1871 = vrot.lane.b32.xlu0 %v1869, 32
        %v1872 = vpop.permute.xlu0 %1871
        %v1874 = vadd.f32 %v1864, %v1872
        %v1875 = vtanh.pop %v1874
        %1877 = vrot.lane.b32.xlu0 %v1875, 64
        %v1878 = vpop.permute.xlu0 %1877
        %v1880 = vmul.f32 %v1859, %v1878
        %v1881 = vpack.c.bf16 %v1880, %v1880
        %v1883 = vrot.slane %v1881, 2
        %1884 = vrot.lane.b32.xlu0 %v1883, 32
        %v1885 = vpop.permute.xlu0 %1884
        %v1887 = vsel %vm429, %v1885, 0
        %1889 = vmatprep.subr.bf16.mxu0 0
        %1890 = vmatpush1.bf16.msra.mxu0 0
        %1891 = vmatprep.subr.bf16.mxu0 0
        %1892 = vmatpush1.bf16.msra.mxu0 0
        %1893 = vmatprep.subr.bf16.mxu0 0
        %1894 = vmatpush1.bf16.msra.mxu0 0
        %1895 = vmatprep.subr.bf16.mxu0 0
        %1896 = vmatpush1.bf16.msra.mxu0 0
        %1897 = vmatprep.subr.bf16.mxu0 0
        %1898 = vmatpush1.bf16.msra.mxu0 0
        %1899 = vmatprep.subr.bf16.mxu0 0
        %1900 = vmatpush1.bf16.msra.mxu0 0
        %1901 = vmatprep.subr.bf16.mxu0 0
        %1902 = vmatpush1.bf16.msra.mxu0 %v1492
        %1903 = vmatprep.subr.bf16.mxu0 0
        %1904 = vmatpush1.bf16.msra.mxu0 %v1491
        %1905 = vmatprep.subr.bf16.mxu0 0
        %1906 = vmatpush2.bf16.msra.mxu0 0
        %1907 = vmatprep.subr.bf16.mxu0 0
        %1908 = vmatpush2.bf16.msra.mxu0 0
        %1909 = vmatprep.subr.bf16.mxu0 0
        %1910 = vmatpush2.bf16.msra.mxu0 0
        %1911 = vmatprep.subr.bf16.mxu0 0
        %1912 = vmatpush2.bf16.msra.mxu0 0
        %1913 = vmatprep.subr.bf16.mxu0 0
        %1914 = vmatpush2.bf16.msra.mxu0 0
        %1915 = vmatprep.subr.bf16.mxu0 0
        %1916 = vmatpush2.bf16.msra.mxu0 0
        %1917 = vmatprep.subr.bf16.mxu0 0
        %1918 = vmatpush2.bf16.msra.mxu0 0
        %1919 = vmatprep.subr.bf16.mxu0 0
        %1920 = vmatpush2.bf16.msra.mxu0 0
        %1921 = vmatprep.mubr.bf16.mxu0 0
        %1922 = vmatmul.mubr.bf16.gmra.mxu0 %v1887
        %v1923 = vpop.f32.mrf.mxu0
        %v1924 = vadd.f32 0.0, %v1923
        %v1925 = vpop.f32.mrf.mxu0
        %v1926 = vpop.f32.mrf.mxu0
        %v1927 = vpop.f32.mrf.mxu0
        %1928 = vdwg.mxu0
        %v1930 = vrot.slane %v1924, 3
        %v1932 = vadd.f32 %v1477, %v1930
        %v1933 = vxor.u32 %v1932, 2147483648
        %v1934 = vmul.f32 %v1933, 1.442695
        %v1935 = vpow.pop %v1934
        %v1936 = vadd.f32 %v1935, 1.0
        %v1937 = vrcp.pop %v1936
        %v1938 = vmul.f32 1.0, %v1937
        %v1939 = vtanh.pop %v1932
        %v1941 = vrot.slane %v1874, 7
        %v1943 = vmul.f32 %v1938, %v1941
        %1945 = vrot.lane.b32.xlu0 %v1939, 64
        %v1946 = vpop.permute.xlu0 %1945
        %v1948 = vmul.f32 %v1938, %v1946
        %1950 = vrot.lane.b32.xlu0 %v1948, 32
        %v1951 = vpop.permute.xlu0 %1950
        %v1953 = vadd.f32 %v1943, %v1951
        %v1954 = vtanh.pop %v1953
        %1956 = vrot.lane.b32.xlu0 %v1954, 64
        %v1957 = vpop.permute.xlu0 %1956
        %v1959 = vmul.f32 %v1938, %v1957
        %v1960 = vpack.c.bf16 %v1959, %v1959
        %v1962 = vshrl.u32 %v1960, 16
        %v1964 = vrot.slane %v1962, 2
        %1965 = vrot.lane.b32.xlu0 %v1964, 32
        %v1966 = vpop.permute.xlu0 %1965
        %v1968 = vsel %vm429, %v1966, 0
        %1970 = vmatprep.subr.bf16.mxu0 0
        %1971 = vmatpush1.bf16.msra.mxu0 0
        %1972 = vmatprep.subr.bf16.mxu0 0
        %1973 = vmatpush1.bf16.msra.mxu0 0
        %1974 = vmatprep.subr.bf16.mxu0 0
        %1975 = vmatpush1.bf16.msra.mxu0 0
        %1976 = vmatprep.subr.bf16.mxu0 0
        %1977 = vmatpush1.bf16.msra.mxu0 0
        %1978 = vmatprep.subr.bf16.mxu0 0
        %1979 = vmatpush1.bf16.msra.mxu0 0
        %1980 = vmatprep.subr.bf16.mxu0 0
        %1981 = vmatpush1.bf16.msra.mxu0 0
        %1982 = vmatprep.subr.bf16.mxu0 0
        %1983 = vmatpush1.bf16.msra.mxu0 %v1492
        %1984 = vmatprep.subr.bf16.mxu0 0
        %1985 = vmatpush1.bf16.msra.mxu0 %v1491
        %1986 = vmatprep.subr.bf16.mxu0 0
        %1987 = vmatpush2.bf16.msra.mxu0 0
        %1988 = vmatprep.subr.bf16.mxu0 0
        %1989 = vmatpush2.bf16.msra.mxu0 0
        %1990 = vmatprep.subr.bf16.mxu0 0
        %1991 = vmatpush2.bf16.msra.mxu0 0
        %1992 = vmatprep.subr.bf16.mxu0 0
        %1993 = vmatpush2.bf16.msra.mxu0 0
        %1994 = vmatprep.subr.bf16.mxu0 0
        %1995 = vmatpush2.bf16.msra.mxu0 0
        %1996 = vmatprep.subr.bf16.mxu0 0
        %1997 = vmatpush2.bf16.msra.mxu0 0
        %1998 = vmatprep.subr.bf16.mxu0 0
        %1999 = vmatpush2.bf16.msra.mxu0 0
        %2000 = vmatprep.subr.bf16.mxu0 0
        %2001 = vmatpush2.bf16.msra.mxu0 0
        %2002 = vmatprep.mubr.bf16.mxu0 0
        %2003 = vmatmul.mubr.bf16.gmra.mxu0 %v1968
        %v2004 = vpop.f32.mrf.mxu0
        %v2005 = vadd.f32 0.0, %v2004
        %v2006 = vpop.f32.mrf.mxu0
        %v2007 = vpop.f32.mrf.mxu0
        %v2008 = vpop.f32.mrf.mxu0
        %2009 = vdwg.mxu0
        %v2011 = vrot.slane %v2005, 2
        %v2013 = vadd.f32 %v1477, %v2011
        %v2014 = vxor.u32 %v2013, 2147483648
        %v2015 = vmul.f32 %v2014, 1.442695
        %v2016 = vpow.pop %v2015
        %v2017 = vadd.f32 %v2016, 1.0
        %v2018 = vrcp.pop %v2017
        %v2019 = vmul.f32 1.0, %v2018
        %v2020 = vtanh.pop %v2013
        %v2022 = vrot.slane %v1953, 7
        %v2024 = vmul.f32 %v2019, %v2022
        %2026 = vrot.lane.b32.xlu0 %v2020, 64
        %v2027 = vpop.permute.xlu0 %2026
        %v2029 = vmul.f32 %v2019, %v2027
        %2031 = vrot.lane.b32.xlu0 %v2029, 32
        %v2032 = vpop.permute.xlu0 %2031
        %v2034 = vadd.f32 %v2024, %v2032
        %v2035 = vtanh.pop %v2034
        %2037 = vrot.lane.b32.xlu0 %v2035, 64
        %v2038 = vpop.permute.xlu0 %2037
        %v2040 = vmul.f32 %v2019, %v2038
        %v2041 = vpack.c.bf16 %v2040, %v2040
        %v2043 = vrot.slane %v2041, 3
        %2044 = vrot.lane.b32.xlu0 %v2043, 32
        %v2045 = vpop.permute.xlu0 %2044
        %v2047 = vsel %vm429, %v2045, 0
        %2049 = vmatprep.subr.bf16.mxu0 0
        %2050 = vmatpush1.bf16.msra.mxu0 0
        %2051 = vmatprep.subr.bf16.mxu0 0
        %2052 = vmatpush1.bf16.msra.mxu0 0
        %2053 = vmatprep.subr.bf16.mxu0 0
        %2054 = vmatpush1.bf16.msra.mxu0 0
        %2055 = vmatprep.subr.bf16.mxu0 0
        %2056 = vmatpush1.bf16.msra.mxu0 0
        %2057 = vmatprep.subr.bf16.mxu0 0
        %2058 = vmatpush1.bf16.msra.mxu0 0
        %2059 = vmatprep.subr.bf16.mxu0 0
        %2060 = vmatpush1.bf16.msra.mxu0 0
        %2061 = vmatprep.subr.bf16.mxu0 0
        %2062 = vmatpush1.bf16.msra.mxu0 %v1492
        %2063 = vmatprep.subr.bf16.mxu0 0
        %2064 = vmatpush1.bf16.msra.mxu0 %v1491
        %2065 = vmatprep.subr.bf16.mxu0 0
        %2066 = vmatpush2.bf16.msra.mxu0 0
        %2067 = vmatprep.subr.bf16.mxu0 0
        %2068 = vmatpush2.bf16.msra.mxu0 0
        %2069 = vmatprep.subr.bf16.mxu0 0
        %2070 = vmatpush2.bf16.msra.mxu0 0
        %2071 = vmatprep.subr.bf16.mxu0 0
        %2072 = vmatpush2.bf16.msra.mxu0 0
        %2073 = vmatprep.subr.bf16.mxu0 0
        %2074 = vmatpush2.bf16.msra.mxu0 0
        %2075 = vmatprep.subr.bf16.mxu0 0
        %2076 = vmatpush2.bf16.msra.mxu0 0
        %2077 = vmatprep.subr.bf16.mxu0 0
        %2078 = vmatpush2.bf16.msra.mxu0 0
        %2079 = vmatprep.subr.bf16.mxu0 0
        %2080 = vmatpush2.bf16.msra.mxu0 0
        %2081 = vmatprep.mubr.bf16.mxu0 0
        %2082 = vmatmul.mubr.bf16.gmra.mxu0 %v2047
        %v2083 = vpop.f32.mrf.mxu0
        %v2084 = vadd.f32 0.0, %v2083
        %v2085 = vpop.f32.mrf.mxu0
        %v2086 = vpop.f32.mrf.mxu0
        %v2087 = vpop.f32.mrf.mxu0
        %2088 = vdwg.mxu0
        %v2090 = vrot.slane %v2084, 1
        %v2092 = vadd.f32 %v1477, %v2090
        %v2093 = vxor.u32 %v2092, 2147483648
        %v2094 = vmul.f32 %v2093, 1.442695
        %v2095 = vpow.pop %v2094
        %v2096 = vadd.f32 %v2095, 1.0
        %v2097 = vrcp.pop %v2096
        %v2098 = vmul.f32 1.0, %v2097
        %v2099 = vtanh.pop %v2092
        %v2101 = vrot.slane %v2034, 7
        %v2103 = vmul.f32 %v2098, %v2101
        %2105 = vrot.lane.b32.xlu0 %v2099, 64
        %v2106 = vpop.permute.xlu0 %2105
        %v2108 = vmul.f32 %v2098, %v2106
        %2110 = vrot.lane.b32.xlu0 %v2108, 32
        %v2111 = vpop.permute.xlu0 %2110
        %v2113 = vadd.f32 %v2103, %v2111
        %v2114 = vtanh.pop %v2113
        %2116 = vrot.lane.b32.xlu0 %v2114, 64
        %v2117 = vpop.permute.xlu0 %2116
        %v2119 = vmul.f32 %v2098, %v2117
        %v2120 = vshrl.u32 %v1405, 16
        %v2122 = vrot.slane %v2120, 3
        %v2127 = vunpack.c.l.b16 %v1414
        %v2128 = vunpack.c.l.b16 %v1415
        %v2129 = vunpack.c.l.b16 %v1416
        %v2130 = vunpack.c.l.b16 %v1417
        %v2131 = vpack.c.b16 %v2128, %v2127
        %v2132 = vpack.c.b16 %v2130, %v2129
        %v2136 = vrot.slane %v1422, 1
        %v2139 = vsel %vm429, %v2122, 0
        %2141 = vmatprep.subr.bf16.mxu0 0
        %2142 = vmatpush1.bf16.msra.mxu0 0
        %2143 = vmatprep.subr.bf16.mxu0 0
        %2144 = vmatpush1.bf16.msra.mxu0 0
        %2145 = vmatprep.subr.bf16.mxu0 0
        %2146 = vmatpush1.bf16.msra.mxu0 0
        %2147 = vmatprep.subr.bf16.mxu0 0
        %2148 = vmatpush1.bf16.msra.mxu0 0
        %2149 = vmatprep.subr.bf16.mxu0 0
        %2150 = vmatpush1.bf16.msra.mxu0 0
        %2151 = vmatprep.subr.bf16.mxu0 0
        %2152 = vmatpush1.bf16.msra.mxu0 0
        %2153 = vmatprep.subr.bf16.mxu0 0
        %2154 = vmatpush1.bf16.msra.mxu0 %v2132
        %2155 = vmatprep.subr.bf16.mxu0 0
        %2156 = vmatpush1.bf16.msra.mxu0 %v2131
        %2157 = vmatprep.subr.bf16.mxu0 0
        %2158 = vmatpush2.bf16.msra.mxu0 0
        %2159 = vmatprep.subr.bf16.mxu0 0
        %2160 = vmatpush2.bf16.msra.mxu0 0
        %2161 = vmatprep.subr.bf16.mxu0 0
        %2162 = vmatpush2.bf16.msra.mxu0 0
        %2163 = vmatprep.subr.bf16.mxu0 0
        %2164 = vmatpush2.bf16.msra.mxu0 0
        %2165 = vmatprep.subr.bf16.mxu0 0
        %2166 = vmatpush2.bf16.msra.mxu0 0
        %2167 = vmatprep.subr.bf16.mxu0 0
        %2168 = vmatpush2.bf16.msra.mxu0 0
        %2169 = vmatprep.subr.bf16.mxu0 0
        %2170 = vmatpush2.bf16.msra.mxu0 0
        %2171 = vmatprep.subr.bf16.mxu0 0
        %2172 = vmatpush2.bf16.msra.mxu0 0
        %2173 = vmatprep.mubr.bf16.mxu0 0
        %2174 = vmatmul.mubr.bf16.gmra.mxu0 %v2139
        %v2175 = vpop.f32.mrf.mxu0
        %v2176 = vadd.f32 %v2136, %v2175
        %v2177 = vpop.f32.mrf.mxu0
        %v2178 = vpop.f32.mrf.mxu0
        %v2179 = vpop.f32.mrf.mxu0
        %2180 = vdwg.mxu0
        %v2185 = vunpack.c.l.b16 %v1418
        %v2186 = vunpack.c.l.b16 %v1419
        %v2187 = vunpack.c.l.b16 %v1420
        %v2188 = vunpack.c.l.b16 %v1421
        %v2189 = vpack.c.b16 %v2186, %v2185
        %v2190 = vpack.c.b16 %v2188, %v2187
        %2193 = vmatprep.subr.bf16.mxu0 0
        %2194 = vmatpush1.bf16.msra.mxu0 0
        %2195 = vmatprep.subr.bf16.mxu0 0
        %2196 = vmatpush1.bf16.msra.mxu0 0
        %2197 = vmatprep.subr.bf16.mxu0 0
        %2198 = vmatpush1.bf16.msra.mxu0 0
        %2199 = vmatprep.subr.bf16.mxu0 0
        %2200 = vmatpush1.bf16.msra.mxu0 0
        %2201 = vmatprep.subr.bf16.mxu0 0
        %2202 = vmatpush1.bf16.msra.mxu0 0
        %2203 = vmatprep.subr.bf16.mxu0 0
        %2204 = vmatpush1.bf16.msra.mxu0 0
        %2205 = vmatprep.subr.bf16.mxu0 0
        %2206 = vmatpush1.bf16.msra.mxu0 %v2190
        %2207 = vmatprep.subr.bf16.mxu0 0
        %2208 = vmatpush1.bf16.msra.mxu0 %v2189
        %2209 = vmatprep.subr.bf16.mxu0 0
        %2210 = vmatpush2.bf16.msra.mxu0 0
        %2211 = vmatprep.subr.bf16.mxu0 0
        %2212 = vmatpush2.bf16.msra.mxu0 0
        %2213 = vmatprep.subr.bf16.mxu0 0
        %2214 = vmatpush2.bf16.msra.mxu0 0
        %2215 = vmatprep.subr.bf16.mxu0 0
        %2216 = vmatpush2.bf16.msra.mxu0 0
        %2217 = vmatprep.subr.bf16.mxu0 0
        %2218 = vmatpush2.bf16.msra.mxu0 0
        %2219 = vmatprep.subr.bf16.mxu0 0
        %2220 = vmatpush2.bf16.msra.mxu0 0
        %2221 = vmatprep.subr.bf16.mxu0 0
        %2222 = vmatpush2.bf16.msra.mxu0 0
        %2223 = vmatprep.subr.bf16.mxu0 0
        %2224 = vmatpush2.bf16.msra.mxu0 0
        %2225 = vmatprep.mubr.bf16.mxu0 0
        %2226 = vmatmul.mubr.bf16.gmra.mxu0 %v1496
        %v2227 = vpop.f32.mrf.mxu0
        %v2228 = vadd.f32 0.0, %v2227
        %v2229 = vpop.f32.mrf.mxu0
        %v2230 = vpop.f32.mrf.mxu0
        %v2231 = vpop.f32.mrf.mxu0
        %2232 = vdwg.mxu0
        %v2233 = vadd.f32 %v2176, %v2228
        %v2234 = vxor.u32 %v2233, 2147483648
        %v2235 = vmul.f32 %v2234, 1.442695
        %v2236 = vpow.pop %v2235
        %v2237 = vadd.f32 %v2236, 1.0
        %v2238 = vrcp.pop %v2237
        %v2239 = vmul.f32 1.0, %v2238
        %v2240 = vtanh.pop %v2233
        %v2241 = vmul.f32 %v2239, 0.0
        %2243 = vrot.lane.b32.xlu0 %v2240, 64
        %v2244 = vpop.permute.xlu0 %2243
        %v2246 = vmul.f32 %v2239, %v2244
        %2248 = vrot.lane.b32.xlu0 %v2246, 32
        %v2249 = vpop.permute.xlu0 %2248
        %v2251 = vadd.f32 %v2241, %v2249
        %v2252 = vtanh.pop %v2251
        %2254 = vrot.lane.b32.xlu0 %v2252, 64
        %v2255 = vpop.permute.xlu0 %2254
        %v2257 = vmul.f32 %v2239, %v2255
        %v2258 = vrot.slane %v1422, 3
        %2259 = vrot.lane.b32.xlu0 %v2258, 96
        %v2260 = vpop.permute.xlu0 %2259
        %v2262 = vmul.f32 %v2119, %v2260
        %2264 = vrot.lane.b32.xlu0 %v2262, 32
        %v2265 = vpop.permute.xlu0 %2264
        %vm2267 = vcmask 261127
        %v2268 = vsel %vm2267, %v2265, 0.0
        %2269 = vadd.xlane.f32.xlu0 %v2268
        %v2270 = vpop.xlane.xlu0 %2269
        %v2271 = vrot.slane %v1422, 2
        %2272 = vrot.lane.b32.xlu0 %v2271, 64
        %v2273 = vpop.permute.xlu0 %2272
        %v2275 = vmul.f32 %v2257, %v2273
        %2277 = vrot.lane.b32.xlu0 %v2275, 32
        %v2278 = vpop.permute.xlu0 %2277
        %vm2280 = vcmask 253952
        %v2281 = vsel %vm2280, %v2278, 0.0
        %2282 = vadd.xlane.f32.xlu0 %v2281
        %v2283 = vpop.xlane.xlu0 %2282
        %v2285 = vrot.slane %v2283, 1
        %v2287 = vadd.f32 %v2270, %v2285
        %v2288 = vrot.slane %v1422, 4
        %v2290 = vadd.f32 %v2287, %v2288
        %vm2291 = vcmask 7175
        %2292 = vst.msk [vmem:[%s9 - $0x7] sm:$0x80] %vm2291, %v2290
        %v2293 = vadd.f32 %v1480, %v1533
        %v2294 = vxor.u32 %v2293, 2147483648
        %v2295 = vmul.f32 %v2294, 1.442695
        %v2296 = vpow.pop %v2295
        %v2297 = vadd.f32 %v2296, 1.0
        %v2298 = vrcp.pop %v2297
        %v2299 = vmul.f32 1.0, %v2298
        %v2300 = vtanh.pop %v2293
        %v2301 = vmul.f32 %v2299, 0.0
        %2303 = vrot.lane.b32.xlu0 %v2300, 64
        %v2304 = vpop.permute.xlu0 %2303
        %v2306 = vmul.f32 %v2299, %v2304
        %2308 = vrot.lane.b32.xlu0 %v2306, 32
        %v2309 = vpop.permute.xlu0 %2308
        %v2311 = vadd.f32 %v2301, %v2309
        %v2312 = vtanh.pop %v2311
        %2314 = vrot.lane.b32.xlu0 %v2312, 64
        %v2315 = vpop.permute.xlu0 %2314
        %v2317 = vmul.f32 %v2299, %v2315
        %v2318 = vpack.c.bf16 %v2317, %v2317
        %2320 = vrot.lane.b32.xlu0 %v2318, 32
        %v2321 = vpop.permute.xlu0 %2320
        %v2323 = vsel %vm429, %v2321, 0
        %2325 = vmatprep.subr.bf16.mxu0 0
        %2326 = vmatpush1.bf16.msra.mxu0 0
        %2327 = vmatprep.subr.bf16.mxu0 0
        %2328 = vmatpush1.bf16.msra.mxu0 0
        %2329 = vmatprep.subr.bf16.mxu0 0
        %2330 = vmatpush1.bf16.msra.mxu0 0
        %2331 = vmatprep.subr.bf16.mxu0 0
        %2332 = vmatpush1.bf16.msra.mxu0 0
        %2333 = vmatprep.subr.bf16.mxu0 0
        %2334 = vmatpush1.bf16.msra.mxu0 0
        %2335 = vmatprep.subr.bf16.mxu0 0
        %2336 = vmatpush1.bf16.msra.mxu0 0
        %2337 = vmatprep.subr.bf16.mxu0 0
        %2338 = vmatpush1.bf16.msra.mxu0 %v1492
        %2339 = vmatprep.subr.bf16.mxu0 0
        %2340 = vmatpush1.bf16.msra.mxu0 %v1491
        %2341 = vmatprep.subr.bf16.mxu0 0
        %2342 = vmatpush2.bf16.msra.mxu0 0
        %2343 = vmatprep.subr.bf16.mxu0 0
        %2344 = vmatpush2.bf16.msra.mxu0 0
        %2345 = vmatprep.subr.bf16.mxu0 0
        %2346 = vmatpush2.bf16.msra.mxu0 0
        %2347 = vmatprep.subr.bf16.mxu0 0
        %2348 = vmatpush2.bf16.msra.mxu0 0
        %2349 = vmatprep.subr.bf16.mxu0 0
        %2350 = vmatpush2.bf16.msra.mxu0 0
        %2351 = vmatprep.subr.bf16.mxu0 0
        %2352 = vmatpush2.bf16.msra.mxu0 0
        %2353 = vmatprep.subr.bf16.mxu0 0
        %2354 = vmatpush2.bf16.msra.mxu0 0
        %2355 = vmatprep.subr.bf16.mxu0 0
        %2356 = vmatpush2.bf16.msra.mxu0 0
        %2357 = vmatprep.mubr.bf16.mxu0 0
        %2358 = vmatmul.mubr.bf16.gmra.mxu0 %v2323
        %v2359 = vpop.f32.mrf.mxu0
        %v2360 = vadd.f32 0.0, %v2359
        %v2361 = vpop.f32.mrf.mxu0
        %v2362 = vpop.f32.mrf.mxu0
        %v2363 = vpop.f32.mrf.mxu0
        %2364 = vdwg.mxu0
        %v2366 = vrot.slane %v2360, 7
        %v2368 = vadd.f32 %v1480, %v2366
        %v2369 = vxor.u32 %v2368, 2147483648
        %v2370 = vmul.f32 %v2369, 1.442695
        %v2371 = vpow.pop %v2370
        %v2372 = vadd.f32 %v2371, 1.0
        %v2373 = vrcp.pop %v2372
        %v2374 = vmul.f32 1.0, %v2373
        %v2375 = vtanh.pop %v2368
        %v2377 = vrot.slane %v2311, 7
        %v2379 = vmul.f32 %v2374, %v2377
        %2381 = vrot.lane.b32.xlu0 %v2375, 64
        %v2382 = vpop.permute.xlu0 %2381
        %v2384 = vmul.f32 %v2374, %v2382
        %2386 = vrot.lane.b32.xlu0 %v2384, 32
        %v2387 = vpop.permute.xlu0 %2386
        %v2389 = vadd.f32 %v2379, %v2387
        %v2390 = vtanh.pop %v2389
        %2392 = vrot.lane.b32.xlu0 %v2390, 64
        %v2393 = vpop.permute.xlu0 %2392
        %v2395 = vmul.f32 %v2374, %v2393
        %v2396 = vpack.c.bf16 %v2395, %v2395
        %v2398 = vshrl.u32 %v2396, 16
        %2400 = vrot.lane.b32.xlu0 %v2398, 32
        %v2401 = vpop.permute.xlu0 %2400
        %v2403 = vsel %vm429, %v2401, 0
        %2405 = vmatprep.subr.bf16.mxu0 0
        %2406 = vmatpush1.bf16.msra.mxu0 0
        %2407 = vmatprep.subr.bf16.mxu0 0
        %2408 = vmatpush1.bf16.msra.mxu0 0
        %2409 = vmatprep.subr.bf16.mxu0 0
        %2410 = vmatpush1.bf16.msra.mxu0 0
        %2411 = vmatprep.subr.bf16.mxu0 0
        %2412 = vmatpush1.bf16.msra.mxu0 0
        %2413 = vmatprep.subr.bf16.mxu0 0
        %2414 = vmatpush1.bf16.msra.mxu0 0
        %2415 = vmatprep.subr.bf16.mxu0 0
        %2416 = vmatpush1.bf16.msra.mxu0 0
        %2417 = vmatprep.subr.bf16.mxu0 0
        %2418 = vmatpush1.bf16.msra.mxu0 %v1492
        %2419 = vmatprep.subr.bf16.mxu0 0
        %2420 = vmatpush1.bf16.msra.mxu0 %v1491
        %2421 = vmatprep.subr.bf16.mxu0 0
        %2422 = vmatpush2.bf16.msra.mxu0 0
        %2423 = vmatprep.subr.bf16.mxu0 0
        %2424 = vmatpush2.bf16.msra.mxu0 0
        %2425 = vmatprep.subr.bf16.mxu0 0
        %2426 = vmatpush2.bf16.msra.mxu0 0
        %2427 = vmatprep.subr.bf16.mxu0 0
        %2428 = vmatpush2.bf16.msra.mxu0 0
        %2429 = vmatprep.subr.bf16.mxu0 0
        %2430 = vmatpush2.bf16.msra.mxu0 0
        %2431 = vmatprep.subr.bf16.mxu0 0
        %2432 = vmatpush2.bf16.msra.mxu0 0
        %2433 = vmatprep.subr.bf16.mxu0 0
        %2434 = vmatpush2.bf16.msra.mxu0 0
        %2435 = vmatprep.subr.bf16.mxu0 0
        %2436 = vmatpush2.bf16.msra.mxu0 0
        %2437 = vmatprep.mubr.bf16.mxu0 0
        %2438 = vmatmul.mubr.bf16.gmra.mxu0 %v2403
        %v2439 = vpop.f32.mrf.mxu0
        %v2440 = vadd.f32 0.0, %v2439
        %v2441 = vpop.f32.mrf.mxu0
        %v2442 = vpop.f32.mrf.mxu0
        %v2443 = vpop.f32.mrf.mxu0
        %2444 = vdwg.mxu0
        %v2446 = vrot.slane %v2440, 6
        %v2448 = vadd.f32 %v1480, %v2446
        %v2449 = vxor.u32 %v2448, 2147483648
        %v2450 = vmul.f32 %v2449, 1.442695
        %v2451 = vpow.pop %v2450
        %v2452 = vadd.f32 %v2451, 1.0
        %v2453 = vrcp.pop %v2452
        %v2454 = vmul.f32 1.0, %v2453
        %v2455 = vtanh.pop %v2448
        %v2457 = vrot.slane %v2389, 7
        %v2459 = vmul.f32 %v2454, %v2457
        %2461 = vrot.lane.b32.xlu0 %v2455, 64
        %v2462 = vpop.permute.xlu0 %2461
        %v2464 = vmul.f32 %v2454, %v2462
        %2466 = vrot.lane.b32.xlu0 %v2464, 32
        %v2467 = vpop.permute.xlu0 %2466
        %v2469 = vadd.f32 %v2459, %v2467
        %v2470 = vtanh.pop %v2469
        %2472 = vrot.lane.b32.xlu0 %v2470, 64
        %v2473 = vpop.permute.xlu0 %2472
        %v2475 = vmul.f32 %v2454, %v2473
        %v2476 = vpack.c.bf16 %v2475, %v2475
        %v2478 = vrot.slane %v2476, 1
        %2479 = vrot.lane.b32.xlu0 %v2478, 32
        %v2480 = vpop.permute.xlu0 %2479
        %v2482 = vsel %vm429, %v2480, 0
        %2484 = vmatprep.subr.bf16.mxu0 0
        %2485 = vmatpush1.bf16.msra.mxu0 0
        %2486 = vmatprep.subr.bf16.mxu0 0
        %2487 = vmatpush1.bf16.msra.mxu0 0
        %2488 = vmatprep.subr.bf16.mxu0 0
        %2489 = vmatpush1.bf16.msra.mxu0 0
        %2490 = vmatprep.subr.bf16.mxu0 0
        %2491 = vmatpush1.bf16.msra.mxu0 0
        %2492 = vmatprep.subr.bf16.mxu0 0
        %2493 = vmatpush1.bf16.msra.mxu0 0
        %2494 = vmatprep.subr.bf16.mxu0 0
        %2495 = vmatpush1.bf16.msra.mxu0 0
        %2496 = vmatprep.subr.bf16.mxu0 0
        %2497 = vmatpush1.bf16.msra.mxu0 %v1492
        %2498 = vmatprep.subr.bf16.mxu0 0
        %2499 = vmatpush1.bf16.msra.mxu0 %v1491
        %2500 = vmatprep.subr.bf16.mxu0 0
        %2501 = vmatpush2.bf16.msra.mxu0 0
        %2502 = vmatprep.subr.bf16.mxu0 0
        %2503 = vmatpush2.bf16.msra.mxu0 0
        %2504 = vmatprep.subr.bf16.mxu0 0
        %2505 = vmatpush2.bf16.msra.mxu0 0
        %2506 = vmatprep.subr.bf16.mxu0 0
        %2507 = vmatpush2.bf16.msra.mxu0 0
        %2508 = vmatprep.subr.bf16.mxu0 0
        %2509 = vmatpush2.bf16.msra.mxu0 0
        %2510 = vmatprep.subr.bf16.mxu0 0
        %2511 = vmatpush2.bf16.msra.mxu0 0
        %2512 = vmatprep.subr.bf16.mxu0 0
        %2513 = vmatpush2.bf16.msra.mxu0 0
        %2514 = vmatprep.subr.bf16.mxu0 0
        %2515 = vmatpush2.bf16.msra.mxu0 0
        %2516 = vmatprep.mubr.bf16.mxu0 0
        %2517 = vmatmul.mubr.bf16.gmra.mxu0 %v2482
        %v2518 = vpop.f32.mrf.mxu0
        %v2519 = vadd.f32 0.0, %v2518
        %v2520 = vpop.f32.mrf.mxu0
        %v2521 = vpop.f32.mrf.mxu0
        %v2522 = vpop.f32.mrf.mxu0
        %2523 = vdwg.mxu0
        %v2525 = vrot.slane %v2519, 5
        %v2527 = vadd.f32 %v1480, %v2525
        %v2528 = vxor.u32 %v2527, 2147483648
        %v2529 = vmul.f32 %v2528, 1.442695
        %v2530 = vpow.pop %v2529
        %v2531 = vadd.f32 %v2530, 1.0
        %v2532 = vrcp.pop %v2531
        %v2533 = vmul.f32 1.0, %v2532
        %v2534 = vtanh.pop %v2527
        %v2536 = vrot.slane %v2469, 7
        %v2538 = vmul.f32 %v2533, %v2536
        %2540 = vrot.lane.b32.xlu0 %v2534, 64
        %v2541 = vpop.permute.xlu0 %2540
        %v2543 = vmul.f32 %v2533, %v2541
        %2545 = vrot.lane.b32.xlu0 %v2543, 32
        %v2546 = vpop.permute.xlu0 %2545
        %v2548 = vadd.f32 %v2538, %v2546
        %v2549 = vtanh.pop %v2548
        %2551 = vrot.lane.b32.xlu0 %v2549, 64
        %v2552 = vpop.permute.xlu0 %2551
        %v2554 = vmul.f32 %v2533, %v2552
        %v2555 = vpack.c.bf16 %v2554, %v2554
        %v2557 = vshrl.u32 %v2555, 16
        %v2559 = vrot.slane %v2557, 1
        %2560 = vrot.lane.b32.xlu0 %v2559, 32
        %v2561 = vpop.permute.xlu0 %2560
        %v2563 = vsel %vm429, %v2561, 0
        %2565 = vmatprep.subr.bf16.mxu0 0
        %2566 = vmatpush1.bf16.msra.mxu0 0
        %2567 = vmatprep.subr.bf16.mxu0 0
        %2568 = vmatpush1.bf16.msra.mxu0 0
        %2569 = vmatprep.subr.bf16.mxu0 0
        %2570 = vmatpush1.bf16.msra.mxu0 0
        %2571 = vmatprep.subr.bf16.mxu0 0
        %2572 = vmatpush1.bf16.msra.mxu0 0
        %2573 = vmatprep.subr.bf16.mxu0 0
        %2574 = vmatpush1.bf16.msra.mxu0 0
        %2575 = vmatprep.subr.bf16.mxu0 0
        %2576 = vmatpush1.bf16.msra.mxu0 0
        %2577 = vmatprep.subr.bf16.mxu0 0
        %2578 = vmatpush1.bf16.msra.mxu0 %v1492
        %2579 = vmatprep.subr.bf16.mxu0 0
        %2580 = vmatpush1.bf16.msra.mxu0 %v1491
        %2581 = vmatprep.subr.bf16.mxu0 0
        %2582 = vmatpush2.bf16.msra.mxu0 0
        %2583 = vmatprep.subr.bf16.mxu0 0
        %2584 = vmatpush2.bf16.msra.mxu0 0
        %2585 = vmatprep.subr.bf16.mxu0 0
        %2586 = vmatpush2.bf16.msra.mxu0 0
        %2587 = vmatprep.subr.bf16.mxu0 0
        %2588 = vmatpush2.bf16.msra.mxu0 0
        %2589 = vmatprep.subr.bf16.mxu0 0
        %2590 = vmatpush2.bf16.msra.mxu0 0
        %2591 = vmatprep.subr.bf16.mxu0 0
        %2592 = vmatpush2.bf16.msra.mxu0 0
        %2593 = vmatprep.subr.bf16.mxu0 0
        %2594 = vmatpush2.bf16.msra.mxu0 0
        %2595 = vmatprep.subr.bf16.mxu0 0
        %2596 = vmatpush2.bf16.msra.mxu0 0
        %2597 = vmatprep.mubr.bf16.mxu0 0
        %2598 = vmatmul.mubr.bf16.gmra.mxu0 %v2563
        %v2599 = vpop.f32.mrf.mxu0
        %v2600 = vadd.f32 0.0, %v2599
        %v2601 = vpop.f32.mrf.mxu0
        %v2602 = vpop.f32.mrf.mxu0
        %v2603 = vpop.f32.mrf.mxu0
        %2604 = vdwg.mxu0
        %v2606 = vrot.slane %v2600, 4
        %v2608 = vadd.f32 %v1480, %v2606
        %v2609 = vxor.u32 %v2608, 2147483648
        %v2610 = vmul.f32 %v2609, 1.442695
        %v2611 = vpow.pop %v2610
        %v2612 = vadd.f32 %v2611, 1.0
        %v2613 = vrcp.pop %v2612
        %v2614 = vmul.f32 1.0, %v2613
        %v2615 = vtanh.pop %v2608
        %v2617 = vrot.slane %v2548, 7
        %v2619 = vmul.f32 %v2614, %v2617
        %2621 = vrot.lane.b32.xlu0 %v2615, 64
        %v2622 = vpop.permute.xlu0 %2621
        %v2624 = vmul.f32 %v2614, %v2622
        %2626 = vrot.lane.b32.xlu0 %v2624, 32
        %v2627 = vpop.permute.xlu0 %2626
        %v2629 = vadd.f32 %v2619, %v2627
        %v2630 = vtanh.pop %v2629
        %2632 = vrot.lane.b32.xlu0 %v2630, 64
        %v2633 = vpop.permute.xlu0 %2632
        %v2635 = vmul.f32 %v2614, %v2633
        %v2636 = vpack.c.bf16 %v2635, %v2635
        %v2638 = vrot.slane %v2636, 2
        %2639 = vrot.lane.b32.xlu0 %v2638, 32
        %v2640 = vpop.permute.xlu0 %2639
        %v2642 = vsel %vm429, %v2640, 0
        %2644 = vmatprep.subr.bf16.mxu0 0
        %2645 = vmatpush1.bf16.msra.mxu0 0
        %2646 = vmatprep.subr.bf16.mxu0 0
        %2647 = vmatpush1.bf16.msra.mxu0 0
        %2648 = vmatprep.subr.bf16.mxu0 0
        %2649 = vmatpush1.bf16.msra.mxu0 0
        %2650 = vmatprep.subr.bf16.mxu0 0
        %2651 = vmatpush1.bf16.msra.mxu0 0
        %2652 = vmatprep.subr.bf16.mxu0 0
        %2653 = vmatpush1.bf16.msra.mxu0 0
        %2654 = vmatprep.subr.bf16.mxu0 0
        %2655 = vmatpush1.bf16.msra.mxu0 0
        %2656 = vmatprep.subr.bf16.mxu0 0
        %2657 = vmatpush1.bf16.msra.mxu0 %v1492
        %2658 = vmatprep.subr.bf16.mxu0 0
        %2659 = vmatpush1.bf16.msra.mxu0 %v1491
        %2660 = vmatprep.subr.bf16.mxu0 0
        %2661 = vmatpush2.bf16.msra.mxu0 0
        %2662 = vmatprep.subr.bf16.mxu0 0
        %2663 = vmatpush2.bf16.msra.mxu0 0
        %2664 = vmatprep.subr.bf16.mxu0 0
        %2665 = vmatpush2.bf16.msra.mxu0 0
        %2666 = vmatprep.subr.bf16.mxu0 0
        %2667 = vmatpush2.bf16.msra.mxu0 0
        %2668 = vmatprep.subr.bf16.mxu0 0
        %2669 = vmatpush2.bf16.msra.mxu0 0
        %2670 = vmatprep.subr.bf16.mxu0 0
        %2671 = vmatpush2.bf16.msra.mxu0 0
        %2672 = vmatprep.subr.bf16.mxu0 0
        %2673 = vmatpush2.bf16.msra.mxu0 0
        %2674 = vmatprep.subr.bf16.mxu0 0
        %2675 = vmatpush2.bf16.msra.mxu0 0
        %2676 = vmatprep.mubr.bf16.mxu0 0
        %2677 = vmatmul.mubr.bf16.gmra.mxu0 %v2642
        %v2678 = vpop.f32.mrf.mxu0
        %v2679 = vadd.f32 0.0, %v2678
        %v2680 = vpop.f32.mrf.mxu0
        %v2681 = vpop.f32.mrf.mxu0
        %v2682 = vpop.f32.mrf.mxu0
        %2683 = vdwg.mxu0
        %v2685 = vrot.slane %v2679, 3
        %v2687 = vadd.f32 %v1480, %v2685
        %v2688 = vxor.u32 %v2687, 2147483648
        %v2689 = vmul.f32 %v2688, 1.442695
        %v2690 = vpow.pop %v2689
        %v2691 = vadd.f32 %v2690, 1.0
        %v2692 = vrcp.pop %v2691
        %v2693 = vmul.f32 1.0, %v2692
        %v2694 = vtanh.pop %v2687
        %v2696 = vrot.slane %v2629, 7
        %v2698 = vmul.f32 %v2693, %v2696
        %2700 = vrot.lane.b32.xlu0 %v2694, 64
        %v2701 = vpop.permute.xlu0 %2700
        %v2703 = vmul.f32 %v2693, %v2701
        %2705 = vrot.lane.b32.xlu0 %v2703, 32
        %v2706 = vpop.permute.xlu0 %2705
        %v2708 = vadd.f32 %v2698, %v2706
        %v2709 = vtanh.pop %v2708
        %2711 = vrot.lane.b32.xlu0 %v2709, 64
        %v2712 = vpop.permute.xlu0 %2711
        %v2714 = vmul.f32 %v2693, %v2712
        %v2715 = vpack.c.bf16 %v2714, %v2714
        %v2717 = vshrl.u32 %v2715, 16
        %v2719 = vrot.slane %v2717, 2
        %2720 = vrot.lane.b32.xlu0 %v2719, 32
        %v2721 = vpop.permute.xlu0 %2720
        %v2723 = vsel %vm429, %v2721, 0
        %2725 = vmatprep.subr.bf16.mxu0 0
        %2726 = vmatpush1.bf16.msra.mxu0 0
        %2727 = vmatprep.subr.bf16.mxu0 0
        %2728 = vmatpush1.bf16.msra.mxu0 0
        %2729 = vmatprep.subr.bf16.mxu0 0
        %2730 = vmatpush1.bf16.msra.mxu0 0
        %2731 = vmatprep.subr.bf16.mxu0 0
        %2732 = vmatpush1.bf16.msra.mxu0 0
        %2733 = vmatprep.subr.bf16.mxu0 0
        %2734 = vmatpush1.bf16.msra.mxu0 0
        %2735 = vmatprep.subr.bf16.mxu0 0
        %2736 = vmatpush1.bf16.msra.mxu0 0
        %2737 = vmatprep.subr.bf16.mxu0 0
        %2738 = vmatpush1.bf16.msra.mxu0 %v1492
        %2739 = vmatprep.subr.bf16.mxu0 0
        %2740 = vmatpush1.bf16.msra.mxu0 %v1491
        %2741 = vmatprep.subr.bf16.mxu0 0
        %2742 = vmatpush2.bf16.msra.mxu0 0
        %2743 = vmatprep.subr.bf16.mxu0 0
        %2744 = vmatpush2.bf16.msra.mxu0 0
        %2745 = vmatprep.subr.bf16.mxu0 0
        %2746 = vmatpush2.bf16.msra.mxu0 0
        %2747 = vmatprep.subr.bf16.mxu0 0
        %2748 = vmatpush2.bf16.msra.mxu0 0
        %2749 = vmatprep.subr.bf16.mxu0 0
        %2750 = vmatpush2.bf16.msra.mxu0 0
        %2751 = vmatprep.subr.bf16.mxu0 0
        %2752 = vmatpush2.bf16.msra.mxu0 0
        %2753 = vmatprep.subr.bf16.mxu0 0
        %2754 = vmatpush2.bf16.msra.mxu0 0
        %2755 = vmatprep.subr.bf16.mxu0 0
        %2756 = vmatpush2.bf16.msra.mxu0 0
        %2757 = vmatprep.mubr.bf16.mxu0 0
        %2758 = vmatmul.mubr.bf16.gmra.mxu0 %v2723
        %v2759 = vpop.f32.mrf.mxu0
        %v2760 = vadd.f32 0.0, %v2759
        %v2761 = vpop.f32.mrf.mxu0
        %v2762 = vpop.f32.mrf.mxu0
        %v2763 = vpop.f32.mrf.mxu0
        %2764 = vdwg.mxu0
        %v2766 = vrot.slane %v2760, 2
        %v2768 = vadd.f32 %v1480, %v2766
        %v2769 = vxor.u32 %v2768, 2147483648
        %v2770 = vmul.f32 %v2769, 1.442695
        %v2771 = vpow.pop %v2770
        %v2772 = vadd.f32 %v2771, 1.0
        %v2773 = vrcp.pop %v2772
        %v2774 = vmul.f32 1.0, %v2773
        %v2775 = vtanh.pop %v2768
        %v2777 = vrot.slane %v2708, 7
        %v2779 = vmul.f32 %v2774, %v2777
        %2781 = vrot.lane.b32.xlu0 %v2775, 64
        %v2782 = vpop.permute.xlu0 %2781
        %v2784 = vmul.f32 %v2774, %v2782
        %2786 = vrot.lane.b32.xlu0 %v2784, 32
        %v2787 = vpop.permute.xlu0 %2786
        %v2789 = vadd.f32 %v2779, %v2787
        %v2790 = vtanh.pop %v2789
        %2792 = vrot.lane.b32.xlu0 %v2790, 64
        %v2793 = vpop.permute.xlu0 %2792
        %v2795 = vmul.f32 %v2774, %v2793
        %v2796 = vpack.c.bf16 %v2795, %v2795
        %v2798 = vrot.slane %v2796, 3
        %2799 = vrot.lane.b32.xlu0 %v2798, 32
        %v2800 = vpop.permute.xlu0 %2799
        %v2802 = vsel %vm429, %v2800, 0
        %2804 = vmatprep.subr.bf16.mxu0 0
        %2805 = vmatpush1.bf16.msra.mxu0 0
        %2806 = vmatprep.subr.bf16.mxu0 0
        %2807 = vmatpush1.bf16.msra.mxu0 0
        %2808 = vmatprep.subr.bf16.mxu0 0
        %2809 = vmatpush1.bf16.msra.mxu0 0
        %2810 = vmatprep.subr.bf16.mxu0 0
        %2811 = vmatpush1.bf16.msra.mxu0 0
        %2812 = vmatprep.subr.bf16.mxu0 0
        %2813 = vmatpush1.bf16.msra.mxu0 0
        %2814 = vmatprep.subr.bf16.mxu0 0
        %2815 = vmatpush1.bf16.msra.mxu0 0
        %2816 = vmatprep.subr.bf16.mxu0 0
        %2817 = vmatpush1.bf16.msra.mxu0 %v1492
        %2818 = vmatprep.subr.bf16.mxu0 0
        %2819 = vmatpush1.bf16.msra.mxu0 %v1491
        %2820 = vmatprep.subr.bf16.mxu0 0
        %2821 = vmatpush2.bf16.msra.mxu0 0
        %2822 = vmatprep.subr.bf16.mxu0 0
        %2823 = vmatpush2.bf16.msra.mxu0 0
        %2824 = vmatprep.subr.bf16.mxu0 0
        %2825 = vmatpush2.bf16.msra.mxu0 0
        %2826 = vmatprep.subr.bf16.mxu0 0
        %2827 = vmatpush2.bf16.msra.mxu0 0
        %2828 = vmatprep.subr.bf16.mxu0 0
        %2829 = vmatpush2.bf16.msra.mxu0 0
        %2830 = vmatprep.subr.bf16.mxu0 0
        %2831 = vmatpush2.bf16.msra.mxu0 0
        %2832 = vmatprep.subr.bf16.mxu0 0
        %2833 = vmatpush2.bf16.msra.mxu0 0
        %2834 = vmatprep.subr.bf16.mxu0 0
        %2835 = vmatpush2.bf16.msra.mxu0 0
        %2836 = vmatprep.mubr.bf16.mxu0 0
        %2837 = vmatmul.mubr.bf16.gmra.mxu0 %v2802
        %v2838 = vpop.f32.mrf.mxu0
        %v2839 = vadd.f32 0.0, %v2838
        %v2840 = vpop.f32.mrf.mxu0
        %v2841 = vpop.f32.mrf.mxu0
        %v2842 = vpop.f32.mrf.mxu0
        %2843 = vdwg.mxu0
        %v2845 = vrot.slane %v2839, 1
        %v2847 = vadd.f32 %v1480, %v2845
        %v2848 = vxor.u32 %v2847, 2147483648
        %v2849 = vmul.f32 %v2848, 1.442695
        %v2850 = vpow.pop %v2849
        %v2851 = vadd.f32 %v2850, 1.0
        %v2852 = vrcp.pop %v2851
        %v2853 = vmul.f32 1.0, %v2852
        %v2854 = vtanh.pop %v2847
        %v2856 = vrot.slane %v2789, 7
        %v2858 = vmul.f32 %v2853, %v2856
        %2860 = vrot.lane.b32.xlu0 %v2854, 64
        %v2861 = vpop.permute.xlu0 %2860
        %v2863 = vmul.f32 %v2853, %v2861
        %2865 = vrot.lane.b32.xlu0 %v2863, 32
        %v2866 = vpop.permute.xlu0 %2865
        %v2868 = vadd.f32 %v2858, %v2866
        %v2869 = vtanh.pop %v2868
        %2871 = vrot.lane.b32.xlu0 %v2869, 64
        %v2872 = vpop.permute.xlu0 %2871
        %v2874 = vmul.f32 %v2853, %v2872
        %v2875 = vrot.slane %v2120, 7
        %v2877 = vsel %vm429, %v2875, 0
        %2879 = vmatprep.subr.bf16.mxu0 0
        %2880 = vmatpush1.bf16.msra.mxu0 0
        %2881 = vmatprep.subr.bf16.mxu0 0
        %2882 = vmatpush1.bf16.msra.mxu0 0
        %2883 = vmatprep.subr.bf16.mxu0 0
        %2884 = vmatpush1.bf16.msra.mxu0 0
        %2885 = vmatprep.subr.bf16.mxu0 0
        %2886 = vmatpush1.bf16.msra.mxu0 0
        %2887 = vmatprep.subr.bf16.mxu0 0
        %2888 = vmatpush1.bf16.msra.mxu0 0
        %2889 = vmatprep.subr.bf16.mxu0 0
        %2890 = vmatpush1.bf16.msra.mxu0 0
        %2891 = vmatprep.subr.bf16.mxu0 0
        %2892 = vmatpush1.bf16.msra.mxu0 %v2132
        %2893 = vmatprep.subr.bf16.mxu0 0
        %2894 = vmatpush1.bf16.msra.mxu0 %v2131
        %2895 = vmatprep.subr.bf16.mxu0 0
        %2896 = vmatpush2.bf16.msra.mxu0 0
        %2897 = vmatprep.subr.bf16.mxu0 0
        %2898 = vmatpush2.bf16.msra.mxu0 0
        %2899 = vmatprep.subr.bf16.mxu0 0
        %2900 = vmatpush2.bf16.msra.mxu0 0
        %2901 = vmatprep.subr.bf16.mxu0 0
        %2902 = vmatpush2.bf16.msra.mxu0 0
        %2903 = vmatprep.subr.bf16.mxu0 0
        %2904 = vmatpush2.bf16.msra.mxu0 0
        %2905 = vmatprep.subr.bf16.mxu0 0
        %2906 = vmatpush2.bf16.msra.mxu0 0
        %2907 = vmatprep.subr.bf16.mxu0 0
        %2908 = vmatpush2.bf16.msra.mxu0 0
        %2909 = vmatprep.subr.bf16.mxu0 0
        %2910 = vmatpush2.bf16.msra.mxu0 0
        %2911 = vmatprep.mubr.bf16.mxu0 0
        %2912 = vmatmul.mubr.bf16.gmra.mxu0 %v2877
        %v2913 = vpop.f32.mrf.mxu0
        %v2914 = vadd.f32 %v2136, %v2913
        %v2915 = vpop.f32.mrf.mxu0
        %v2916 = vpop.f32.mrf.mxu0
        %v2917 = vpop.f32.mrf.mxu0
        %2918 = vdwg.mxu0
        %v2919 = vadd.f32 %v2914, %v2228
        %v2920 = vxor.u32 %v2919, 2147483648
        %v2921 = vmul.f32 %v2920, 1.442695
        %v2922 = vpow.pop %v2921
        %v2923 = vadd.f32 %v2922, 1.0
        %v2924 = vrcp.pop %v2923
        %v2925 = vmul.f32 1.0, %v2924
        %v2926 = vtanh.pop %v2919
        %v2927 = vmul.f32 %v2925, 0.0
        %2929 = vrot.lane.b32.xlu0 %v2926, 64
        %v2930 = vpop.permute.xlu0 %2929
        %v2932 = vmul.f32 %v2925, %v2930
        %2934 = vrot.lane.b32.xlu0 %v2932, 32
        %v2935 = vpop.permute.xlu0 %2934
        %v2937 = vadd.f32 %v2927, %v2935
        %v2938 = vtanh.pop %v2937
        %2940 = vrot.lane.b32.xlu0 %v2938, 64
        %v2941 = vpop.permute.xlu0 %2940
        %v2943 = vmul.f32 %v2925, %v2941
        %v2944 = vmul.f32 %v2874, %v2260
        %2946 = vrot.lane.b32.xlu0 %v2944, 32
        %v2947 = vpop.permute.xlu0 %2946
        %v2949 = vsel %vm2267, %v2947, 0.0
        %2950 = vadd.xlane.f32.xlu0 %v2949
        %v2951 = vpop.xlane.xlu0 %2950
        %v2952 = vmul.f32 %v2943, %v2273
        %2954 = vrot.lane.b32.xlu0 %v2952, 32
        %v2955 = vpop.permute.xlu0 %2954
        %v2957 = vsel %vm2280, %v2955, 0.0
        %2958 = vadd.xlane.f32.xlu0 %v2957
        %v2959 = vpop.xlane.xlu0 %2958
        %v2961 = vrot.slane %v2959, 1
        %v2963 = vadd.f32 %v2951, %v2961
        %v2964 = vadd.f32 %v2963, %v2288
        %2965 = vst.msk [vmem:[%s9 - $0x6] sm:$0x80] %vm2291, %v2964
      $region64: #{indobert_bic_forward.1} parent=55 // pred_fallthru
        _
      // Predicated region
      $region65: #{indobert_bic_forward.1} parent=55 // pred_check
        %p2966 = pneg %p247
      $region66: #{indobert_bic_forward.1} parent=55 // pred_check_branch
        %2968 = sbr.rel (%p2966) target = $region68
      $region67: #{indobert_bic_forward.1} parent=55 // pred_region
        _
      $region68: #{indobert_bic_forward.1} parent=55 // pred_fallthru
        _
      // Predicated region
      $region69: #{indobert_bic_forward.1} parent=55 // pred_check
        %p2969 = pneg %p247
      $region70: #{indobert_bic_forward.1} parent=55 // pred_check_branch
        %2971 = sbr.rel (%p2969) target = $region72
      $region71: #{indobert_bic_forward.1} parent=55 // pred_region
        _
      $region72: #{indobert_bic_forward.1} parent=55 // pred_fallthru
        _
    $region56: #{indobert_bic_forward.1} parent=5 // pred_fallthru
      _
    %p2972 = scmp.le.s32.totalorder 2, %s15
    // Predicated region
    $region73: #{indobert_bic_forward.1} parent=5 // pred_check
      %p2973 = pneg %p2972
    $region74: #{indobert_bic_forward.1} parent=5 // pred_check_branch
      %2975 = sbr.rel (%p2973) target = $region76
    $region75: #{indobert_bic_forward.1} parent=5 // pred_region
      %s2976 = ssub.s32 %s15, 2
    $region76: #{indobert_bic_forward.1} parent=5 // pred_fallthru
      _
  $region6: #{indobert_bic_forward.1} parent=0 // loop_footer
    %s19 = sadd.s32 1, %s15
  $region7: #{indobert_bic_forward.1} parent=0 // loop_footer_branch
    %14 = sbr.rel target = $region3
  $region8: #{indobert_bic_forward.1} parent=0 // loop_exit
    _

</llo_original>
